<compile_context>
chip_gen: v7x
topology: tpu7x:2x2x1
jax: 0.10.0
libtpu: 0.0.40
codegen_flags: <defaults>
</compile_context>

<pallas_src>
import functools

import jax
import jax.numpy as jnp
from jax.experimental import pallas as pl
from jax.experimental.pallas import tpu as pltpu

EPS = 1e-4     # scn BatchNorm default eps
LEAK = 0.2     # LeakyReLU leakiness

_VMEM_LIMIT = None


def _vmem_limit():
    """Per-generation VMEM budget (bytes); also used as the Mosaic scoped limit."""
    global _VMEM_LIMIT
    if _VMEM_LIMIT is None:
        cap = None
        try:
            cap = getattr(pltpu.get_tpu_info(), "vmem_capacity_bytes", None)
        except Exception:
            cap = None
        if not cap:
            cap = 64 * 1024 * 1024          # conservative fallback (v7x per-core VMEM)
        _VMEM_LIMIT = max(32 << 20, min(int(cap * 0.45), 100 << 20))
    return _VMEM_LIMIT


def _round_up(x, m):
    return -(-x // m) * m


def _pick_tile(m, k, cout):
    """Row tile TM and padded row count for a (m, k) @ (k, cout) layer."""
    budget = _vmem_limit()
    fixed = 2 * (k * cout * 2 + 2 * k * 4 + 8 * cout * 4) + (2 << 20)
    per_row = 2 * (2 * k + 4 * cout)        # 2 buffers: bf16 input row + (worst) f32 output row
    tm = (budget - fixed) // per_row
    tm = max(256, min(2048, int(tm)))
    tm = (tm // 256) * 256
    m8 = _round_up(m, 8)
    if m8 <= tm:
        return m8, m8                       # single full-extent tile
    return tm, _round_up(m, tm)


def _pad_rows(x, m_pad):
    m = x.shape[0]
    if m_pad == m:
        return x
    return jnp.pad(x, ((0, m_pad - m), (0, 0)))


# ----------------------------- Pallas kernels ------------------------------ #

def _conv_block_kernel(x_ref, w_ref, scale_ref, shift_ref, y_ref, stats_ref,
                       *, apply_preact):
    """Fused (previous layer's BN affine + LeakyReLU) -> stride-2 conv (matmul)
    -> per-tile BatchNorm statistics (sum, sum-of-squares)."""
    if apply_preact:
        xf = x_ref[...].astype(jnp.float32)                 # elementwise math in f32
        z = xf * scale_ref[...] + shift_ref[...]
        a = jnp.where(z >= 0.0, z, LEAK * z).astype(jnp.bfloat16)
    else:
        a = x_ref[...]                                      # first layer: raw input feats
    y = jnp.dot(a, w_ref[...], preferred_element_type=jnp.float32)
    y_ref[...] = y.astype(y_ref.dtype)
    s = jnp.sum(y, axis=0, keepdims=True)                   # (1, Cout) partial sum (f32)
    ss = jnp.sum(y * y, axis=0, keepdims=True)              # (1, Cout) partial sumsq
    pad = jnp.zeros((6, s.shape[1]), jnp.float32)
    stats_ref[...] = jnp.concatenate([s, ss, pad], axis=0)  # (8, Cout) per-tile stats


def _final_kernel(x_ref, w_ref, scale_ref, shift_ref, o_ref):
    """Fused BN affine + LeakyReLU -> final conv (lane-padded to 128 cols) -> sigmoid."""
    xf = x_ref[...].astype(jnp.float32)
    z = xf * scale_ref[...] + shift_ref[...]
    a = jnp.where(z >= 0.0, z, LEAK * z).astype(jnp.bfloat16)
    y = jnp.dot(a, w_ref[...], preferred_element_type=jnp.float32)
    o_ref[...] = jax.nn.sigmoid(y)


# ----------------------------- kernel wrappers ------------------------------ #

def _conv_block(x2, w, scale8, shift8, *, apply_preact):
    m, k = x2.shape
    cout = w.shape[1]
    tm, m_pad = _pick_tile(m, k, cout)
    nb = m_pad // tm
    x2p = _pad_rows(x2, m_pad)
    kernel = functools.partial(_conv_block_kernel, apply_preact=apply_preact)
    y, stats = pl.pallas_call(
        kernel,
        grid=(nb,),
        in_specs=[
            pl.BlockSpec((tm, k), lambda i: (i, 0)),        # activation tiles (pipelined)
            pl.BlockSpec((k, cout), lambda i: (0, 0)),      # weights: resident
            pl.BlockSpec((1, k), lambda i: (0, 0)),         # folded BN scale (prev layer)
            pl.BlockSpec((1, k), lambda i: (0, 0)),         # folded BN shift (prev layer)
        ],
        out_specs=(
            pl.BlockSpec((tm, cout), lambda i: (i, 0)),     # raw conv output y
            pl.BlockSpec((8, cout), lambda i: (i, 0)),      # per-tile sum / sumsq
        ),
        out_shape=(
            jax.ShapeDtypeStruct((m_pad, cout), jnp.bfloat16),
            jax.ShapeDtypeStruct((nb * 8, cout), jnp.float32),
        ),
        compiler_params=pltpu.CompilerParams(
            dimension_semantics=("parallel",),
            vmem_limit_bytes=_vmem_limit()),
    )(x2p, w, scale8, shift8)
    return y[:m], stats


def _final_conv(x2, w_pad, scale8, shift8):
    m, k = x2.shape
    cout = w_pad.shape[1]                                   # 128 (lane-dense, col 0 real)
    tm, m_pad = _pick_tile(m, k, cout)
    nb = m_pad // tm
    x2p = _pad_rows(x2, m_pad)
    out = pl.pallas_call(
        _final_kernel,
        grid=(nb,),
        in_specs=[
            pl.BlockSpec((tm, k), lambda i: (i, 0)),
            pl.BlockSpec((k, cout), lambda i: (0, 0)),
            pl.BlockSpec((1, k), lambda i: (0, 0)),
            pl.BlockSpec((1, k), lambda i: (0, 0)),
        ],
        out_specs=pl.BlockSpec((tm, cout), lambda i: (i, 0)),
        out_shape=jax.ShapeDtypeStruct((m_pad, cout), jnp.float32),
        compiler_params=pltpu.CompilerParams(
            dimension_semantics=("parallel",),
            vmem_limit_bytes=_vmem_limit()),
    )(x2p, w_pad, scale8, shift8)
    return out[:m, :1]


# ------------------------------- glue (JAX) -------------------------------- #

def _space_to_channel(x):
    # (N, D, H, W, C) -> (N*(D/2)*(H/2)*(W/2), 8*C); 2x2x2 block flattened (kd, kh, kw, c).
    n, d, h, w, c = x.shape
    x = x.reshape(n, d // 2, 2, h // 2, 2, w // 2, 2, c)
    x = x.transpose(0, 1, 3, 5, 2, 4, 6, 7)
    return x.reshape(n * (d // 2) * (h // 2) * (w // 2), 8 * c)


def _bn_fold(stats, m_true, gamma, beta):
    # Training-mode batch statistics; biased var = E[y^2] - mean^2.
    st = stats.reshape(-1, 8, stats.shape[-1])
    tot = jnp.sum(st, axis=0)                  # row 0 = sum, row 1 = sumsq
    mean = tot[0] / m_true
    var = jnp.maximum(tot[1] / m_true - mean * mean, 0.0)
    scale = gamma * jax.lax.rsqrt(var + EPS)
    shift = beta - mean * scale
    return scale, shift


def _tile8(v):
    # channel-innermost column order of _space_to_channel -> repeat per 2x2x2 corner
    return jnp.tile(v, 8)[None, :].astype(jnp.float32)


def init_params(num_ft_channels, key):
    """Deterministic synthetic parameters; shapes follow the scn module."""
    plan = [(num_ft_channels, 64), (64, 96), (96, 128)]
    keys = jax.random.split(key, len(plan) + 1)
    blocks = []
    for (cin, cout), k in zip(plan, keys[:-1]):
        w = (0.1 * jax.random.normal(k, (8 * cin, cout), dtype=jnp.float32))
        blocks.append((w.astype(jnp.bfloat16),
                       jnp.ones((cout,), jnp.float32),
                       jnp.zeros((cout,), jnp.float32)))
    wf = 0.1 * jax.random.normal(keys[-1], (8 * 128, 1), dtype=jnp.float32)
    wf_pad = jnp.pad(wf, ((0, 0), (0, 127))).astype(jnp.bfloat16)   # lane-dense final matmul
    return {"blocks": blocks, "final_w": wf_pad}


@jax.jit
def discriminator_forward(x_ncdhw, params):
    # NCDHW -> NDHWC, bf16 activations (matmuls accumulate in f32).
    x = jnp.transpose(x_ncdhw, (0, 2, 3, 4, 1)).astype(jnp.bfloat16)
    n, d, h, w, c = x.shape
    act = x
    scale8 = jnp.ones((1, 8 * c), jnp.float32)      # unused by the first block
    shift8 = jnp.zeros((1, 8 * c), jnp.float32)
    for li, (wmat, gamma, beta) in enumerate(params["blocks"]):
        x2 = _space_to_channel(act)
        m = x2.shape[0]
        y, stats = _conv_block(x2, wmat, scale8, shift8, apply_preact=(li > 0))
        d, h, w = d // 2, h // 2, w // 2
        act = y.reshape(n, d, h, w, wmat.shape[1])
        # Fold this block's BN (batch stats) + LeakyReLU into the next kernel's
        # pre-activation (same math, applied lazily inside the next matmul pass).
        scale, shift = _bn_fold(stats, float(m), gamma, beta)
        scale8, shift8 = _tile8(scale), _tile8(shift)
    x2 = _space_to_channel(act)
    return _final_conv(x2, params["final_w"], scale8, shift8)   # (num_sites, 1)


# --------------------------------- main ------------------------------------ #

if __name__ == "__main__":
    key = jax.random.PRNGKey(0)
    k_in, k_params = jax.random.split(key)

    # Small shapes: batch=2, num_ft_channels=4, spatial 16^3 (divisible by 2^4).
    batch, channels, spatial = 2, 4, 16
    x = jax.random.normal(
        k_in, (batch, channels, spatial, spatial, spatial), dtype=jnp.float32
    )
    params = init_params(channels, k_params)

    out = discriminator_forward(x, params)
    out = jax.block_until_ready(out)

    assert out.shape == (batch * (spatial // 16) ** 3, 1), out.shape
    assert bool(jnp.all((out >= 0.0) & (out <= 1.0)))
    print("KERNEL_OK")
</pallas_src>

<mosaic_0001>
module attributes {stable_mosaic.version = 11 : i64} {
  func.func @_conv_block_kernel(%arg0: i32, %arg1: memref<1024x32xbf16, #tpu.memory_space<vmem>>, %arg2: memref<32x64xbf16, #tpu.memory_space<vmem>>, %arg3: memref<1x32xf32, #tpu.memory_space<vmem>>, %arg4: memref<1x32xf32, #tpu.memory_space<vmem>>, %arg5: memref<1024x64xbf16, #tpu.memory_space<vmem>>, %arg6: memref<8x64xf32, #tpu.memory_space<vmem>>) attributes {dimension_semantics = [#tpu.dimension_semantics<parallel>], iteration_bounds = array<i64: 1>, scalar_prefetch = 0 : i64, scratch_operands = 0 : i64, tpu.core_type = #tpu.core_type<tc>, window_params = [{transform_indices = @transform_0, window_bounds = array<i64: 1024, 32>}, {pipeline_mode = #tpu.pipeline_mode<synchronous>, transform_indices = @transform_1, window_bounds = array<i64: 32, 64>}, {pipeline_mode = #tpu.pipeline_mode<synchronous>, transform_indices = @transform_2, window_bounds = array<i64: 1, 32>}, {pipeline_mode = #tpu.pipeline_mode<synchronous>, transform_indices = @transform_3, window_bounds = array<i64: 1, 32>}, {transform_indices = @transform_4, window_bounds = array<i64: 1024, 64>}, {transform_indices = @transform_5, window_bounds = array<i64: 8, 64>}]} {
    %c0 = arith.constant 0 : index
    %c0_0 = arith.constant 0 : index
    %0 = vector.load %arg1[%c0, %c0_0] : memref<1024x32xbf16, #tpu.memory_space<vmem>>, vector<1024x32xbf16>
    %c0_1 = arith.constant 0 : index
    %c0_2 = arith.constant 0 : index
    %1 = vector.load %arg2[%c0_1, %c0_2] : memref<32x64xbf16, #tpu.memory_space<vmem>>, vector<32x64xbf16>
    %cst = arith.constant dense<0.000000e+00> : vector<1024x64xf32>
    %2 = tpu.matmul %0, %1, %cst {dimension_numbers = #tpu.dot_dimension_numbers<[1], [0], [0], [1], [0, 0, 1, 1], [], []>} : vector<1024x32xbf16>, vector<32x64xbf16>, vector<1024x64xf32> -> vector<1024x64xf32>
    %3 = arith.truncf %2 : vector<1024x64xf32> to vector<1024x64xbf16>
    %c0_3 = arith.constant 0 : index
    %c0_4 = arith.constant 0 : index
    %4 = vector.load %arg5[%c0_3, %c0_4] : memref<1024x64xbf16, #tpu.memory_space<vmem>>, vector<1024x64xbf16>
    tpu.vector_store %arg5[%c0_3, %c0_4], %3 {strides = array<i32>} : memref<1024x64xbf16, #tpu.memory_space<vmem>>, vector<1024x64xbf16>,
    %cst_5 = arith.constant dense<0.000000e+00> : vector<64xf32>
    %5 = vector.multi_reduction <add>, %2, %cst_5 [0] : vector<1024x64xf32> to vector<64xf32>
    %6 = vector.shape_cast %5 : vector<64xf32> to vector<1x64xf32>
    %7 = arith.mulf %2, %2 : vector<1024x64xf32>
    %cst_6 = arith.constant dense<0.000000e+00> : vector<64xf32>
    %8 = vector.multi_reduction <add>, %7, %cst_6 [0] : vector<1024x64xf32> to vector<64xf32>
    %9 = vector.shape_cast %8 : vector<64xf32> to vector<1x64xf32>
    %cst_7 = arith.constant 0.000000e+00 : f32
    %10 = vector.broadcast %cst_7 : f32 to vector<6x64xf32>
    %11 = tpu.concatenate %6, %9, %10 in 0 : vector<1x64xf32>, vector<1x64xf32>, vector<6x64xf32> -> vector<8x64xf32>
    %c0_8 = arith.constant 0 : index
    %c0_9 = arith.constant 0 : index
    %12 = vector.load %arg6[%c0_8, %c0_9] : memref<8x64xf32, #tpu.memory_space<vmem>>, vector<8x64xf32>
    tpu.vector_store %arg6[%c0_8, %c0_9], %11 {strides = array<i32>} : memref<8x64xf32, #tpu.memory_space<vmem>>, vector<8x64xf32>,
    return
  }
  func.func @transform_0(%arg0: i32) -> (i32, i32) {
    %c0_i32 = arith.constant 0 : i32
    %c0_i32_0 = arith.constant 0 : i32
    return %arg0, %c0_i32 : i32, i32
  }
  func.func @transform_1(%arg0: i32) -> (i32, i32) {
    %c0_i32 = arith.constant 0 : i32
    %c0_i32_0 = arith.constant 0 : i32
    %c0_i32_1 = arith.constant 0 : i32
    return %c0_i32, %c0_i32_0 : i32, i32
  }
  func.func @transform_2(%arg0: i32) -> (i32, i32) {
    %c0_i32 = arith.constant 0 : i32
    %c0_i32_0 = arith.constant 0 : i32
    %c0_i32_1 = arith.constant 0 : i32
    return %c0_i32, %c0_i32_0 : i32, i32
  }
  func.func @transform_3(%arg0: i32) -> (i32, i32) {
    %c0_i32 = arith.constant 0 : i32
    %c0_i32_0 = arith.constant 0 : i32
    %c0_i32_1 = arith.constant 0 : i32
    return %c0_i32, %c0_i32_0 : i32, i32
  }
  func.func @transform_4(%arg0: i32) -> (i32, i32) {
    %c0_i32 = arith.constant 0 : i32
    %c0_i32_0 = arith.constant 0 : i32
    return %arg0, %c0_i32 : i32, i32
  }
  func.func @transform_5(%arg0: i32) -> (i32, i32) {
    %c0_i32 = arith.constant 0 : i32
    %c0_i32_0 = arith.constant 0 : i32
    return %arg0, %c0_i32 : i32, i32
  }
}

module attributes {stable_mosaic.version = 11 : i64} {
  func.func @_conv_block_kernel(%arg0: i32, %arg1: memref<128x512xbf16, #tpu.memory_space<vmem>>, %arg2: memref<512x96xbf16, #tpu.memory_space<vmem>>, %arg3: memref<1x512xf32, #tpu.memory_space<vmem>>, %arg4: memref<1x512xf32, #tpu.memory_space<vmem>>, %arg5: memref<128x96xbf16, #tpu.memory_space<vmem>>, %arg6: memref<8x96xf32, #tpu.memory_space<vmem>>) attributes {dimension_semantics = [#tpu.dimension_semantics<parallel>], iteration_bounds = array<i64: 1>, scalar_prefetch = 0 : i64, scratch_operands = 0 : i64, tpu.core_type = #tpu.core_type<tc>, window_params = [{transform_indices = @transform_0, window_bounds = array<i64: 128, 512>}, {pipeline_mode = #tpu.pipeline_mode<synchronous>, transform_indices = @transform_1, window_bounds = array<i64: 512, 96>}, {pipeline_mode = #tpu.pipeline_mode<synchronous>, transform_indices = @transform_2, window_bounds = array<i64: 1, 512>}, {pipeline_mode = #tpu.pipeline_mode<synchronous>, transform_indices = @transform_3, window_bounds = array<i64: 1, 512>}, {transform_indices = @transform_4, window_bounds = array<i64: 128, 96>}, {transform_indices = @transform_5, window_bounds = array<i64: 8, 96>}]} {
    %c0 = arith.constant 0 : index
    %c0_0 = arith.constant 0 : index
    %0 = vector.load %arg1[%c0, %c0_0] : memref<128x512xbf16, #tpu.memory_space<vmem>>, vector<128x512xbf16>
    %1 = arith.extf %0 : vector<128x512xbf16> to vector<128x512xf32>
    %c0_1 = arith.constant 0 : index
    %c0_2 = arith.constant 0 : index
    %2 = vector.load %arg3[%c0_1, %c0_2] : memref<1x512xf32, #tpu.memory_space<vmem>>, vector<1x512xf32>
    %3 = vector.broadcast %2 : vector<1x512xf32> to vector<128x512xf32>
    %4 = arith.mulf %1, %3 : vector<128x512xf32>
    %c0_3 = arith.constant 0 : index
    %c0_4 = arith.constant 0 : index
    %5 = vector.load %arg4[%c0_3, %c0_4] : memref<1x512xf32, #tpu.memory_space<vmem>>, vector<1x512xf32>
    %6 = vector.broadcast %5 : vector<1x512xf32> to vector<128x512xf32>
    %7 = arith.addf %4, %6 : vector<128x512xf32>
    %cst = arith.constant 0.000000e+00 : f32
    %8 = vector.broadcast %cst : f32 to vector<128x512xf32>
    %9 = arith.cmpf oge, %7, %8 : vector<128x512xf32>
    %cst_5 = arith.constant 2.000000e-01 : f32
    %10 = vector.broadcast %cst_5 : f32 to vector<128x512xf32>
    %11 = arith.mulf %10, %7 : vector<128x512xf32>
    %12 = arith.select %9, %7, %11 : vector<128x512xi1>, vector<128x512xf32>
    %13 = arith.truncf %12 : vector<128x512xf32> to vector<128x512xbf16>
    %c0_6 = arith.constant 0 : index
    %c0_7 = arith.constant 0 : index
    %14 = vector.load %arg2[%c0_6, %c0_7] : memref<512x96xbf16, #tpu.memory_space<vmem>>, vector<512x96xbf16>
    %cst_8 = arith.constant dense<0.000000e+00> : vector<128x96xf32>
    %15 = tpu.matmul %13, %14, %cst_8 {dimension_numbers = #tpu.dot_dimension_numbers<[1], [0], [0], [1], [0, 0, 1, 1], [], []>} : vector<128x512xbf16>, vector<512x96xbf16>, vector<128x96xf32> -> vector<128x96xf32>
    %16 = arith.truncf %15 : vector<128x96xf32> to vector<128x96xbf16>
    %c0_9 = arith.constant 0 : index
    %c0_10 = arith.constant 0 : index
    %17 = vector.load %arg5[%c0_9, %c0_10] : memref<128x96xbf16, #tpu.memory_space<vmem>>, vector<128x96xbf16>
    tpu.vector_store %arg5[%c0_9, %c0_10], %16 {strides = array<i32>} : memref<128x96xbf16, #tpu.memory_space<vmem>>, vector<128x96xbf16>,
    %cst_11 = arith.constant dense<0.000000e+00> : vector<96xf32>
    %18 = vector.multi_reduction <add>, %15, %cst_11 [0] : vector<128x96xf32> to vector<96xf32>
    %19 = vector.shape_cast %18 : vector<96xf32> to vector<1x96xf32>
    %20 = arith.mulf %15, %15 : vector<128x96xf32>
    %cst_12 = arith.constant dense<0.000000e+00> : vector<96xf32>
    %21 = vector.multi_reduction <add>, %20, %cst_12 [0] : vector<128x96xf32> to vector<96xf32>
    %22 = vector.shape_cast %21 : vector<96xf32> to vector<1x96xf32>
    %cst_13 = arith.constant 0.000000e+00 : f32
    %23 = vector.broadcast %cst_13 : f32 to vector<6x96xf32>
    %24 = tpu.concatenate %19, %22, %23 in 0 : vector<1x96xf32>, vector<1x96xf32>, vector<6x96xf32> -> vector<8x96xf32>
    %c0_14 = arith.constant 0 : index
    %c0_15 = arith.constant 0 : index
    %25 = vector.load %arg6[%c0_14, %c0_15] : memref<8x96xf32, #tpu.memory_space<vmem>>, vector<8x96xf32>
    tpu.vector_store %arg6[%c0_14, %c0_15], %24 {strides = array<i32>} : memref<8x96xf32, #tpu.memory_space<vmem>>, vector<8x96xf32>,
    return
  }
  func.func @transform_0(%arg0: i32) -> (i32, i32) {
    %c0_i32 = arith.constant 0 : i32
    %c0_i32_0 = arith.constant 0 : i32
    return %arg0, %c0_i32 : i32, i32
  }
  func.func @transform_1(%arg0: i32) -> (i32, i32) {
    %c0_i32 = arith.constant 0 : i32
    %c0_i32_0 = arith.constant 0 : i32
    %c0_i32_1 = arith.constant 0 : i32
    return %c0_i32, %c0_i32_0 : i32, i32
  }
  func.func @transform_2(%arg0: i32) -> (i32, i32) {
    %c0_i32 = arith.constant 0 : i32
    %c0_i32_0 = arith.constant 0 : i32
    %c0_i32_1 = arith.constant 0 : i32
    return %c0_i32, %c0_i32_0 : i32, i32
  }
  func.func @transform_3(%arg0: i32) -> (i32, i32) {
    %c0_i32 = arith.constant 0 : i32
    %c0_i32_0 = arith.constant 0 : i32
    %c0_i32_1 = arith.constant 0 : i32
    return %c0_i32, %c0_i32_0 : i32, i32
  }
  func.func @transform_4(%arg0: i32) -> (i32, i32) {
    %c0_i32 = arith.constant 0 : i32
    %c0_i32_0 = arith.constant 0 : i32
    return %arg0, %c0_i32 : i32, i32
  }
  func.func @transform_5(%arg0: i32) -> (i32, i32) {
    %c0_i32 = arith.constant 0 : i32
    %c0_i32_0 = arith.constant 0 : i32
    return %arg0, %c0_i32 : i32, i32
  }
}

module attributes {stable_mosaic.version = 11 : i64} {
  func.func @_conv_block_kernel(%arg0: i32, %arg1: memref<16x768xbf16, #tpu.memory_space<vmem>>, %arg2: memref<768x128xbf16, #tpu.memory_space<vmem>>, %arg3: memref<1x768xf32, #tpu.memory_space<vmem>>, %arg4: memref<1x768xf32, #tpu.memory_space<vmem>>, %arg5: memref<16x128xbf16, #tpu.memory_space<vmem>>, %arg6: memref<8x128xf32, #tpu.memory_space<vmem>>) attributes {dimension_semantics = [#tpu.dimension_semantics<parallel>], iteration_bounds = array<i64: 1>, scalar_prefetch = 0 : i64, scratch_operands = 0 : i64, tpu.core_type = #tpu.core_type<tc>, window_params = [{transform_indices = @transform_0, window_bounds = array<i64: 16, 768>}, {pipeline_mode = #tpu.pipeline_mode<synchronous>, transform_indices = @transform_1, window_bounds = array<i64: 768, 128>}, {pipeline_mode = #tpu.pipeline_mode<synchronous>, transform_indices = @transform_2, window_bounds = array<i64: 1, 768>}, {pipeline_mode = #tpu.pipeline_mode<synchronous>, transform_indices = @transform_3, window_bounds = array<i64: 1, 768>}, {transform_indices = @transform_4, window_bounds = array<i64: 16, 128>}, {transform_indices = @transform_5, window_bounds = array<i64: 8, 128>}]} {
    %c0 = arith.constant 0 : index
    %c0_0 = arith.constant 0 : index
    %0 = vector.load %arg1[%c0, %c0_0] : memref<16x768xbf16, #tpu.memory_space<vmem>>, vector<16x768xbf16>
    %1 = arith.extf %0 : vector<16x768xbf16> to vector<16x768xf32>
    %c0_1 = arith.constant 0 : index
    %c0_2 = arith.constant 0 : index
    %2 = vector.load %arg3[%c0_1, %c0_2] : memref<1x768xf32, #tpu.memory_space<vmem>>, vector<1x768xf32>
    %3 = vector.broadcast %2 : vector<1x768xf32> to vector<16x768xf32>
    %4 = arith.mulf %1, %3 : vector<16x768xf32>
    %c0_3 = arith.constant 0 : index
    %c0_4 = arith.constant 0 : index
    %5 = vector.load %arg4[%c0_3, %c0_4] : memref<1x768xf32, #tpu.memory_space<vmem>>, vector<1x768xf32>
    %6 = vector.broadcast %5 : vector<1x768xf32> to vector<16x768xf32>
    %7 = arith.addf %4, %6 : vector<16x768xf32>
    %cst = arith.constant 0.000000e+00 : f32
    %8 = vector.broadcast %cst : f32 to vector<16x768xf32>
    %9 = arith.cmpf oge, %7, %8 : vector<16x768xf32>
    %cst_5 = arith.constant 2.000000e-01 : f32
    %10 = vector.broadcast %cst_5 : f32 to vector<16x768xf32>
    %11 = arith.mulf %10, %7 : vector<16x768xf32>
    %12 = arith.select %9, %7, %11 : vector<16x768xi1>, vector<16x768xf32>
    %13 = arith.truncf %12 : vector<16x768xf32> to vector<16x768xbf16>
    %c0_6 = arith.constant 0 : index
    %c0_7 = arith.constant 0 : index
    %14 = vector.load %arg2[%c0_6, %c0_7] : memref<768x128xbf16, #tpu.memory_space<vmem>>, vector<768x128xbf16>
    %cst_8 = arith.constant dense<0.000000e+00> : vector<16x128xf32>
    %15 = tpu.matmul %13, %14, %cst_8 {dimension_numbers = #tpu.dot_dimension_numbers<[1], [0], [0], [1], [0, 0, 1, 1], [], []>} : vector<16x768xbf16>, vector<768x128xbf16>, vector<16x128xf32> -> vector<16x128xf32>
    %16 = arith.truncf %15 : vector<16x128xf32> to vector<16x128xbf16>
    %c0_9 = arith.constant 0 : index
    %c0_10 = arith.constant 0 : index
    %17 = vector.load %arg5[%c0_9, %c0_10] : memref<16x128xbf16, #tpu.memory_space<vmem>>, vector<16x128xbf16>
    tpu.vector_store %arg5[%c0_9, %c0_10], %16 {strides = array<i32>} : memref<16x128xbf16, #tpu.memory_space<vmem>>, vector<16x128xbf16>,
    %cst_11 = arith.constant dense<0.000000e+00> : vector<128xf32>
    %18 = vector.multi_reduction <add>, %15, %cst_11 [0] : vector<16x128xf32> to vector<128xf32>
    %19 = vector.shape_cast %18 : vector<128xf32> to vector<1x128xf32>
    %20 = arith.mulf %15, %15 : vector<16x128xf32>
    %cst_12 = arith.constant dense<0.000000e+00> : vector<128xf32>
    %21 = vector.multi_reduction <add>, %20, %cst_12 [0] : vector<16x128xf32> to vector<128xf32>
    %22 = vector.shape_cast %21 : vector<128xf32> to vector<1x128xf32>
    %cst_13 = arith.constant 0.000000e+00 : f32
    %23 = vector.broadcast %cst_13 : f32 to vector<6x128xf32>
    %24 = tpu.concatenate %19, %22, %23 in 0 : vector<1x128xf32>, vector<1x128xf32>, vector<6x128xf32> -> vector<8x128xf32>
    %c0_14 = arith.constant 0 : index
    %c0_15 = arith.constant 0 : index
    %25 = vector.load %arg6[%c0_14, %c0_15] : memref<8x128xf32, #tpu.memory_space<vmem>>, vector<8x128xf32>
    tpu.vector_store %arg6[%c0_14, %c0_15], %24 {strides = array<i32>} : memref<8x128xf32, #tpu.memory_space<vmem>>, vector<8x128xf32>,
    return
  }
  func.func @transform_0(%arg0: i32) -> (i32, i32) {
    %c0_i32 = arith.constant 0 : i32
    %c0_i32_0 = arith.constant 0 : i32
    return %arg0, %c0_i32 : i32, i32
  }
  func.func @transform_1(%arg0: i32) -> (i32, i32) {
    %c0_i32 = arith.constant 0 : i32
    %c0_i32_0 = arith.constant 0 : i32
    %c0_i32_1 = arith.constant 0 : i32
    return %c0_i32, %c0_i32_0 : i32, i32
  }
  func.func @transform_2(%arg0: i32) -> (i32, i32) {
    %c0_i32 = arith.constant 0 : i32
    %c0_i32_0 = arith.constant 0 : i32
    %c0_i32_1 = arith.constant 0 : i32
    return %c0_i32, %c0_i32_0 : i32, i32
  }
  func.func @transform_3(%arg0: i32) -> (i32, i32) {
    %c0_i32 = arith.constant 0 : i32
    %c0_i32_0 = arith.constant 0 : i32
    %c0_i32_1 = arith.constant 0 : i32
    return %c0_i32, %c0_i32_0 : i32, i32
  }
  func.func @transform_4(%arg0: i32) -> (i32, i32) {
    %c0_i32 = arith.constant 0 : i32
    %c0_i32_0 = arith.constant 0 : i32
    return %arg0, %c0_i32 : i32, i32
  }
  func.func @transform_5(%arg0: i32) -> (i32, i32) {
    %c0_i32 = arith.constant 0 : i32
    %c0_i32_0 = arith.constant 0 : i32
    return %arg0, %c0_i32 : i32, i32
  }
}

module attributes {stable_mosaic.version = 11 : i64} {
  func.func @_final_kernel(%arg0: i32, %arg1: memref<8x1024xbf16, #tpu.memory_space<vmem>>, %arg2: memref<1024x128xbf16, #tpu.memory_space<vmem>>, %arg3: memref<1x1024xf32, #tpu.memory_space<vmem>>, %arg4: memref<1x1024xf32, #tpu.memory_space<vmem>>, %arg5: memref<8x128xf32, #tpu.memory_space<vmem>>) attributes {dimension_semantics = [#tpu.dimension_semantics<parallel>], iteration_bounds = array<i64: 1>, scalar_prefetch = 0 : i64, scratch_operands = 0 : i64, tpu.core_type = #tpu.core_type<tc>, window_params = [{transform_indices = @transform_0, window_bounds = array<i64: 8, 1024>}, {pipeline_mode = #tpu.pipeline_mode<synchronous>, transform_indices = @transform_1, window_bounds = array<i64: 1024, 128>}, {pipeline_mode = #tpu.pipeline_mode<synchronous>, transform_indices = @transform_2, window_bounds = array<i64: 1, 1024>}, {pipeline_mode = #tpu.pipeline_mode<synchronous>, transform_indices = @transform_3, window_bounds = array<i64: 1, 1024>}, {transform_indices = @transform_4, window_bounds = array<i64: 8, 128>}]} {
    %c0 = arith.constant 0 : index
    %c0_0 = arith.constant 0 : index
    %0 = vector.load %arg1[%c0, %c0_0] : memref<8x1024xbf16, #tpu.memory_space<vmem>>, vector<8x1024xbf16>
    %1 = arith.extf %0 : vector<8x1024xbf16> to vector<8x1024xf32>
    %c0_1 = arith.constant 0 : index
    %c0_2 = arith.constant 0 : index
    %2 = vector.load %arg3[%c0_1, %c0_2] : memref<1x1024xf32, #tpu.memory_space<vmem>>, vector<1x1024xf32>
    %3 = vector.broadcast %2 : vector<1x1024xf32> to vector<8x1024xf32>
    %4 = arith.mulf %1, %3 : vector<8x1024xf32>
    %c0_3 = arith.constant 0 : index
    %c0_4 = arith.constant 0 : index
    %5 = vector.load %arg4[%c0_3, %c0_4] : memref<1x1024xf32, #tpu.memory_space<vmem>>, vector<1x1024xf32>
    %6 = vector.broadcast %5 : vector<1x1024xf32> to vector<8x1024xf32>
    %7 = arith.addf %4, %6 : vector<8x1024xf32>
    %cst = arith.constant 0.000000e+00 : f32
    %8 = vector.broadcast %cst : f32 to vector<8x1024xf32>
    %9 = arith.cmpf oge, %7, %8 : vector<8x1024xf32>
    %cst_5 = arith.constant 2.000000e-01 : f32
    %10 = vector.broadcast %cst_5 : f32 to vector<8x1024xf32>
    %11 = arith.mulf %10, %7 : vector<8x1024xf32>
    %12 = arith.select %9, %7, %11 : vector<8x1024xi1>, vector<8x1024xf32>
    %13 = arith.truncf %12 : vector<8x1024xf32> to vector<8x1024xbf16>
    %c0_6 = arith.constant 0 : index
    %c0_7 = arith.constant 0 : index
    %14 = vector.load %arg2[%c0_6, %c0_7] : memref<1024x128xbf16, #tpu.memory_space<vmem>>, vector<1024x128xbf16>
    %cst_8 = arith.constant dense<0.000000e+00> : vector<8x128xf32>
    %15 = tpu.matmul %13, %14, %cst_8 {dimension_numbers = #tpu.dot_dimension_numbers<[1], [0], [0], [1], [0, 0, 1, 1], [], []>} : vector<8x1024xbf16>, vector<1024x128xbf16>, vector<8x128xf32> -> vector<8x128xf32>
    %16 = arith.negf %15 : vector<8x128xf32>
    %17 = math.exp %16 : vector<8x128xf32>
    %cst_9 = arith.constant 1.000000e+00 : f32
    %18 = vector.broadcast %cst_9 : f32 to vector<8x128xf32>
    %19 = arith.addf %18, %17 : vector<8x128xf32>
    %20 = arith.divf %18, %19 : vector<8x128xf32>
    %c0_10 = arith.constant 0 : index
    %c0_11 = arith.constant 0 : index
    %21 = vector.load %arg5[%c0_10, %c0_11] : memref<8x128xf32, #tpu.memory_space<vmem>>, vector<8x128xf32>
    tpu.vector_store %arg5[%c0_10, %c0_11], %20 {strides = array<i32>} : memref<8x128xf32, #tpu.memory_space<vmem>>, vector<8x128xf32>,
    return
  }
  func.func @transform_0(%arg0: i32) -> (i32, i32) {
    %c0_i32 = arith.constant 0 : i32
    %c0_i32_0 = arith.constant 0 : i32
    return %arg0, %c0_i32 : i32, i32
  }
  func.func @transform_1(%arg0: i32) -> (i32, i32) {
    %c0_i32 = arith.constant 0 : i32
    %c0_i32_0 = arith.constant 0 : i32
    %c0_i32_1 = arith.constant 0 : i32
    return %c0_i32, %c0_i32_0 : i32, i32
  }
  func.func @transform_2(%arg0: i32) -> (i32, i32) {
    %c0_i32 = arith.constant 0 : i32
    %c0_i32_0 = arith.constant 0 : i32
    %c0_i32_1 = arith.constant 0 : i32
    return %c0_i32, %c0_i32_0 : i32, i32
  }
  func.func @transform_3(%arg0: i32) -> (i32, i32) {
    %c0_i32 = arith.constant 0 : i32
    %c0_i32_0 = arith.constant 0 : i32
    %c0_i32_1 = arith.constant 0 : i32
    return %c0_i32, %c0_i32_0 : i32, i32
  }
  func.func @transform_4(%arg0: i32) -> (i32, i32) {
    %c0_i32 = arith.constant 0 : i32
    %c0_i32_0 = arith.constant 0 : i32
    return %arg0, %c0_i32 : i32, i32
  }
}

</mosaic_0001>

<llo_original>
// kernel: tile.33
$region0: #{tile.33}
  #allocation0 [shape = 's32[1]{0}', space=sflag, size = 0x4, scoped, tag = 'scoped memory for tile.33']
  %s0 = inlined_call_operand.vmem [shape: f32[64], index: 0, kind: input, shape index: {}]
  %s1 = inlined_call_operand.vmem [shape: f32[8,64], index: 1, kind: output, shape index: {}]
  // Predicated region
  $region2: #{tile.33} parent=0 // pred_check
    _
  $region3: #{tile.33} parent=0 // pred_check_branch
    %3 = sbr.rel (0) target = $region5
  $region4: #{tile.33} parent=0 // pred_region
    _
  $region5: #{tile.33} parent=0 // pred_fallthru
    _
  %v4 = vld [vmem:[%s0] ss:$0 sm:$0xff]
  %5 = vst [vmem:[%s1] sm:$0xff] %v4

// kernel: tile.34
$region0: #{tile.34}
  %s0 = inlined_call_operand.vmem [shape: f32[8,64], index: 0, kind: input, shape index: {}]
  %s1 = inlined_call_operand.vmem [shape: f32[1,512], index: 1, kind: output, shape index: {}]
  $region1: #{tile.34} parent=0
    #allocation0 [shape = 'u8[16384]{0}', space=vmem, size = 0x4000, scoped, tag = 'scoped mem for output reshape']
    %v2 = vld [vmem:[%s0] ss:$2 sm:$0xf]
    %vm3 = vcmask 523264
    %4 = vst.msk [vmem:[#allocation0] ss:$8 sm:$0xf] %vm3, %v2
    %s5 = scalar_lea.vmem %s0, 1
    %v6 = vld [vmem:[%s5] ss:$2 sm:$0xf]
    %7 = vrot.lane.b32.xlu0 %v6, 64
    %v8 = vpop.permute.xlu0 %7
    %vm9 = vcmask 1048064
    %10 = vst.msk [vmem:[#allocation0] ss:$8 sm:$0xf] %vm9, %v8
    %s12 = sshllo.u32 0, 1
    %v14 = vld [vmem:[#allocation0] sm:%s12]
    %s15 = sshllo.u32 0, 1
    %16 = vst [vmem:[%s1] sm:%s15] %v14
    %s17 = scalar_lea.vmem [#allocation0], 8
    %v18 = vld [vmem:[%s17] sm:%s12]
    %s19 = sshllo.u32 0, 1
    %s20 = scalar_lea.vmem %s1, 1
    %21 = vst [vmem:[%s20] sm:%s19] %v18
    %s22 = scalar_lea.vmem [#allocation0], 16
    %v23 = vld [vmem:[%s22] sm:%s12]
    %s24 = sshllo.u32 0, 1
    %s25 = smul.addr 1, 2
    %s26 = scalar_lea.vmem %s1, %s25
    %27 = vst [vmem:[%s26] sm:%s24] %v23
    %s28 = scalar_lea.vmem [#allocation0], 24
    %v29 = vld [vmem:[%s28] sm:%s12]
    %s30 = sshllo.u32 0, 1
    %s31 = smul.addr 1, 3
    %s32 = scalar_lea.vmem %s1, %s31
    %33 = vst [vmem:[%s32] sm:%s30] %v29

// kernel: discriminator_forward.4
$region0: #{discriminator_forward.4}
  #allocation0 [shape = 'u32[]', space=smem, size = 0x4, offset = 0x4, fixed_abs, tag = 'smem constant byte address 0x4 - core index']
  #allocation1 [shape = 'u32[144,128]{1,0:T(1,128)}', space=vmem, size = 0x12000, scoped, tag = 'internal scratch']
  %s0 = inlined_call_operand.vmem [shape: bf16[1024,32], index: 0, kind: input, shape index: {}]
  %s1 = inlined_call_operand.vmem [shape: bf16[32,64], index: 1, kind: input, shape index: {}]
  %s2 = inlined_call_operand.vmem [shape: f32[1,32], index: 2, kind: input, shape index: {}]
  %s3 = inlined_call_operand.vmem [shape: f32[1,32], index: 3, kind: input, shape index: {}]
  %s4 = inlined_call_operand.vmem [shape: bf16[1024,64], index: 4, kind: output, shape index: {0}]
  %s5 = inlined_call_operand.vmem [shape: f32[8,64], index: 5, kind: output, shape index: {1}]
  %6 = xla_tuple %s4, %s5
  %s7 = sld [smem:[#allocation0]]
  $region34: #{discriminator_forward.4} parent=0
    _
  %s9 = ssub.s32 1, %s7
  %s10 = scalar_select 0, %s9, %s7
  // Predicated region
  $region2: #{discriminator_forward.4} parent=0 // pred_check
    _
  $region3: #{discriminator_forward.4} parent=0 // pred_check_branch
    %12 = sbr.rel (0) target = $region5
  $region4: #{discriminator_forward.4} parent=0 // pred_region
    _
  $region5: #{discriminator_forward.4} parent=0 // pred_fallthru
    _
  // Predicated region
  $region6: #{discriminator_forward.4} parent=0 // pred_check
    _
  $region7: #{discriminator_forward.4} parent=0 // pred_check_branch
    %14 = sbr.rel (0) target = $region9
  $region8: #{discriminator_forward.4} parent=0 // pred_region
    _
  $region9: #{discriminator_forward.4} parent=0 // pred_fallthru
    _
  // Predicated region
  $region10: #{discriminator_forward.4} parent=0 // pred_check
    _
  $region11: #{discriminator_forward.4} parent=0 // pred_check_branch
    %16 = sbr.rel (0) target = $region13
  $region12: #{discriminator_forward.4} parent=0 // pred_region
    _
  $region13: #{discriminator_forward.4} parent=0 // pred_fallthru
    _
  // Predicated region
  $region14: #{discriminator_forward.4} parent=0 // pred_check
    _
  $region15: #{discriminator_forward.4} parent=0 // pred_check_branch
    %18 = sbr.rel (0) target = $region17
  $region16: #{discriminator_forward.4} parent=0 // pred_region
    _
  $region17: #{discriminator_forward.4} parent=0 // pred_fallthru
    _
  %v20 = vld [vmem:[%s0] sm:$0xf]
  %v21 = vld [vmem:[%s0 + $0x4] sm:$0xf]
  %v22 = vld [vmem:[%s0 + $0x8] sm:$0xf]
  %v23 = vld [vmem:[%s0 + $0xc] sm:$0xf]
  %v24 = vld [vmem:[%s0 + $0x10] sm:$0xf]
  %v25 = vld [vmem:[%s0 + $0x14] sm:$0xf]
  %v26 = vld [vmem:[%s0 + $0x18] sm:$0xf]
  %v27 = vld [vmem:[%s0 + $0x1c] sm:$0xf]
  %v28 = vld [vmem:[%s0 + $0x20] sm:$0xf]
  %v29 = vld [vmem:[%s0 + $0x24] sm:$0xf]
  %v30 = vld [vmem:[%s0 + $0x28] sm:$0xf]
  %v31 = vld [vmem:[%s0 + $0x2c] sm:$0xf]
  %v32 = vld [vmem:[%s0 + $0x30] sm:$0xf]
  %v33 = vld [vmem:[%s0 + $0x34] sm:$0xf]
  %v34 = vld [vmem:[%s0 + $0x38] sm:$0xf]
  %v35 = vld [vmem:[%s0 + $0x3c] sm:$0xf]
  %v36 = vld [vmem:[%s0 + $0x40] sm:$0xf]
  %v37 = vld [vmem:[%s0 + $0x44] sm:$0xf]
  %v38 = vld [vmem:[%s0 + $0x48] sm:$0xf]
  %v39 = vld [vmem:[%s0 + $0x4c] sm:$0xf]
  %v40 = vld [vmem:[%s0 + $0x50] sm:$0xf]
  %v41 = vld [vmem:[%s0 + $0x54] sm:$0xf]
  %v42 = vld [vmem:[%s0 + $0x58] sm:$0xf]
  %v43 = vld [vmem:[%s0 + $0x5c] sm:$0xf]
  %v44 = vld [vmem:[%s0 + $0x60] sm:$0xf]
  %v45 = vld [vmem:[%s0 + $0x64] sm:$0xf]
  %v46 = vld [vmem:[%s0 + $0x68] sm:$0xf]
  %v47 = vld [vmem:[%s0 + $0x6c] sm:$0xf]
  %v48 = vld [vmem:[%s0 + $0x70] sm:$0xf]
  %v49 = vld [vmem:[%s0 + $0x74] sm:$0xf]
  %v50 = vld [vmem:[%s0 + $0x78] sm:$0xf]
  %v51 = vld [vmem:[%s0 + $0x7c] sm:$0xf]
  %v52 = vld [vmem:[%s0 + $0x80] sm:$0xf]
  %v53 = vld [vmem:[%s0 + $0x84] sm:$0xf]
  %v54 = vld [vmem:[%s0 + $0x88] sm:$0xf]
  %v55 = vld [vmem:[%s0 + $0x8c] sm:$0xf]
  %v56 = vld [vmem:[%s0 + $0x90] sm:$0xf]
  %v57 = vld [vmem:[%s0 + $0x94] sm:$0xf]
  %v58 = vld [vmem:[%s0 + $0x98] sm:$0xf]
  %v59 = vld [vmem:[%s0 + $0x9c] sm:$0xf]
  %v60 = vld [vmem:[%s0 + $0xa0] sm:$0xf]
  %v61 = vld [vmem:[%s0 + $0xa4] sm:$0xf]
  %v62 = vld [vmem:[%s0 + $0xa8] sm:$0xf]
  %v63 = vld [vmem:[%s0 + $0xac] sm:$0xf]
  %v64 = vld [vmem:[%s0 + $0xb0] sm:$0xf]
  %v65 = vld [vmem:[%s0 + $0xb4] sm:$0xf]
  %v66 = vld [vmem:[%s0 + $0xb8] sm:$0xf]
  %v67 = vld [vmem:[%s0 + $0xbc] sm:$0xf]
  %v68 = vld [vmem:[%s0 + $0xc0] sm:$0xf]
  %v69 = vld [vmem:[%s0 + $0xc4] sm:$0xf]
  %v70 = vld [vmem:[%s0 + $0xc8] sm:$0xf]
  %v71 = vld [vmem:[%s0 + $0xcc] sm:$0xf]
  %v72 = vld [vmem:[%s0 + $0xd0] sm:$0xf]
  %v73 = vld [vmem:[%s0 + $0xd4] sm:$0xf]
  %v74 = vld [vmem:[%s0 + $0xd8] sm:$0xf]
  %v75 = vld [vmem:[%s0 + $0xdc] sm:$0xf]
  %v76 = vld [vmem:[%s0 + $0xe0] sm:$0xf]
  %v77 = vld [vmem:[%s0 + $0xe4] sm:$0xf]
  %v78 = vld [vmem:[%s0 + $0xe8] sm:$0xf]
  %v79 = vld [vmem:[%s0 + $0xec] sm:$0xf]
  %v80 = vld [vmem:[%s0 + $0xf0] sm:$0xf]
  %v81 = vld [vmem:[%s0 + $0xf4] sm:$0xf]
  %v82 = vld [vmem:[%s0 + $0xf8] sm:$0xf]
  %v83 = vld [vmem:[%s0 + $0xfc] sm:$0xf]
  %v84 = vld [vmem:[%s0 + $0x100] sm:$0xf]
  %v85 = vld [vmem:[%s0 + $0x104] sm:$0xf]
  %v86 = vld [vmem:[%s0 + $0x108] sm:$0xf]
  %v87 = vld [vmem:[%s0 + $0x10c] sm:$0xf]
  %v88 = vld [vmem:[%s0 + $0x110] sm:$0xf]
  %v89 = vld [vmem:[%s0 + $0x114] sm:$0xf]
  %v90 = vld [vmem:[%s0 + $0x118] sm:$0xf]
  %v91 = vld [vmem:[%s0 + $0x11c] sm:$0xf]
  %v92 = vld [vmem:[%s0 + $0x120] sm:$0xf]
  %v93 = vld [vmem:[%s0 + $0x124] sm:$0xf]
  %v94 = vld [vmem:[%s0 + $0x128] sm:$0xf]
  %v95 = vld [vmem:[%s0 + $0x12c] sm:$0xf]
  %v96 = vld [vmem:[%s0 + $0x130] sm:$0xf]
  %v97 = vld [vmem:[%s0 + $0x134] sm:$0xf]
  %v98 = vld [vmem:[%s0 + $0x138] sm:$0xf]
  %v99 = vld [vmem:[%s0 + $0x13c] sm:$0xf]
  %v100 = vld [vmem:[%s0 + $0x140] sm:$0xf]
  %v101 = vld [vmem:[%s0 + $0x144] sm:$0xf]
  %v102 = vld [vmem:[%s0 + $0x148] sm:$0xf]
  %v103 = vld [vmem:[%s0 + $0x14c] sm:$0xf]
  %v104 = vld [vmem:[%s0 + $0x150] sm:$0xf]
  %v105 = vld [vmem:[%s0 + $0x154] sm:$0xf]
  %v106 = vld [vmem:[%s0 + $0x158] sm:$0xf]
  %v107 = vld [vmem:[%s0 + $0x15c] sm:$0xf]
  %v108 = vld [vmem:[%s0 + $0x160] sm:$0xf]
  %v109 = vld [vmem:[%s0 + $0x164] sm:$0xf]
  %v110 = vld [vmem:[%s0 + $0x168] sm:$0xf]
  %v111 = vld [vmem:[%s0 + $0x16c] sm:$0xf]
  %v112 = vld [vmem:[%s0 + $0x170] sm:$0xf]
  %v113 = vld [vmem:[%s0 + $0x174] sm:$0xf]
  %v114 = vld [vmem:[%s0 + $0x178] sm:$0xf]
  %v115 = vld [vmem:[%s0 + $0x17c] sm:$0xf]
  %v116 = vld [vmem:[%s0 + $0x180] sm:$0xf]
  %v117 = vld [vmem:[%s0 + $0x184] sm:$0xf]
  %v118 = vld [vmem:[%s0 + $0x188] sm:$0xf]
  %v119 = vld [vmem:[%s0 + $0x18c] sm:$0xf]
  %v120 = vld [vmem:[%s0 + $0x190] sm:$0xf]
  %v121 = vld [vmem:[%s0 + $0x194] sm:$0xf]
  %v122 = vld [vmem:[%s0 + $0x198] sm:$0xf]
  %v123 = vld [vmem:[%s0 + $0x19c] sm:$0xf]
  %v124 = vld [vmem:[%s0 + $0x1a0] sm:$0xf]
  %v125 = vld [vmem:[%s0 + $0x1a4] sm:$0xf]
  %v126 = vld [vmem:[%s0 + $0x1a8] sm:$0xf]
  %v127 = vld [vmem:[%s0 + $0x1ac] sm:$0xf]
  %v128 = vld [vmem:[%s0 + $0x1b0] sm:$0xf]
  %v129 = vld [vmem:[%s0 + $0x1b4] sm:$0xf]
  %v130 = vld [vmem:[%s0 + $0x1b8] sm:$0xf]
  %v131 = vld [vmem:[%s0 + $0x1bc] sm:$0xf]
  %v132 = vld [vmem:[%s0 + $0x1c0] sm:$0xf]
  %v133 = vld [vmem:[%s0 + $0x1c4] sm:$0xf]
  %v134 = vld [vmem:[%s0 + $0x1c8] sm:$0xf]
  %v135 = vld [vmem:[%s0 + $0x1cc] sm:$0xf]
  %v136 = vld [vmem:[%s0 + $0x1d0] sm:$0xf]
  %v137 = vld [vmem:[%s0 + $0x1d4] sm:$0xf]
  %v138 = vld [vmem:[%s0 + $0x1d8] sm:$0xf]
  %v139 = vld [vmem:[%s0 + $0x1dc] sm:$0xf]
  %v140 = vld [vmem:[%s0 + $0x1e0] sm:$0xf]
  %v141 = vld [vmem:[%s0 + $0x1e4] sm:$0xf]
  %v142 = vld [vmem:[%s0 + $0x1e8] sm:$0xf]
  %v143 = vld [vmem:[%s0 + $0x1ec] sm:$0xf]
  %v144 = vld [vmem:[%s0 + $0x1f0] sm:$0xf]
  %v145 = vld [vmem:[%s0 + $0x1f4] sm:$0xf]
  %v146 = vld [vmem:[%s0 + $0x1f8] sm:$0xf]
  %v147 = vld [vmem:[%s0 + $0x1fc] sm:$0xf]
  %v148 = vld [vmem:[%s1] sm:$0xf]
  %v149 = vld [vmem:[%s1 + $0x4] sm:$0xf]
  %v150 = vld [vmem:[%s1 + $0x8] sm:$0xf]
  %v151 = vld [vmem:[%s1 + $0xc] sm:$0xf]
  %v280 = vunpack.c.l.b16 %v20
  %v281 = vunpack.c.l.b16 %v21
  %v282 = vunpack.c.l.b16 %v22
  %v283 = vunpack.c.l.b16 %v23
  %v284 = vunpack.c.l.b16 %v24
  %v285 = vunpack.c.l.b16 %v25
  %v286 = vunpack.c.l.b16 %v26
  %v287 = vunpack.c.l.b16 %v27
  %v288 = vunpack.c.l.b16 %v28
  %v289 = vunpack.c.l.b16 %v29
  %v290 = vunpack.c.l.b16 %v30
  %v291 = vunpack.c.l.b16 %v31
  %v292 = vunpack.c.l.b16 %v32
  %v293 = vunpack.c.l.b16 %v33
  %v294 = vunpack.c.l.b16 %v34
  %v295 = vunpack.c.l.b16 %v35
  %v296 = vunpack.c.l.b16 %v36
  %v297 = vunpack.c.l.b16 %v37
  %v298 = vunpack.c.l.b16 %v38
  %v299 = vunpack.c.l.b16 %v39
  %v300 = vunpack.c.l.b16 %v40
  %v301 = vunpack.c.l.b16 %v41
  %v302 = vunpack.c.l.b16 %v42
  %v303 = vunpack.c.l.b16 %v43
  %v304 = vunpack.c.l.b16 %v44
  %v305 = vunpack.c.l.b16 %v45
  %v306 = vunpack.c.l.b16 %v46
  %v307 = vunpack.c.l.b16 %v47
  %v308 = vunpack.c.l.b16 %v48
  %v309 = vunpack.c.l.b16 %v49
  %v310 = vunpack.c.l.b16 %v50
  %v311 = vunpack.c.l.b16 %v51
  %v312 = vunpack.c.l.b16 %v52
  %v313 = vunpack.c.l.b16 %v53
  %v314 = vunpack.c.l.b16 %v54
  %v315 = vunpack.c.l.b16 %v55
  %v316 = vunpack.c.l.b16 %v56
  %v317 = vunpack.c.l.b16 %v57
  %v318 = vunpack.c.l.b16 %v58
  %v319 = vunpack.c.l.b16 %v59
  %v320 = vunpack.c.l.b16 %v60
  %v321 = vunpack.c.l.b16 %v61
  %v322 = vunpack.c.l.b16 %v62
  %v323 = vunpack.c.l.b16 %v63
  %v324 = vunpack.c.l.b16 %v64
  %v325 = vunpack.c.l.b16 %v65
  %v326 = vunpack.c.l.b16 %v66
  %v327 = vunpack.c.l.b16 %v67
  %v328 = vunpack.c.l.b16 %v68
  %v329 = vunpack.c.l.b16 %v69
  %v330 = vunpack.c.l.b16 %v70
  %v331 = vunpack.c.l.b16 %v71
  %v332 = vunpack.c.l.b16 %v72
  %v333 = vunpack.c.l.b16 %v73
  %v334 = vunpack.c.l.b16 %v74
  %v335 = vunpack.c.l.b16 %v75
  %v336 = vunpack.c.l.b16 %v76
  %v337 = vunpack.c.l.b16 %v77
  %v338 = vunpack.c.l.b16 %v78
  %v339 = vunpack.c.l.b16 %v79
  %v340 = vunpack.c.l.b16 %v80
  %v341 = vunpack.c.l.b16 %v81
  %v342 = vunpack.c.l.b16 %v82
  %v343 = vunpack.c.l.b16 %v83
  %v344 = vunpack.c.l.b16 %v84
  %v345 = vunpack.c.l.b16 %v85
  %v346 = vunpack.c.l.b16 %v86
  %v347 = vunpack.c.l.b16 %v87
  %v348 = vunpack.c.l.b16 %v88
  %v349 = vunpack.c.l.b16 %v89
  %v350 = vunpack.c.l.b16 %v90
  %v351 = vunpack.c.l.b16 %v91
  %v352 = vunpack.c.l.b16 %v92
  %v353 = vunpack.c.l.b16 %v93
  %v354 = vunpack.c.l.b16 %v94
  %v355 = vunpack.c.l.b16 %v95
  %v356 = vunpack.c.l.b16 %v96
  %v357 = vunpack.c.l.b16 %v97
  %v358 = vunpack.c.l.b16 %v98
  %v359 = vunpack.c.l.b16 %v99
  %v360 = vunpack.c.l.b16 %v100
  %v361 = vunpack.c.l.b16 %v101
  %v362 = vunpack.c.l.b16 %v102
  %v363 = vunpack.c.l.b16 %v103
  %v364 = vunpack.c.l.b16 %v104
  %v365 = vunpack.c.l.b16 %v105
  %v366 = vunpack.c.l.b16 %v106
  %v367 = vunpack.c.l.b16 %v107
  %v368 = vunpack.c.l.b16 %v108
  %v369 = vunpack.c.l.b16 %v109
  %v370 = vunpack.c.l.b16 %v110
  %v371 = vunpack.c.l.b16 %v111
  %v372 = vunpack.c.l.b16 %v112
  %v373 = vunpack.c.l.b16 %v113
  %v374 = vunpack.c.l.b16 %v114
  %v375 = vunpack.c.l.b16 %v115
  %v376 = vunpack.c.l.b16 %v116
  %v377 = vunpack.c.l.b16 %v117
  %v378 = vunpack.c.l.b16 %v118
  %v379 = vunpack.c.l.b16 %v119
  %v380 = vunpack.c.l.b16 %v120
  %v381 = vunpack.c.l.b16 %v121
  %v382 = vunpack.c.l.b16 %v122
  %v383 = vunpack.c.l.b16 %v123
  %v384 = vunpack.c.l.b16 %v124
  %v385 = vunpack.c.l.b16 %v125
  %v386 = vunpack.c.l.b16 %v126
  %v387 = vunpack.c.l.b16 %v127
  %v388 = vunpack.c.l.b16 %v128
  %v389 = vunpack.c.l.b16 %v129
  %v390 = vunpack.c.l.b16 %v130
  %v391 = vunpack.c.l.b16 %v131
  %v392 = vunpack.c.l.b16 %v132
  %v393 = vunpack.c.l.b16 %v133
  %v394 = vunpack.c.l.b16 %v134
  %v395 = vunpack.c.l.b16 %v135
  %v396 = vunpack.c.l.b16 %v136
  %v397 = vunpack.c.l.b16 %v137
  %v398 = vunpack.c.l.b16 %v138
  %v399 = vunpack.c.l.b16 %v139
  %v400 = vunpack.c.l.b16 %v140
  %v401 = vunpack.c.l.b16 %v141
  %v402 = vunpack.c.l.b16 %v142
  %v403 = vunpack.c.l.b16 %v143
  %v404 = vunpack.c.l.b16 %v144
  %v405 = vunpack.c.l.b16 %v145
  %v406 = vunpack.c.l.b16 %v146
  %v407 = vunpack.c.l.b16 %v147
  %v408 = vpack.c.b16 %v281, %v280
  %v409 = vpack.c.b16 %v283, %v282
  %v410 = vpack.c.b16 %v285, %v284
  %v411 = vpack.c.b16 %v287, %v286
  %v412 = vpack.c.b16 %v289, %v288
  %v413 = vpack.c.b16 %v291, %v290
  %v414 = vpack.c.b16 %v293, %v292
  %v415 = vpack.c.b16 %v295, %v294
  %v416 = vpack.c.b16 %v297, %v296
  %v417 = vpack.c.b16 %v299, %v298
  %v418 = vpack.c.b16 %v301, %v300
  %v419 = vpack.c.b16 %v303, %v302
  %v420 = vpack.c.b16 %v305, %v304
  %v421 = vpack.c.b16 %v307, %v306
  %v422 = vpack.c.b16 %v309, %v308
  %v423 = vpack.c.b16 %v311, %v310
  %v424 = vpack.c.b16 %v313, %v312
  %v425 = vpack.c.b16 %v315, %v314
  %v426 = vpack.c.b16 %v317, %v316
  %v427 = vpack.c.b16 %v319, %v318
  %v428 = vpack.c.b16 %v321, %v320
  %v429 = vpack.c.b16 %v323, %v322
  %v430 = vpack.c.b16 %v325, %v324
  %v431 = vpack.c.b16 %v327, %v326
  %v432 = vpack.c.b16 %v329, %v328
  %v433 = vpack.c.b16 %v331, %v330
  %v434 = vpack.c.b16 %v333, %v332
  %v435 = vpack.c.b16 %v335, %v334
  %v436 = vpack.c.b16 %v337, %v336
  %v437 = vpack.c.b16 %v339, %v338
  %v438 = vpack.c.b16 %v341, %v340
  %v439 = vpack.c.b16 %v343, %v342
  %v440 = vpack.c.b16 %v345, %v344
  %v441 = vpack.c.b16 %v347, %v346
  %v442 = vpack.c.b16 %v349, %v348
  %v443 = vpack.c.b16 %v351, %v350
  %v444 = vpack.c.b16 %v353, %v352
  %v445 = vpack.c.b16 %v355, %v354
  %v446 = vpack.c.b16 %v357, %v356
  %v447 = vpack.c.b16 %v359, %v358
  %v448 = vpack.c.b16 %v361, %v360
  %v449 = vpack.c.b16 %v363, %v362
  %v450 = vpack.c.b16 %v365, %v364
  %v451 = vpack.c.b16 %v367, %v366
  %v452 = vpack.c.b16 %v369, %v368
  %v453 = vpack.c.b16 %v371, %v370
  %v454 = vpack.c.b16 %v373, %v372
  %v455 = vpack.c.b16 %v375, %v374
  %v456 = vpack.c.b16 %v377, %v376
  %v457 = vpack.c.b16 %v379, %v378
  %v458 = vpack.c.b16 %v381, %v380
  %v459 = vpack.c.b16 %v383, %v382
  %v460 = vpack.c.b16 %v385, %v384
  %v461 = vpack.c.b16 %v387, %v386
  %v462 = vpack.c.b16 %v389, %v388
  %v463 = vpack.c.b16 %v391, %v390
  %v464 = vpack.c.b16 %v393, %v392
  %v465 = vpack.c.b16 %v395, %v394
  %v466 = vpack.c.b16 %v397, %v396
  %v467 = vpack.c.b16 %v399, %v398
  %v468 = vpack.c.b16 %v401, %v400
  %v469 = vpack.c.b16 %v403, %v402
  %v470 = vpack.c.b16 %v405, %v404
  %v471 = vpack.c.b16 %v407, %v406
  %v476 = vunpack.c.l.b16 %v148
  %v477 = vunpack.c.l.b16 %v149
  %v478 = vunpack.c.l.b16 %v150
  %v479 = vunpack.c.l.b16 %v151
  %v480 = vpack.c.b16 %v477, %v476
  %v481 = vpack.c.b16 %v479, %v478
  %vm484 = vcmask 261120
  %v486 = vsel %vm484, %v408, 0
  %v489 = vsel %vm484, %v409, 0
  %v492 = vsel %vm484, %v410, 0
  %v495 = vsel %vm484, %v411, 0
  %v498 = vsel %vm484, %v412, 0
  %v501 = vsel %vm484, %v413, 0
  %v504 = vsel %vm484, %v414, 0
  %v507 = vsel %vm484, %v415, 0
  %v510 = vsel %vm484, %v416, 0
  %v513 = vsel %vm484, %v417, 0
  %v516 = vsel %vm484, %v418, 0
  %v519 = vsel %vm484, %v419, 0
  %v522 = vsel %vm484, %v420, 0
  %v525 = vsel %vm484, %v421, 0
  %v528 = vsel %vm484, %v422, 0
  %v531 = vsel %vm484, %v423, 0
  %v534 = vsel %vm484, %v424, 0
  %v537 = vsel %vm484, %v425, 0
  %v540 = vsel %vm484, %v426, 0
  %v543 = vsel %vm484, %v427, 0
  %v546 = vsel %vm484, %v428, 0
  %v549 = vsel %vm484, %v429, 0
  %v552 = vsel %vm484, %v430, 0
  %v555 = vsel %vm484, %v431, 0
  %v558 = vsel %vm484, %v432, 0
  %v561 = vsel %vm484, %v433, 0
  %v564 = vsel %vm484, %v434, 0
  %v567 = vsel %vm484, %v435, 0
  %v570 = vsel %vm484, %v436, 0
  %v573 = vsel %vm484, %v437, 0
  %v576 = vsel %vm484, %v438, 0
  %v579 = vsel %vm484, %v439, 0
  %v582 = vsel %vm484, %v440, 0
  %v585 = vsel %vm484, %v441, 0
  %v588 = vsel %vm484, %v442, 0
  %v591 = vsel %vm484, %v443, 0
  %v594 = vsel %vm484, %v444, 0
  %v597 = vsel %vm484, %v445, 0
  %v600 = vsel %vm484, %v446, 0
  %v603 = vsel %vm484, %v447, 0
  %v606 = vsel %vm484, %v448, 0
  %v609 = vsel %vm484, %v449, 0
  %v612 = vsel %vm484, %v450, 0
  %v615 = vsel %vm484, %v451, 0
  %v618 = vsel %vm484, %v452, 0
  %v621 = vsel %vm484, %v453, 0
  %v624 = vsel %vm484, %v454, 0
  %v627 = vsel %vm484, %v455, 0
  %v630 = vsel %vm484, %v456, 0
  %v633 = vsel %vm484, %v457, 0
  %v636 = vsel %vm484, %v458, 0
  %v639 = vsel %vm484, %v459, 0
  %v642 = vsel %vm484, %v460, 0
  %v645 = vsel %vm484, %v461, 0
  %v648 = vsel %vm484, %v462, 0
  %v651 = vsel %vm484, %v463, 0
  %v654 = vsel %vm484, %v464, 0
  %v657 = vsel %vm484, %v465, 0
  %v660 = vsel %vm484, %v466, 0
  %v663 = vsel %vm484, %v467, 0
  %v666 = vsel %vm484, %v468, 0
  %v669 = vsel %vm484, %v469, 0
  %v672 = vsel %vm484, %v470, 0
  %v675 = vsel %vm484, %v471, 0
  %677 = vmatprep.subr.bf16.mxu0 0
  %678 = vmatpush1.bf16.msra.mxu0 %v480
  %679 = vmatprep.subr.bf16.mxu0 0
  %680 = vmatpush1.bf16.msra.mxu0 %v481
  %681 = vmatprep.subr.bf16.mxu0 0
  %682 = vmatpush1.bf16.msra.mxu0 0
  %683 = vmatprep.subr.bf16.mxu0 0
  %684 = vmatpush1.bf16.msra.mxu0 0
  %685 = vmatprep.subr.bf16.mxu0 0
  %686 = vmatpush1.bf16.msra.mxu0 0
  %687 = vmatprep.subr.bf16.mxu0 0
  %688 = vmatpush1.bf16.msra.mxu0 0
  %689 = vmatprep.subr.bf16.mxu0 0
  %690 = vmatpush1.bf16.msra.mxu0 0
  %691 = vmatprep.subr.bf16.mxu0 0
  %692 = vmatpush1.bf16.msra.mxu0 0
  %693 = vmatprep.subr.bf16.mxu0 0
  %694 = vmatpush1.bf16.msra.mxu0 0
  %695 = vmatprep.subr.bf16.mxu0 0
  %696 = vmatpush1.bf16.msra.mxu0 0
  %697 = vmatprep.subr.bf16.mxu0 0
  %698 = vmatpush1.bf16.msra.mxu0 0
  %699 = vmatprep.subr.bf16.mxu0 0
  %700 = vmatpush1.bf16.msra.mxu0 0
  %701 = vmatprep.subr.bf16.mxu0 0
  %702 = vmatpush1.bf16.msra.mxu0 0
  %703 = vmatprep.subr.bf16.mxu0 0
  %704 = vmatpush1.bf16.msra.mxu0 0
  %705 = vmatprep.subr.bf16.mxu0 0
  %706 = vmatpush1.bf16.msra.mxu0 0
  %707 = vmatprep.subr.bf16.mxu0 0
  %708 = vmatpush1.bf16.msra.mxu0 0
  %709 = vmatprep.mubr.bf16.mxu0 0
  %710 = vmatmul.mubr.bf16.gmra.mrb[0].mxu0 %v486
  %v711 = vpop.f32.mrb[0].mxu0
  %v712 = vadd.f32 0.0, %v711
  %v713 = vpop.f32.mrb[0].mxu0
  %v714 = vpop.f32.mrb[0].mxu0
  %v715 = vadd.f32 0.0, %v714
  %v716 = vpop.f32.mrb[0].mxu0
  %717 = vmatprep.mubr.bf16.mxu0 0
  %718 = vmatmul.mubr.bf16.gmra.mrb[0].mxu0 %v489
  %v719 = vpop.f32.mrb[0].mxu0
  %v720 = vadd.f32 0.0, %v719
  %v721 = vpop.f32.mrb[0].mxu0
  %v722 = vpop.f32.mrb[0].mxu0
  %v723 = vadd.f32 0.0, %v722
  %v724 = vpop.f32.mrb[0].mxu0
  %725 = vmatprep.mubr.bf16.mxu0 0
  %726 = vmatmul.mubr.bf16.gmra.mrb[0].mxu0 %v492
  %v727 = vpop.f32.mrb[0].mxu0
  %v728 = vadd.f32 0.0, %v727
  %v729 = vpop.f32.mrb[0].mxu0
  %v730 = vpop.f32.mrb[0].mxu0
  %v731 = vadd.f32 0.0, %v730
  %v732 = vpop.f32.mrb[0].mxu0
  %733 = vmatprep.mubr.bf16.mxu0 0
  %734 = vmatmul.mubr.bf16.gmra.mrb[0].mxu0 %v495
  %v735 = vpop.f32.mrb[0].mxu0
  %v736 = vadd.f32 0.0, %v735
  %v737 = vpop.f32.mrb[0].mxu0
  %v738 = vpop.f32.mrb[0].mxu0
  %v739 = vadd.f32 0.0, %v738
  %v740 = vpop.f32.mrb[0].mxu0
  %741 = vmatprep.mubr.bf16.mxu0 0
  %742 = vmatmul.mubr.bf16.gmra.mrb[0].mxu0 %v498
  %v743 = vpop.f32.mrb[0].mxu0
  %v744 = vadd.f32 0.0, %v743
  %v745 = vpop.f32.mrb[0].mxu0
  %v746 = vpop.f32.mrb[0].mxu0
  %v747 = vadd.f32 0.0, %v746
  %v748 = vpop.f32.mrb[0].mxu0
  %749 = vmatprep.mubr.bf16.mxu0 0
  %750 = vmatmul.mubr.bf16.gmra.mrb[0].mxu0 %v501
  %v751 = vpop.f32.mrb[0].mxu0
  %v752 = vadd.f32 0.0, %v751
  %v753 = vpop.f32.mrb[0].mxu0
  %v754 = vpop.f32.mrb[0].mxu0
  %v755 = vadd.f32 0.0, %v754
  %v756 = vpop.f32.mrb[0].mxu0
  %757 = vmatprep.mubr.bf16.mxu0 0
  %758 = vmatmul.mubr.bf16.gmra.mrb[0].mxu0 %v504
  %v759 = vpop.f32.mrb[0].mxu0
  %v760 = vadd.f32 0.0, %v759
  %v761 = vpop.f32.mrb[0].mxu0
  %v762 = vpop.f32.mrb[0].mxu0
  %v763 = vadd.f32 0.0, %v762
  %v764 = vpop.f32.mrb[0].mxu0
  %765 = vmatprep.mubr.bf16.mxu0 0
  %766 = vmatmul.mubr.bf16.gmra.mrb[0].mxu0 %v507
  %v767 = vpop.f32.mrb[0].mxu0
  %v768 = vadd.f32 0.0, %v767
  %v769 = vpop.f32.mrb[0].mxu0
  %v770 = vpop.f32.mrb[0].mxu0
  %v771 = vadd.f32 0.0, %v770
  %v772 = vpop.f32.mrb[0].mxu0
  %773 = vmatprep.mubr.bf16.mxu0 0
  %774 = vmatmul.mubr.bf16.gmra.mrb[0].mxu0 %v510
  %v775 = vpop.f32.mrb[0].mxu0
  %v776 = vadd.f32 0.0, %v775
  %v777 = vpop.f32.mrb[0].mxu0
  %v778 = vpop.f32.mrb[0].mxu0
  %v779 = vadd.f32 0.0, %v778
  %v780 = vpop.f32.mrb[0].mxu0
  %781 = vmatprep.mubr.bf16.mxu0 0
  %782 = vmatmul.mubr.bf16.gmra.mrb[0].mxu0 %v513
  %v783 = vpop.f32.mrb[0].mxu0
  %v784 = vadd.f32 0.0, %v783
  %v785 = vpop.f32.mrb[0].mxu0
  %v786 = vpop.f32.mrb[0].mxu0
  %v787 = vadd.f32 0.0, %v786
  %v788 = vpop.f32.mrb[0].mxu0
  %789 = vmatprep.mubr.bf16.mxu0 0
  %790 = vmatmul.mubr.bf16.gmra.mrb[0].mxu0 %v516
  %v791 = vpop.f32.mrb[0].mxu0
  %v792 = vadd.f32 0.0, %v791
  %v793 = vpop.f32.mrb[0].mxu0
  %v794 = vpop.f32.mrb[0].mxu0
  %v795 = vadd.f32 0.0, %v794
  %v796 = vpop.f32.mrb[0].mxu0
  %797 = vmatprep.mubr.bf16.mxu0 0
  %798 = vmatmul.mubr.bf16.gmra.mrb[0].mxu0 %v519
  %v799 = vpop.f32.mrb[0].mxu0
  %v800 = vadd.f32 0.0, %v799
  %v801 = vpop.f32.mrb[0].mxu0
  %v802 = vpop.f32.mrb[0].mxu0
  %v803 = vadd.f32 0.0, %v802
  %v804 = vpop.f32.mrb[0].mxu0
  %805 = vmatprep.mubr.bf16.mxu0 0
  %806 = vmatmul.mubr.bf16.gmra.mrb[0].mxu0 %v522
  %v807 = vpop.f32.mrb[0].mxu0
  %v808 = vadd.f32 0.0, %v807
  %v809 = vpop.f32.mrb[0].mxu0
  %v810 = vpop.f32.mrb[0].mxu0
  %v811 = vadd.f32 0.0, %v810
  %v812 = vpop.f32.mrb[0].mxu0
  %813 = vmatprep.mubr.bf16.mxu0 0
  %814 = vmatmul.mubr.bf16.gmra.mrb[0].mxu0 %v525
  %v815 = vpop.f32.mrb[0].mxu0
  %v816 = vadd.f32 0.0, %v815
  %v817 = vpop.f32.mrb[0].mxu0
  %v818 = vpop.f32.mrb[0].mxu0
  %v819 = vadd.f32 0.0, %v818
  %v820 = vpop.f32.mrb[0].mxu0
  %821 = vmatprep.mubr.bf16.mxu0 0
  %822 = vmatmul.mubr.bf16.gmra.mrb[0].mxu0 %v528
  %v823 = vpop.f32.mrb[0].mxu0
  %v824 = vadd.f32 0.0, %v823
  %v825 = vpop.f32.mrb[0].mxu0
  %v826 = vpop.f32.mrb[0].mxu0
  %v827 = vadd.f32 0.0, %v826
  %v828 = vpop.f32.mrb[0].mxu0
  %829 = vmatprep.mubr.bf16.mxu0 0
  %830 = vmatmul.mubr.bf16.gmra.mrb[0].mxu0 %v531
  %v831 = vpop.f32.mrb[0].mxu0
  %v832 = vadd.f32 0.0, %v831
  %v833 = vpop.f32.mrb[0].mxu0
  %v834 = vpop.f32.mrb[0].mxu0
  %v835 = vadd.f32 0.0, %v834
  %v836 = vpop.f32.mrb[0].mxu0
  %837 = vmatprep.mubr.bf16.mxu0 0
  %838 = vmatmul.mubr.bf16.gmra.mrb[0].mxu0 %v534
  %v839 = vpop.f32.mrb[0].mxu0
  %v840 = vadd.f32 0.0, %v839
  %v841 = vpop.f32.mrb[0].mxu0
  %v842 = vpop.f32.mrb[0].mxu0
  %v843 = vadd.f32 0.0, %v842
  %v844 = vpop.f32.mrb[0].mxu0
  %845 = vmatprep.mubr.bf16.mxu0 0
  %846 = vmatmul.mubr.bf16.gmra.mrb[0].mxu0 %v537
  %v847 = vpop.f32.mrb[0].mxu0
  %v848 = vadd.f32 0.0, %v847
  %v849 = vpop.f32.mrb[0].mxu0
  %v850 = vpop.f32.mrb[0].mxu0
  %v851 = vadd.f32 0.0, %v850
  %v852 = vpop.f32.mrb[0].mxu0
  %853 = vmatprep.mubr.bf16.mxu0 0
  %854 = vmatmul.mubr.bf16.gmra.mrb[0].mxu0 %v540
  %v855 = vpop.f32.mrb[0].mxu0
  %v856 = vadd.f32 0.0, %v855
  %v857 = vpop.f32.mrb[0].mxu0
  %v858 = vpop.f32.mrb[0].mxu0
  %v859 = vadd.f32 0.0, %v858
  %v860 = vpop.f32.mrb[0].mxu0
  %861 = vmatprep.mubr.bf16.mxu0 0
  %862 = vmatmul.mubr.bf16.gmra.mrb[0].mxu0 %v543
  %v863 = vpop.f32.mrb[0].mxu0
  %v864 = vadd.f32 0.0, %v863
  %v865 = vpop.f32.mrb[0].mxu0
  %v866 = vpop.f32.mrb[0].mxu0
  %v867 = vadd.f32 0.0, %v866
  %v868 = vpop.f32.mrb[0].mxu0
  %869 = vmatprep.mubr.bf16.mxu0 0
  %870 = vmatmul.mubr.bf16.gmra.mrb[0].mxu0 %v546
  %v871 = vpop.f32.mrb[0].mxu0
  %v872 = vadd.f32 0.0, %v871
  %v873 = vpop.f32.mrb[0].mxu0
  %v874 = vpop.f32.mrb[0].mxu0
  %v875 = vadd.f32 0.0, %v874
  %v876 = vpop.f32.mrb[0].mxu0
  %877 = vmatprep.mubr.bf16.mxu0 0
  %878 = vmatmul.mubr.bf16.gmra.mrb[0].mxu0 %v549
  %v879 = vpop.f32.mrb[0].mxu0
  %v880 = vadd.f32 0.0, %v879
  %v881 = vpop.f32.mrb[0].mxu0
  %v882 = vpop.f32.mrb[0].mxu0
  %v883 = vadd.f32 0.0, %v882
  %v884 = vpop.f32.mrb[0].mxu0
  %885 = vmatprep.mubr.bf16.mxu0 0
  %886 = vmatmul.mubr.bf16.gmra.mrb[0].mxu0 %v552
  %v887 = vpop.f32.mrb[0].mxu0
  %v888 = vadd.f32 0.0, %v887
  %v889 = vpop.f32.mrb[0].mxu0
  %v890 = vpop.f32.mrb[0].mxu0
  %v891 = vadd.f32 0.0, %v890
  %v892 = vpop.f32.mrb[0].mxu0
  %893 = vmatprep.mubr.bf16.mxu0 0
  %894 = vmatmul.mubr.bf16.gmra.mrb[0].mxu0 %v555
  %v895 = vpop.f32.mrb[0].mxu0
  %v896 = vadd.f32 0.0, %v895
  %v897 = vpop.f32.mrb[0].mxu0
  %v898 = vpop.f32.mrb[0].mxu0
  %v899 = vadd.f32 0.0, %v898
  %v900 = vpop.f32.mrb[0].mxu0
  %901 = vmatprep.mubr.bf16.mxu0 0
  %902 = vmatmul.mubr.bf16.gmra.mrb[0].mxu0 %v558
  %v903 = vpop.f32.mrb[0].mxu0
  %v904 = vadd.f32 0.0, %v903
  %v905 = vpop.f32.mrb[0].mxu0
  %v906 = vpop.f32.mrb[0].mxu0
  %v907 = vadd.f32 0.0, %v906
  %v908 = vpop.f32.mrb[0].mxu0
  %909 = vmatprep.mubr.bf16.mxu0 0
  %910 = vmatmul.mubr.bf16.gmra.mrb[0].mxu0 %v561
  %v911 = vpop.f32.mrb[0].mxu0
  %v912 = vadd.f32 0.0, %v911
  %v913 = vpop.f32.mrb[0].mxu0
  %v914 = vpop.f32.mrb[0].mxu0
  %v915 = vadd.f32 0.0, %v914
  %v916 = vpop.f32.mrb[0].mxu0
  %917 = vmatprep.mubr.bf16.mxu0 0
  %918 = vmatmul.mubr.bf16.gmra.mrb[0].mxu0 %v564
  %v919 = vpop.f32.mrb[0].mxu0
  %v920 = vadd.f32 0.0, %v919
  %v921 = vpop.f32.mrb[0].mxu0
  %v922 = vpop.f32.mrb[0].mxu0
  %v923 = vadd.f32 0.0, %v922
  %v924 = vpop.f32.mrb[0].mxu0
  %925 = vmatprep.mubr.bf16.mxu0 0
  %926 = vmatmul.mubr.bf16.gmra.mrb[0].mxu0 %v567
  %v927 = vpop.f32.mrb[0].mxu0
  %v928 = vadd.f32 0.0, %v927
  %v929 = vpop.f32.mrb[0].mxu0
  %v930 = vpop.f32.mrb[0].mxu0
  %v931 = vadd.f32 0.0, %v930
  %v932 = vpop.f32.mrb[0].mxu0
  %933 = vmatprep.mubr.bf16.mxu0 0
  %934 = vmatmul.mubr.bf16.gmra.mrb[0].mxu0 %v570
  %v935 = vpop.f32.mrb[0].mxu0
  %v936 = vadd.f32 0.0, %v935
  %v937 = vpop.f32.mrb[0].mxu0
  %v938 = vpop.f32.mrb[0].mxu0
  %v939 = vadd.f32 0.0, %v938
  %v940 = vpop.f32.mrb[0].mxu0
  %941 = vmatprep.mubr.bf16.mxu0 0
  %942 = vmatmul.mubr.bf16.gmra.mrb[0].mxu0 %v573
  %v943 = vpop.f32.mrb[0].mxu0
  %v944 = vadd.f32 0.0, %v943
  %v945 = vpop.f32.mrb[0].mxu0
  %v946 = vpop.f32.mrb[0].mxu0
  %v947 = vadd.f32 0.0, %v946
  %v948 = vpop.f32.mrb[0].mxu0
  %949 = vmatprep.mubr.bf16.mxu0 0
  %950 = vmatmul.mubr.bf16.gmra.mrb[0].mxu0 %v576
  %v951 = vpop.f32.mrb[0].mxu0
  %v952 = vadd.f32 0.0, %v951
  %v953 = vpop.f32.mrb[0].mxu0
  %v954 = vpop.f32.mrb[0].mxu0
  %v955 = vadd.f32 0.0, %v954
  %v956 = vpop.f32.mrb[0].mxu0
  %957 = vmatprep.mubr.bf16.mxu0 0
  %958 = vmatmul.mubr.bf16.gmra.mrb[0].mxu0 %v579
  %v959 = vpop.f32.mrb[0].mxu0
  %v960 = vadd.f32 0.0, %v959
  %v961 = vpop.f32.mrb[0].mxu0
  %v962 = vpop.f32.mrb[0].mxu0
  %v963 = vadd.f32 0.0, %v962
  %v964 = vpop.f32.mrb[0].mxu0
  %965 = vmatprep.mubr.bf16.mxu0 0
  %966 = vmatmul.mubr.bf16.gmra.mrb[0].mxu0 %v582
  %v967 = vpop.f32.mrb[0].mxu0
  %v968 = vadd.f32 0.0, %v967
  %v969 = vpop.f32.mrb[0].mxu0
  %v970 = vpop.f32.mrb[0].mxu0
  %v971 = vadd.f32 0.0, %v970
  %v972 = vpop.f32.mrb[0].mxu0
  %973 = vmatprep.mubr.bf16.mxu0 0
  %974 = vmatmul.mubr.bf16.gmra.mrb[0].mxu0 %v585
  %v975 = vpop.f32.mrb[0].mxu0
  %v976 = vadd.f32 0.0, %v975
  %v977 = vpop.f32.mrb[0].mxu0
  %v978 = vpop.f32.mrb[0].mxu0
  %v979 = vadd.f32 0.0, %v978
  %v980 = vpop.f32.mrb[0].mxu0
  %981 = vmatprep.mubr.bf16.mxu0 0
  %982 = vmatmul.mubr.bf16.gmra.mrb[0].mxu0 %v588
  %v983 = vpop.f32.mrb[0].mxu0
  %v984 = vadd.f32 0.0, %v983
  %v985 = vpop.f32.mrb[0].mxu0
  %v986 = vpop.f32.mrb[0].mxu0
  %v987 = vadd.f32 0.0, %v986
  %v988 = vpop.f32.mrb[0].mxu0
  %989 = vmatprep.mubr.bf16.mxu0 0
  %990 = vmatmul.mubr.bf16.gmra.mrb[0].mxu0 %v591
  %v991 = vpop.f32.mrb[0].mxu0
  %v992 = vadd.f32 0.0, %v991
  %v993 = vpop.f32.mrb[0].mxu0
  %v994 = vpop.f32.mrb[0].mxu0
  %v995 = vadd.f32 0.0, %v994
  %v996 = vpop.f32.mrb[0].mxu0
  %997 = vmatprep.mubr.bf16.mxu0 0
  %998 = vmatmul.mubr.bf16.gmra.mrb[0].mxu0 %v594
  %v999 = vpop.f32.mrb[0].mxu0
  %v1000 = vadd.f32 0.0, %v999
  %v1001 = vpop.f32.mrb[0].mxu0
  %v1002 = vpop.f32.mrb[0].mxu0
  %v1003 = vadd.f32 0.0, %v1002
  %v1004 = vpop.f32.mrb[0].mxu0
  %1005 = vmatprep.mubr.bf16.mxu0 0
  %1006 = vmatmul.mubr.bf16.gmra.mrb[0].mxu0 %v597
  %v1007 = vpop.f32.mrb[0].mxu0
  %v1008 = vadd.f32 0.0, %v1007
  %v1009 = vpop.f32.mrb[0].mxu0
  %v1010 = vpop.f32.mrb[0].mxu0
  %v1011 = vadd.f32 0.0, %v1010
  %v1012 = vpop.f32.mrb[0].mxu0
  %1013 = vmatprep.mubr.bf16.mxu0 0
  %1014 = vmatmul.mubr.bf16.gmra.mrb[0].mxu0 %v600
  %v1015 = vpop.f32.mrb[0].mxu0
  %v1016 = vadd.f32 0.0, %v1015
  %v1017 = vpop.f32.mrb[0].mxu0
  %v1018 = vpop.f32.mrb[0].mxu0
  %v1019 = vadd.f32 0.0, %v1018
  %v1020 = vpop.f32.mrb[0].mxu0
  %1021 = vmatprep.mubr.bf16.mxu0 0
  %1022 = vmatmul.mubr.bf16.gmra.mrb[0].mxu0 %v603
  %v1023 = vpop.f32.mrb[0].mxu0
  %v1024 = vadd.f32 0.0, %v1023
  %v1025 = vpop.f32.mrb[0].mxu0
  %v1026 = vpop.f32.mrb[0].mxu0
  %v1027 = vadd.f32 0.0, %v1026
  %v1028 = vpop.f32.mrb[0].mxu0
  %1029 = vmatprep.mubr.bf16.mxu0 0
  %1030 = vmatmul.mubr.bf16.gmra.mrb[0].mxu0 %v606
  %v1031 = vpop.f32.mrb[0].mxu0
  %v1032 = vadd.f32 0.0, %v1031
  %v1033 = vpop.f32.mrb[0].mxu0
  %v1034 = vpop.f32.mrb[0].mxu0
  %v1035 = vadd.f32 0.0, %v1034
  %v1036 = vpop.f32.mrb[0].mxu0
  %1037 = vmatprep.mubr.bf16.mxu0 0
  %1038 = vmatmul.mubr.bf16.gmra.mrb[0].mxu0 %v609
  %v1039 = vpop.f32.mrb[0].mxu0
  %v1040 = vadd.f32 0.0, %v1039
  %v1041 = vpop.f32.mrb[0].mxu0
  %v1042 = vpop.f32.mrb[0].mxu0
  %v1043 = vadd.f32 0.0, %v1042
  %v1044 = vpop.f32.mrb[0].mxu0
  %1045 = vmatprep.mubr.bf16.mxu0 0
  %1046 = vmatmul.mubr.bf16.gmra.mrb[0].mxu0 %v612
  %v1047 = vpop.f32.mrb[0].mxu0
  %v1048 = vadd.f32 0.0, %v1047
  %v1049 = vpop.f32.mrb[0].mxu0
  %v1050 = vpop.f32.mrb[0].mxu0
  %v1051 = vadd.f32 0.0, %v1050
  %v1052 = vpop.f32.mrb[0].mxu0
  %1053 = vmatprep.mubr.bf16.mxu0 0
  %1054 = vmatmul.mubr.bf16.gmra.mrb[0].mxu0 %v615
  %v1055 = vpop.f32.mrb[0].mxu0
  %v1056 = vadd.f32 0.0, %v1055
  %v1057 = vpop.f32.mrb[0].mxu0
  %v1058 = vpop.f32.mrb[0].mxu0
  %v1059 = vadd.f32 0.0, %v1058
  %v1060 = vpop.f32.mrb[0].mxu0
  %1061 = vmatprep.mubr.bf16.mxu0 0
  %1062 = vmatmul.mubr.bf16.gmra.mrb[0].mxu0 %v618
  %v1063 = vpop.f32.mrb[0].mxu0
  %v1064 = vadd.f32 0.0, %v1063
  %v1065 = vpop.f32.mrb[0].mxu0
  %v1066 = vpop.f32.mrb[0].mxu0
  %v1067 = vadd.f32 0.0, %v1066
  %v1068 = vpop.f32.mrb[0].mxu0
  %1069 = vmatprep.mubr.bf16.mxu0 0
  %1070 = vmatmul.mubr.bf16.gmra.mrb[0].mxu0 %v621
  %v1071 = vpop.f32.mrb[0].mxu0
  %v1072 = vadd.f32 0.0, %v1071
  %v1073 = vpop.f32.mrb[0].mxu0
  %v1074 = vpop.f32.mrb[0].mxu0
  %v1075 = vadd.f32 0.0, %v1074
  %v1076 = vpop.f32.mrb[0].mxu0
  %1077 = vmatprep.mubr.bf16.mxu0 0
  %1078 = vmatmul.mubr.bf16.gmra.mrb[0].mxu0 %v624
  %v1079 = vpop.f32.mrb[0].mxu0
  %v1080 = vadd.f32 0.0, %v1079
  %v1081 = vpop.f32.mrb[0].mxu0
  %v1082 = vpop.f32.mrb[0].mxu0
  %v1083 = vadd.f32 0.0, %v1082
  %v1084 = vpop.f32.mrb[0].mxu0
  %1085 = vmatprep.mubr.bf16.mxu0 0
  %1086 = vmatmul.mubr.bf16.gmra.mrb[0].mxu0 %v627
  %v1087 = vpop.f32.mrb[0].mxu0
  %v1088 = vadd.f32 0.0, %v1087
  %v1089 = vpop.f32.mrb[0].mxu0
  %v1090 = vpop.f32.mrb[0].mxu0
  %v1091 = vadd.f32 0.0, %v1090
  %v1092 = vpop.f32.mrb[0].mxu0
  %1093 = vmatprep.mubr.bf16.mxu0 0
  %1094 = vmatmul.mubr.bf16.gmra.mrb[0].mxu0 %v630
  %v1095 = vpop.f32.mrb[0].mxu0
  %v1096 = vadd.f32 0.0, %v1095
  %v1097 = vpop.f32.mrb[0].mxu0
  %v1098 = vpop.f32.mrb[0].mxu0
  %v1099 = vadd.f32 0.0, %v1098
  %v1100 = vpop.f32.mrb[0].mxu0
  %1101 = vmatprep.mubr.bf16.mxu0 0
  %1102 = vmatmul.mubr.bf16.gmra.mrb[0].mxu0 %v633
  %v1103 = vpop.f32.mrb[0].mxu0
  %v1104 = vadd.f32 0.0, %v1103
  %v1105 = vpop.f32.mrb[0].mxu0
  %v1106 = vpop.f32.mrb[0].mxu0
  %v1107 = vadd.f32 0.0, %v1106
  %v1108 = vpop.f32.mrb[0].mxu0
  %1109 = vmatprep.mubr.bf16.mxu0 0
  %1110 = vmatmul.mubr.bf16.gmra.mrb[0].mxu0 %v636
  %v1111 = vpop.f32.mrb[0].mxu0
  %v1112 = vadd.f32 0.0, %v1111
  %v1113 = vpop.f32.mrb[0].mxu0
  %v1114 = vpop.f32.mrb[0].mxu0
  %v1115 = vadd.f32 0.0, %v1114
  %v1116 = vpop.f32.mrb[0].mxu0
  %1117 = vmatprep.mubr.bf16.mxu0 0
  %1118 = vmatmul.mubr.bf16.gmra.mrb[0].mxu0 %v639
  %v1119 = vpop.f32.mrb[0].mxu0
  %v1120 = vadd.f32 0.0, %v1119
  %v1121 = vpop.f32.mrb[0].mxu0
  %v1122 = vpop.f32.mrb[0].mxu0
  %v1123 = vadd.f32 0.0, %v1122
  %v1124 = vpop.f32.mrb[0].mxu0
  %1125 = vmatprep.mubr.bf16.mxu0 0
  %1126 = vmatmul.mubr.bf16.gmra.mrb[0].mxu0 %v642
  %v1127 = vpop.f32.mrb[0].mxu0
  %v1128 = vadd.f32 0.0, %v1127
  %v1129 = vpop.f32.mrb[0].mxu0
  %v1130 = vpop.f32.mrb[0].mxu0
  %v1131 = vadd.f32 0.0, %v1130
  %v1132 = vpop.f32.mrb[0].mxu0
  %1133 = vmatprep.mubr.bf16.mxu0 0
  %1134 = vmatmul.mubr.bf16.gmra.mrb[0].mxu0 %v645
  %v1135 = vpop.f32.mrb[0].mxu0
  %v1136 = vadd.f32 0.0, %v1135
  %v1137 = vpop.f32.mrb[0].mxu0
  %v1138 = vpop.f32.mrb[0].mxu0
  %v1139 = vadd.f32 0.0, %v1138
  %v1140 = vpop.f32.mrb[0].mxu0
  %1141 = vmatprep.mubr.bf16.mxu0 0
  %1142 = vmatmul.mubr.bf16.gmra.mrb[0].mxu0 %v648
  %v1143 = vpop.f32.mrb[0].mxu0
  %v1144 = vadd.f32 0.0, %v1143
  %v1145 = vpop.f32.mrb[0].mxu0
  %v1146 = vpop.f32.mrb[0].mxu0
  %v1147 = vadd.f32 0.0, %v1146
  %v1148 = vpop.f32.mrb[0].mxu0
  %1149 = vmatprep.mubr.bf16.mxu0 0
  %1150 = vmatmul.mubr.bf16.gmra.mrb[0].mxu0 %v651
  %v1151 = vpop.f32.mrb[0].mxu0
  %v1152 = vadd.f32 0.0, %v1151
  %v1153 = vpop.f32.mrb[0].mxu0
  %v1154 = vpop.f32.mrb[0].mxu0
  %v1155 = vadd.f32 0.0, %v1154
  %v1156 = vpop.f32.mrb[0].mxu0
  %1157 = vmatprep.mubr.bf16.mxu0 0
  %1158 = vmatmul.mubr.bf16.gmra.mrb[0].mxu0 %v654
  %v1159 = vpop.f32.mrb[0].mxu0
  %v1160 = vadd.f32 0.0, %v1159
  %v1161 = vpop.f32.mrb[0].mxu0
  %v1162 = vpop.f32.mrb[0].mxu0
  %v1163 = vadd.f32 0.0, %v1162
  %v1164 = vpop.f32.mrb[0].mxu0
  %1165 = vmatprep.mubr.bf16.mxu0 0
  %1166 = vmatmul.mubr.bf16.gmra.mrb[0].mxu0 %v657
  %v1167 = vpop.f32.mrb[0].mxu0
  %v1168 = vadd.f32 0.0, %v1167
  %v1169 = vpop.f32.mrb[0].mxu0
  %v1170 = vpop.f32.mrb[0].mxu0
  %v1171 = vadd.f32 0.0, %v1170
  %v1172 = vpop.f32.mrb[0].mxu0
  %1173 = vmatprep.mubr.bf16.mxu0 0
  %1174 = vmatmul.mubr.bf16.gmra.mrb[0].mxu0 %v660
  %v1175 = vpop.f32.mrb[0].mxu0
  %v1176 = vadd.f32 0.0, %v1175
  %v1177 = vpop.f32.mrb[0].mxu0
  %v1178 = vpop.f32.mrb[0].mxu0
  %v1179 = vadd.f32 0.0, %v1178
  %v1180 = vpop.f32.mrb[0].mxu0
  %1181 = vmatprep.mubr.bf16.mxu0 0
  %1182 = vmatmul.mubr.bf16.gmra.mrb[0].mxu0 %v663
  %v1183 = vpop.f32.mrb[0].mxu0
  %v1184 = vadd.f32 0.0, %v1183
  %v1185 = vpop.f32.mrb[0].mxu0
  %v1186 = vpop.f32.mrb[0].mxu0
  %v1187 = vadd.f32 0.0, %v1186
  %v1188 = vpop.f32.mrb[0].mxu0
  %1189 = vmatprep.mubr.bf16.mxu0 0
  %1190 = vmatmul.mubr.bf16.gmra.mrb[0].mxu0 %v666
  %v1191 = vpop.f32.mrb[0].mxu0
  %v1192 = vadd.f32 0.0, %v1191
  %v1193 = vpop.f32.mrb[0].mxu0
  %v1194 = vpop.f32.mrb[0].mxu0
  %v1195 = vadd.f32 0.0, %v1194
  %v1196 = vpop.f32.mrb[0].mxu0
  %1197 = vmatprep.mubr.bf16.mxu0 0
  %1198 = vmatmul.mubr.bf16.gmra.mrb[0].mxu0 %v669
  %v1199 = vpop.f32.mrb[0].mxu0
  %v1200 = vadd.f32 0.0, %v1199
  %v1201 = vpop.f32.mrb[0].mxu0
  %v1202 = vpop.f32.mrb[0].mxu0
  %v1203 = vadd.f32 0.0, %v1202
  %v1204 = vpop.f32.mrb[0].mxu0
  %1205 = vmatprep.mubr.bf16.mxu0 0
  %1206 = vmatmul.mubr.bf16.gmra.mrb[0].mxu0 %v672
  %v1207 = vpop.f32.mrb[0].mxu0
  %v1208 = vadd.f32 0.0, %v1207
  %v1209 = vpop.f32.mrb[0].mxu0
  %v1210 = vpop.f32.mrb[0].mxu0
  %v1211 = vadd.f32 0.0, %v1210
  %v1212 = vpop.f32.mrb[0].mxu0
  %1213 = vmatprep.mubr.bf16.mxu0 0
  %1214 = vmatmul.mubr.bf16.gmra.mrb[0].mxu0 %v675
  %v1215 = vpop.f32.mrb[0].mxu0
  %v1216 = vadd.f32 0.0, %v1215
  %v1217 = vpop.f32.mrb[0].mxu0
  %v1218 = vpop.f32.mrb[0].mxu0
  %v1219 = vadd.f32 0.0, %v1218
  %v1220 = vpop.f32.mrb[0].mxu0
  %1221 = vdwg.mxu0
  %v1222 = vpack.c.bf16 %v715, %v712
  %v1223 = vpack.c.bf16 %v723, %v720
  %v1224 = vpack.c.bf16 %v731, %v728
  %v1225 = vpack.c.bf16 %v739, %v736
  %v1226 = vpack.c.bf16 %v747, %v744
  %v1227 = vpack.c.bf16 %v755, %v752
  %v1228 = vpack.c.bf16 %v763, %v760
  %v1229 = vpack.c.bf16 %v771, %v768
  %v1230 = vpack.c.bf16 %v779, %v776
  %v1231 = vpack.c.bf16 %v787, %v784
  %v1232 = vpack.c.bf16 %v795, %v792
  %v1233 = vpack.c.bf16 %v803, %v800
  %v1234 = vpack.c.bf16 %v811, %v808
  %v1235 = vpack.c.bf16 %v819, %v816
  %v1236 = vpack.c.bf16 %v827, %v824
  %v1237 = vpack.c.bf16 %v835, %v832
  %v1238 = vpack.c.bf16 %v843, %v840
  %v1239 = vpack.c.bf16 %v851, %v848
  %v1240 = vpack.c.bf16 %v859, %v856
  %v1241 = vpack.c.bf16 %v867, %v864
  %v1242 = vpack.c.bf16 %v875, %v872
  %v1243 = vpack.c.bf16 %v883, %v880
  %v1244 = vpack.c.bf16 %v891, %v888
  %v1245 = vpack.c.bf16 %v899, %v896
  %v1246 = vpack.c.bf16 %v907, %v904
  %v1247 = vpack.c.bf16 %v915, %v912
  %v1248 = vpack.c.bf16 %v923, %v920
  %v1249 = vpack.c.bf16 %v931, %v928
  %v1250 = vpack.c.bf16 %v939, %v936
  %v1251 = vpack.c.bf16 %v947, %v944
  %v1252 = vpack.c.bf16 %v955, %v952
  %v1253 = vpack.c.bf16 %v963, %v960
  %v1254 = vpack.c.bf16 %v971, %v968
  %v1255 = vpack.c.bf16 %v979, %v976
  %v1256 = vpack.c.bf16 %v987, %v984
  %v1257 = vpack.c.bf16 %v995, %v992
  %v1258 = vpack.c.bf16 %v1003, %v1000
  %v1259 = vpack.c.bf16 %v1011, %v1008
  %v1260 = vpack.c.bf16 %v1019, %v1016
  %v1261 = vpack.c.bf16 %v1027, %v1024
  %v1262 = vpack.c.bf16 %v1035, %v1032
  %v1263 = vpack.c.bf16 %v1043, %v1040
  %v1264 = vpack.c.bf16 %v1051, %v1048
  %v1265 = vpack.c.bf16 %v1059, %v1056
  %v1266 = vpack.c.bf16 %v1067, %v1064
  %v1267 = vpack.c.bf16 %v1075, %v1072
  %v1268 = vpack.c.bf16 %v1083, %v1080
  %v1269 = vpack.c.bf16 %v1091, %v1088
  %v1270 = vpack.c.bf16 %v1099, %v1096
  %v1271 = vpack.c.bf16 %v1107, %v1104
  %v1272 = vpack.c.bf16 %v1115, %v1112
  %v1273 = vpack.c.bf16 %v1123, %v1120
  %v1274 = vpack.c.bf16 %v1131, %v1128
  %v1275 = vpack.c.bf16 %v1139, %v1136
  %v1276 = vpack.c.bf16 %v1147, %v1144
  %v1277 = vpack.c.bf16 %v1155, %v1152
  %v1278 = vpack.c.bf16 %v1163, %v1160
  %v1279 = vpack.c.bf16 %v1171, %v1168
  %v1280 = vpack.c.bf16 %v1179, %v1176
  %v1281 = vpack.c.bf16 %v1187, %v1184
  %v1282 = vpack.c.bf16 %v1195, %v1192
  %v1283 = vpack.c.bf16 %v1203, %v1200
  %v1284 = vpack.c.bf16 %v1211, %v1208
  %v1285 = vpack.c.bf16 %v1219, %v1216
  %v1350 = vunpack.c.l.b16 %v1222
  %v1351 = vunpack.c.h.b16 %v1222
  %v1352 = vunpack.c.l.b16 %v1223
  %v1353 = vunpack.c.h.b16 %v1223
  %v1354 = vunpack.c.l.b16 %v1224
  %v1355 = vunpack.c.h.b16 %v1224
  %v1356 = vunpack.c.l.b16 %v1225
  %v1357 = vunpack.c.h.b16 %v1225
  %v1358 = vunpack.c.l.b16 %v1226
  %v1359 = vunpack.c.h.b16 %v1226
  %v1360 = vunpack.c.l.b16 %v1227
  %v1361 = vunpack.c.h.b16 %v1227
  %v1362 = vunpack.c.l.b16 %v1228
  %v1363 = vunpack.c.h.b16 %v1228
  %v1364 = vunpack.c.l.b16 %v1229
  %v1365 = vunpack.c.h.b16 %v1229
  %v1366 = vunpack.c.l.b16 %v1230
  %v1367 = vunpack.c.h.b16 %v1230
  %v1368 = vunpack.c.l.b16 %v1231
  %v1369 = vunpack.c.h.b16 %v1231
  %v1370 = vunpack.c.l.b16 %v1232
  %v1371 = vunpack.c.h.b16 %v1232
  %v1372 = vunpack.c.l.b16 %v1233
  %v1373 = vunpack.c.h.b16 %v1233
  %v1374 = vunpack.c.l.b16 %v1234
  %v1375 = vunpack.c.h.b16 %v1234
  %v1376 = vunpack.c.l.b16 %v1235
  %v1377 = vunpack.c.h.b16 %v1235
  %v1378 = vunpack.c.l.b16 %v1236
  %v1379 = vunpack.c.h.b16 %v1236
  %v1380 = vunpack.c.l.b16 %v1237
  %v1381 = vunpack.c.h.b16 %v1237
  %v1382 = vunpack.c.l.b16 %v1238
  %v1383 = vunpack.c.h.b16 %v1238
  %v1384 = vunpack.c.l.b16 %v1239
  %v1385 = vunpack.c.h.b16 %v1239
  %v1386 = vunpack.c.l.b16 %v1240
  %v1387 = vunpack.c.h.b16 %v1240
  %v1388 = vunpack.c.l.b16 %v1241
  %v1389 = vunpack.c.h.b16 %v1241
  %v1390 = vunpack.c.l.b16 %v1242
  %v1391 = vunpack.c.h.b16 %v1242
  %v1392 = vunpack.c.l.b16 %v1243
  %v1393 = vunpack.c.h.b16 %v1243
  %v1394 = vunpack.c.l.b16 %v1244
  %v1395 = vunpack.c.h.b16 %v1244
  %v1396 = vunpack.c.l.b16 %v1245
  %v1397 = vunpack.c.h.b16 %v1245
  %v1398 = vunpack.c.l.b16 %v1246
  %v1399 = vunpack.c.h.b16 %v1246
  %v1400 = vunpack.c.l.b16 %v1247
  %v1401 = vunpack.c.h.b16 %v1247
  %v1402 = vunpack.c.l.b16 %v1248
  %v1403 = vunpack.c.h.b16 %v1248
  %v1404 = vunpack.c.l.b16 %v1249
  %v1405 = vunpack.c.h.b16 %v1249
  %v1406 = vunpack.c.l.b16 %v1250
  %v1407 = vunpack.c.h.b16 %v1250
  %v1408 = vunpack.c.l.b16 %v1251
  %v1409 = vunpack.c.h.b16 %v1251
  %v1410 = vunpack.c.l.b16 %v1252
  %v1411 = vunpack.c.h.b16 %v1252
  %v1412 = vunpack.c.l.b16 %v1253
  %v1413 = vunpack.c.h.b16 %v1253
  %v1414 = vunpack.c.l.b16 %v1254
  %v1415 = vunpack.c.h.b16 %v1254
  %v1416 = vunpack.c.l.b16 %v1255
  %v1417 = vunpack.c.h.b16 %v1255
  %v1418 = vunpack.c.l.b16 %v1256
  %v1419 = vunpack.c.h.b16 %v1256
  %v1420 = vunpack.c.l.b16 %v1257
  %v1421 = vunpack.c.h.b16 %v1257
  %v1422 = vunpack.c.l.b16 %v1258
  %v1423 = vunpack.c.h.b16 %v1258
  %v1424 = vunpack.c.l.b16 %v1259
  %v1425 = vunpack.c.h.b16 %v1259
  %v1426 = vunpack.c.l.b16 %v1260
  %v1427 = vunpack.c.h.b16 %v1260
  %v1428 = vunpack.c.l.b16 %v1261
  %v1429 = vunpack.c.h.b16 %v1261
  %v1430 = vunpack.c.l.b16 %v1262
  %v1431 = vunpack.c.h.b16 %v1262
  %v1432 = vunpack.c.l.b16 %v1263
  %v1433 = vunpack.c.h.b16 %v1263
  %v1434 = vunpack.c.l.b16 %v1264
  %v1435 = vunpack.c.h.b16 %v1264
  %v1436 = vunpack.c.l.b16 %v1265
  %v1437 = vunpack.c.h.b16 %v1265
  %v1438 = vunpack.c.l.b16 %v1266
  %v1439 = vunpack.c.h.b16 %v1266
  %v1440 = vunpack.c.l.b16 %v1267
  %v1441 = vunpack.c.h.b16 %v1267
  %v1442 = vunpack.c.l.b16 %v1268
  %v1443 = vunpack.c.h.b16 %v1268
  %v1444 = vunpack.c.l.b16 %v1269
  %v1445 = vunpack.c.h.b16 %v1269
  %v1446 = vunpack.c.l.b16 %v1270
  %v1447 = vunpack.c.h.b16 %v1270
  %v1448 = vunpack.c.l.b16 %v1271
  %v1449 = vunpack.c.h.b16 %v1271
  %v1450 = vunpack.c.l.b16 %v1272
  %v1451 = vunpack.c.h.b16 %v1272
  %v1452 = vunpack.c.l.b16 %v1273
  %v1453 = vunpack.c.h.b16 %v1273
  %v1454 = vunpack.c.l.b16 %v1274
  %v1455 = vunpack.c.h.b16 %v1274
  %v1456 = vunpack.c.l.b16 %v1275
  %v1457 = vunpack.c.h.b16 %v1275
  %v1458 = vunpack.c.l.b16 %v1276
  %v1459 = vunpack.c.h.b16 %v1276
  %v1460 = vunpack.c.l.b16 %v1277
  %v1461 = vunpack.c.h.b16 %v1277
  %v1462 = vunpack.c.l.b16 %v1278
  %v1463 = vunpack.c.h.b16 %v1278
  %v1464 = vunpack.c.l.b16 %v1279
  %v1465 = vunpack.c.h.b16 %v1279
  %v1466 = vunpack.c.l.b16 %v1280
  %v1467 = vunpack.c.h.b16 %v1280
  %v1468 = vunpack.c.l.b16 %v1281
  %v1469 = vunpack.c.h.b16 %v1281
  %v1470 = vunpack.c.l.b16 %v1282
  %v1471 = vunpack.c.h.b16 %v1282
  %v1472 = vunpack.c.l.b16 %v1283
  %v1473 = vunpack.c.h.b16 %v1283
  %v1474 = vunpack.c.l.b16 %v1284
  %v1475 = vunpack.c.h.b16 %v1284
  %v1476 = vunpack.c.l.b16 %v1285
  %v1477 = vunpack.c.h.b16 %v1285
  %v1478 = vpack.c.b16 %v1350, %v1350
  %v1479 = vpack.c.b16 %v1351, %v1351
  %v1480 = vpack.c.b16 %v1352, %v1352
  %v1481 = vpack.c.b16 %v1353, %v1353
  %v1482 = vpack.c.b16 %v1354, %v1354
  %v1483 = vpack.c.b16 %v1355, %v1355
  %v1484 = vpack.c.b16 %v1356, %v1356
  %v1485 = vpack.c.b16 %v1357, %v1357
  %v1486 = vpack.c.b16 %v1358, %v1358
  %v1487 = vpack.c.b16 %v1359, %v1359
  %v1488 = vpack.c.b16 %v1360, %v1360
  %v1489 = vpack.c.b16 %v1361, %v1361
  %v1490 = vpack.c.b16 %v1362, %v1362
  %v1491 = vpack.c.b16 %v1363, %v1363
  %v1492 = vpack.c.b16 %v1364, %v1364
  %v1493 = vpack.c.b16 %v1365, %v1365
  %v1494 = vpack.c.b16 %v1366, %v1366
  %v1495 = vpack.c.b16 %v1367, %v1367
  %v1496 = vpack.c.b16 %v1368, %v1368
  %v1497 = vpack.c.b16 %v1369, %v1369
  %v1498 = vpack.c.b16 %v1370, %v1370
  %v1499 = vpack.c.b16 %v1371, %v1371
  %v1500 = vpack.c.b16 %v1372, %v1372
  %v1501 = vpack.c.b16 %v1373, %v1373
  %v1502 = vpack.c.b16 %v1374, %v1374
  %v1503 = vpack.c.b16 %v1375, %v1375
  %v1504 = vpack.c.b16 %v1376, %v1376
  %v1505 = vpack.c.b16 %v1377, %v1377
  %v1506 = vpack.c.b16 %v1378, %v1378
  %v1507 = vpack.c.b16 %v1379, %v1379
  %v1508 = vpack.c.b16 %v1380, %v1380
  %v1509 = vpack.c.b16 %v1381, %v1381
  %v1510 = vpack.c.b16 %v1382, %v1382
  %v1511 = vpack.c.b16 %v1383, %v1383
  %v1512 = vpack.c.b16 %v1384, %v1384
  %v1513 = vpack.c.b16 %v1385, %v1385
  %v1514 = vpack.c.b16 %v1386, %v1386
  %v1515 = vpack.c.b16 %v1387, %v1387
  %v1516 = vpack.c.b16 %v1388, %v1388
  %v1517 = vpack.c.b16 %v1389, %v1389
  %v1518 = vpack.c.b16 %v1390, %v1390
  %v1519 = vpack.c.b16 %v1391, %v1391
  %v1520 = vpack.c.b16 %v1392, %v1392
  %v1521 = vpack.c.b16 %v1393, %v1393
  %v1522 = vpack.c.b16 %v1394, %v1394
  %v1523 = vpack.c.b16 %v1395, %v1395
  %v1524 = vpack.c.b16 %v1396, %v1396
  %v1525 = vpack.c.b16 %v1397, %v1397
  %v1526 = vpack.c.b16 %v1398, %v1398
  %v1527 = vpack.c.b16 %v1399, %v1399
  %v1528 = vpack.c.b16 %v1400, %v1400
  %v1529 = vpack.c.b16 %v1401, %v1401
  %v1530 = vpack.c.b16 %v1402, %v1402
  %v1531 = vpack.c.b16 %v1403, %v1403
  %v1532 = vpack.c.b16 %v1404, %v1404
  %v1533 = vpack.c.b16 %v1405, %v1405
  %v1534 = vpack.c.b16 %v1406, %v1406
  %v1535 = vpack.c.b16 %v1407, %v1407
  %v1536 = vpack.c.b16 %v1408, %v1408
  %v1537 = vpack.c.b16 %v1409, %v1409
  %v1538 = vpack.c.b16 %v1410, %v1410
  %v1539 = vpack.c.b16 %v1411, %v1411
  %v1540 = vpack.c.b16 %v1412, %v1412
  %v1541 = vpack.c.b16 %v1413, %v1413
  %v1542 = vpack.c.b16 %v1414, %v1414
  %v1543 = vpack.c.b16 %v1415, %v1415
  %v1544 = vpack.c.b16 %v1416, %v1416
  %v1545 = vpack.c.b16 %v1417, %v1417
  %v1546 = vpack.c.b16 %v1418, %v1418
  %v1547 = vpack.c.b16 %v1419, %v1419
  %v1548 = vpack.c.b16 %v1420, %v1420
  %v1549 = vpack.c.b16 %v1421, %v1421
  %v1550 = vpack.c.b16 %v1422, %v1422
  %v1551 = vpack.c.b16 %v1423, %v1423
  %v1552 = vpack.c.b16 %v1424, %v1424
  %v1553 = vpack.c.b16 %v1425, %v1425
  %v1554 = vpack.c.b16 %v1426, %v1426
  %v1555 = vpack.c.b16 %v1427, %v1427
  %v1556 = vpack.c.b16 %v1428, %v1428
  %v1557 = vpack.c.b16 %v1429, %v1429
  %v1558 = vpack.c.b16 %v1430, %v1430
  %v1559 = vpack.c.b16 %v1431, %v1431
  %v1560 = vpack.c.b16 %v1432, %v1432
  %v1561 = vpack.c.b16 %v1433, %v1433
  %v1562 = vpack.c.b16 %v1434, %v1434
  %v1563 = vpack.c.b16 %v1435, %v1435
  %v1564 = vpack.c.b16 %v1436, %v1436
  %v1565 = vpack.c.b16 %v1437, %v1437
  %v1566 = vpack.c.b16 %v1438, %v1438
  %v1567 = vpack.c.b16 %v1439, %v1439
  %v1568 = vpack.c.b16 %v1440, %v1440
  %v1569 = vpack.c.b16 %v1441, %v1441
  %v1570 = vpack.c.b16 %v1442, %v1442
  %v1571 = vpack.c.b16 %v1443, %v1443
  %v1572 = vpack.c.b16 %v1444, %v1444
  %v1573 = vpack.c.b16 %v1445, %v1445
  %v1574 = vpack.c.b16 %v1446, %v1446
  %v1575 = vpack.c.b16 %v1447, %v1447
  %v1576 = vpack.c.b16 %v1448, %v1448
  %v1577 = vpack.c.b16 %v1449, %v1449
  %v1578 = vpack.c.b16 %v1450, %v1450
  %v1579 = vpack.c.b16 %v1451, %v1451
  %v1580 = vpack.c.b16 %v1452, %v1452
  %v1581 = vpack.c.b16 %v1453, %v1453
  %v1582 = vpack.c.b16 %v1454, %v1454
  %v1583 = vpack.c.b16 %v1455, %v1455
  %v1584 = vpack.c.b16 %v1456, %v1456
  %v1585 = vpack.c.b16 %v1457, %v1457
  %v1586 = vpack.c.b16 %v1458, %v1458
  %v1587 = vpack.c.b16 %v1459, %v1459
  %v1588 = vpack.c.b16 %v1460, %v1460
  %v1589 = vpack.c.b16 %v1461, %v1461
  %v1590 = vpack.c.b16 %v1462, %v1462
  %v1591 = vpack.c.b16 %v1463, %v1463
  %v1592 = vpack.c.b16 %v1464, %v1464
  %v1593 = vpack.c.b16 %v1465, %v1465
  %v1594 = vpack.c.b16 %v1466, %v1466
  %v1595 = vpack.c.b16 %v1467, %v1467
  %v1596 = vpack.c.b16 %v1468, %v1468
  %v1597 = vpack.c.b16 %v1469, %v1469
  %v1598 = vpack.c.b16 %v1470, %v1470
  %v1599 = vpack.c.b16 %v1471, %v1471
  %v1600 = vpack.c.b16 %v1472, %v1472
  %v1601 = vpack.c.b16 %v1473, %v1473
  %v1602 = vpack.c.b16 %v1474, %v1474
  %v1603 = vpack.c.b16 %v1475, %v1475
  %v1604 = vpack.c.b16 %v1476, %v1476
  %v1605 = vpack.c.b16 %v1477, %v1477
  %vm1734 = vcmask 519168
  %1735 = vst.msk [vmem:[%s4] sm:$0xf] %vm1734, %v1478
  %1736 = vst.msk [vmem:[%s4 + $0x4] sm:$0xf] %vm1734, %v1479
  %1737 = vst.msk [vmem:[%s4 + $0x8] sm:$0xf] %vm1734, %v1480
  %1738 = vst.msk [vmem:[%s4 + $0xc] sm:$0xf] %vm1734, %v1481
  %1739 = vst.msk [vmem:[%s4 + $0x10] sm:$0xf] %vm1734, %v1482
  %1740 = vst.msk [vmem:[%s4 + $0x14] sm:$0xf] %vm1734, %v1483
  %1741 = vst.msk [vmem:[%s4 + $0x18] sm:$0xf] %vm1734, %v1484
  %1742 = vst.msk [vmem:[%s4 + $0x1c] sm:$0xf] %vm1734, %v1485
  %1743 = vst.msk [vmem:[%s4 + $0x20] sm:$0xf] %vm1734, %v1486
  %1744 = vst.msk [vmem:[%s4 + $0x24] sm:$0xf] %vm1734, %v1487
  %1745 = vst.msk [vmem:[%s4 + $0x28] sm:$0xf] %vm1734, %v1488
  %1746 = vst.msk [vmem:[%s4 + $0x2c] sm:$0xf] %vm1734, %v1489
  %1747 = vst.msk [vmem:[%s4 + $0x30] sm:$0xf] %vm1734, %v1490
  %1748 = vst.msk [vmem:[%s4 + $0x34] sm:$0xf] %vm1734, %v1491
  %1749 = vst.msk [vmem:[%s4 + $0x38] sm:$0xf] %vm1734, %v1492
  %1750 = vst.msk [vmem:[%s4 + $0x3c] sm:$0xf] %vm1734, %v1493
  %1751 = vst.msk [vmem:[%s4 + $0x40] sm:$0xf] %vm1734, %v1494
  %1752 = vst.msk [vmem:[%s4 + $0x44] sm:$0xf] %vm1734, %v1495
  %1753 = vst.msk [vmem:[%s4 + $0x48] sm:$0xf] %vm1734, %v1496
  %1754 = vst.msk [vmem:[%s4 + $0x4c] sm:$0xf] %vm1734, %v1497
  %1755 = vst.msk [vmem:[%s4 + $0x50] sm:$0xf] %vm1734, %v1498
  %1756 = vst.msk [vmem:[%s4 + $0x54] sm:$0xf] %vm1734, %v1499
  %1757 = vst.msk [vmem:[%s4 + $0x58] sm:$0xf] %vm1734, %v1500
  %1758 = vst.msk [vmem:[%s4 + $0x5c] sm:$0xf] %vm1734, %v1501
  %1759 = vst.msk [vmem:[%s4 + $0x60] sm:$0xf] %vm1734, %v1502
  %1760 = vst.msk [vmem:[%s4 + $0x64] sm:$0xf] %vm1734, %v1503
  %1761 = vst.msk [vmem:[%s4 + $0x68] sm:$0xf] %vm1734, %v1504
  %1762 = vst.msk [vmem:[%s4 + $0x6c] sm:$0xf] %vm1734, %v1505
  %1763 = vst.msk [vmem:[%s4 + $0x70] sm:$0xf] %vm1734, %v1506
  %1764 = vst.msk [vmem:[%s4 + $0x74] sm:$0xf] %vm1734, %v1507
  %1765 = vst.msk [vmem:[%s4 + $0x78] sm:$0xf] %vm1734, %v1508
  %1766 = vst.msk [vmem:[%s4 + $0x7c] sm:$0xf] %vm1734, %v1509
  %1767 = vst.msk [vmem:[%s4 + $0x80] sm:$0xf] %vm1734, %v1510
  %1768 = vst.msk [vmem:[%s4 + $0x84] sm:$0xf] %vm1734, %v1511
  %1769 = vst.msk [vmem:[%s4 + $0x88] sm:$0xf] %vm1734, %v1512
  %1770 = vst.msk [vmem:[%s4 + $0x8c] sm:$0xf] %vm1734, %v1513
  %1771 = vst.msk [vmem:[%s4 + $0x90] sm:$0xf] %vm1734, %v1514
  %1772 = vst.msk [vmem:[%s4 + $0x94] sm:$0xf] %vm1734, %v1515
  %1773 = vst.msk [vmem:[%s4 + $0x98] sm:$0xf] %vm1734, %v1516
  %1774 = vst.msk [vmem:[%s4 + $0x9c] sm:$0xf] %vm1734, %v1517
  %1775 = vst.msk [vmem:[%s4 + $0xa0] sm:$0xf] %vm1734, %v1518
  %1776 = vst.msk [vmem:[%s4 + $0xa4] sm:$0xf] %vm1734, %v1519
  %1777 = vst.msk [vmem:[%s4 + $0xa8] sm:$0xf] %vm1734, %v1520
  %1778 = vst.msk [vmem:[%s4 + $0xac] sm:$0xf] %vm1734, %v1521
  %1779 = vst.msk [vmem:[%s4 + $0xb0] sm:$0xf] %vm1734, %v1522
  %1780 = vst.msk [vmem:[%s4 + $0xb4] sm:$0xf] %vm1734, %v1523
  %1781 = vst.msk [vmem:[%s4 + $0xb8] sm:$0xf] %vm1734, %v1524
  %1782 = vst.msk [vmem:[%s4 + $0xbc] sm:$0xf] %vm1734, %v1525
  %1783 = vst.msk [vmem:[%s4 + $0xc0] sm:$0xf] %vm1734, %v1526
  %1784 = vst.msk [vmem:[%s4 + $0xc4] sm:$0xf] %vm1734, %v1527
  %1785 = vst.msk [vmem:[%s4 + $0xc8] sm:$0xf] %vm1734, %v1528
  %1786 = vst.msk [vmem:[%s4 + $0xcc] sm:$0xf] %vm1734, %v1529
  %1787 = vst.msk [vmem:[%s4 + $0xd0] sm:$0xf] %vm1734, %v1530
  %1788 = vst.msk [vmem:[%s4 + $0xd4] sm:$0xf] %vm1734, %v1531
  %1789 = vst.msk [vmem:[%s4 + $0xd8] sm:$0xf] %vm1734, %v1532
  %1790 = vst.msk [vmem:[%s4 + $0xdc] sm:$0xf] %vm1734, %v1533
  %1791 = vst.msk [vmem:[%s4 + $0xe0] sm:$0xf] %vm1734, %v1534
  %1792 = vst.msk [vmem:[%s4 + $0xe4] sm:$0xf] %vm1734, %v1535
  %1793 = vst.msk [vmem:[%s4 + $0xe8] sm:$0xf] %vm1734, %v1536
  %1794 = vst.msk [vmem:[%s4 + $0xec] sm:$0xf] %vm1734, %v1537
  %1795 = vst.msk [vmem:[%s4 + $0xf0] sm:$0xf] %vm1734, %v1538
  %1796 = vst.msk [vmem:[%s4 + $0xf4] sm:$0xf] %vm1734, %v1539
  %1797 = vst.msk [vmem:[%s4 + $0xf8] sm:$0xf] %vm1734, %v1540
  %1798 = vst.msk [vmem:[%s4 + $0xfc] sm:$0xf] %vm1734, %v1541
  %1799 = vst.msk [vmem:[%s4 + $0x100] sm:$0xf] %vm1734, %v1542
  %1800 = vst.msk [vmem:[%s4 + $0x104] sm:$0xf] %vm1734, %v1543
  %1801 = vst.msk [vmem:[%s4 + $0x108] sm:$0xf] %vm1734, %v1544
  %1802 = vst.msk [vmem:[%s4 + $0x10c] sm:$0xf] %vm1734, %v1545
  %1803 = vst.msk [vmem:[%s4 + $0x110] sm:$0xf] %vm1734, %v1546
  %1804 = vst.msk [vmem:[%s4 + $0x114] sm:$0xf] %vm1734, %v1547
  %1805 = vst.msk [vmem:[%s4 + $0x118] sm:$0xf] %vm1734, %v1548
  %1806 = vst.msk [vmem:[%s4 + $0x11c] sm:$0xf] %vm1734, %v1549
  %1807 = vst.msk [vmem:[%s4 + $0x120] sm:$0xf] %vm1734, %v1550
  %1808 = vst.msk [vmem:[%s4 + $0x124] sm:$0xf] %vm1734, %v1551
  %1809 = vst.msk [vmem:[%s4 + $0x128] sm:$0xf] %vm1734, %v1552
  %1810 = vst.msk [vmem:[%s4 + $0x12c] sm:$0xf] %vm1734, %v1553
  %1811 = vst.msk [vmem:[%s4 + $0x130] sm:$0xf] %vm1734, %v1554
  %1812 = vst.msk [vmem:[%s4 + $0x134] sm:$0xf] %vm1734, %v1555
  %1813 = vst.msk [vmem:[%s4 + $0x138] sm:$0xf] %vm1734, %v1556
  %1814 = vst.msk [vmem:[%s4 + $0x13c] sm:$0xf] %vm1734, %v1557
  %1815 = vst.msk [vmem:[%s4 + $0x140] sm:$0xf] %vm1734, %v1558
  %1816 = vst.msk [vmem:[%s4 + $0x144] sm:$0xf] %vm1734, %v1559
  %1817 = vst.msk [vmem:[%s4 + $0x148] sm:$0xf] %vm1734, %v1560
  %1818 = vst.msk [vmem:[%s4 + $0x14c] sm:$0xf] %vm1734, %v1561
  %1819 = vst.msk [vmem:[%s4 + $0x150] sm:$0xf] %vm1734, %v1562
  %1820 = vst.msk [vmem:[%s4 + $0x154] sm:$0xf] %vm1734, %v1563
  %1821 = vst.msk [vmem:[%s4 + $0x158] sm:$0xf] %vm1734, %v1564
  %1822 = vst.msk [vmem:[%s4 + $0x15c] sm:$0xf] %vm1734, %v1565
  %1823 = vst.msk [vmem:[%s4 + $0x160] sm:$0xf] %vm1734, %v1566
  %1824 = vst.msk [vmem:[%s4 + $0x164] sm:$0xf] %vm1734, %v1567
  %1825 = vst.msk [vmem:[%s4 + $0x168] sm:$0xf] %vm1734, %v1568
  %1826 = vst.msk [vmem:[%s4 + $0x16c] sm:$0xf] %vm1734, %v1569
  %1827 = vst.msk [vmem:[%s4 + $0x170] sm:$0xf] %vm1734, %v1570
  %1828 = vst.msk [vmem:[%s4 + $0x174] sm:$0xf] %vm1734, %v1571
  %1829 = vst.msk [vmem:[%s4 + $0x178] sm:$0xf] %vm1734, %v1572
  %1830 = vst.msk [vmem:[%s4 + $0x17c] sm:$0xf] %vm1734, %v1573
  %1831 = vst.msk [vmem:[%s4 + $0x180] sm:$0xf] %vm1734, %v1574
  %1832 = vst.msk [vmem:[%s4 + $0x184] sm:$0xf] %vm1734, %v1575
  %1833 = vst.msk [vmem:[%s4 + $0x188] sm:$0xf] %vm1734, %v1576
  %1834 = vst.msk [vmem:[%s4 + $0x18c] sm:$0xf] %vm1734, %v1577
  %1835 = vst.msk [vmem:[%s4 + $0x190] sm:$0xf] %vm1734, %v1578
  %1836 = vst.msk [vmem:[%s4 + $0x194] sm:$0xf] %vm1734, %v1579
  %1837 = vst.msk [vmem:[%s4 + $0x198] sm:$0xf] %vm1734, %v1580
  %1838 = vst.msk [vmem:[%s4 + $0x19c] sm:$0xf] %vm1734, %v1581
  %1839 = vst.msk [vmem:[%s4 + $0x1a0] sm:$0xf] %vm1734, %v1582
  %1840 = vst.msk [vmem:[%s4 + $0x1a4] sm:$0xf] %vm1734, %v1583
  %1841 = vst.msk [vmem:[%s4 + $0x1a8] sm:$0xf] %vm1734, %v1584
  %1842 = vst.msk [vmem:[%s4 + $0x1ac] sm:$0xf] %vm1734, %v1585
  %1843 = vst.msk [vmem:[%s4 + $0x1b0] sm:$0xf] %vm1734, %v1586
  %1844 = vst.msk [vmem:[%s4 + $0x1b4] sm:$0xf] %vm1734, %v1587
  %1845 = vst.msk [vmem:[%s4 + $0x1b8] sm:$0xf] %vm1734, %v1588
  %1846 = vst.msk [vmem:[%s4 + $0x1bc] sm:$0xf] %vm1734, %v1589
  %1847 = vst.msk [vmem:[%s4 + $0x1c0] sm:$0xf] %vm1734, %v1590
  %1848 = vst.msk [vmem:[%s4 + $0x1c4] sm:$0xf] %vm1734, %v1591
  %1849 = vst.msk [vmem:[%s4 + $0x1c8] sm:$0xf] %vm1734, %v1592
  %1850 = vst.msk [vmem:[%s4 + $0x1cc] sm:$0xf] %vm1734, %v1593
  %1851 = vst.msk [vmem:[%s4 + $0x1d0] sm:$0xf] %vm1734, %v1594
  %1852 = vst.msk [vmem:[%s4 + $0x1d4] sm:$0xf] %vm1734, %v1595
  %1853 = vst.msk [vmem:[%s4 + $0x1d8] sm:$0xf] %vm1734, %v1596
  %1854 = vst.msk [vmem:[%s4 + $0x1dc] sm:$0xf] %vm1734, %v1597
  %1855 = vst.msk [vmem:[%s4 + $0x1e0] sm:$0xf] %vm1734, %v1598
  %1856 = vst.msk [vmem:[%s4 + $0x1e4] sm:$0xf] %vm1734, %v1599
  %1857 = vst.msk [vmem:[%s4 + $0x1e8] sm:$0xf] %vm1734, %v1600
  %1858 = vst.msk [vmem:[%s4 + $0x1ec] sm:$0xf] %vm1734, %v1601
  %1859 = vst.msk [vmem:[%s4 + $0x1f0] sm:$0xf] %vm1734, %v1602
  %1860 = vst.msk [vmem:[%s4 + $0x1f4] sm:$0xf] %vm1734, %v1603
  %1861 = vst.msk [vmem:[%s4 + $0x1f8] sm:$0xf] %vm1734, %v1604
  %1862 = vst.msk [vmem:[%s4 + $0x1fc] sm:$0xf] %vm1734, %v1605
  %vm1863 = vcmask 523264
  %v1864 = vsel %vm1863, %v712, 0.0
  %v1865 = vsel %vm1863, %v715, 0.0
  %v1866 = vadd.f32 %v1864, %v1865
  %v1867 = vsel %vm1863, %v720, 0.0
  %v1868 = vadd.f32 %v1866, %v1867
  %v1869 = vsel %vm1863, %v723, 0.0
  %v1870 = vadd.f32 %v1868, %v1869
  %v1871 = vsel %vm1863, %v728, 0.0
  %v1872 = vadd.f32 %v1870, %v1871
  %v1873 = vsel %vm1863, %v731, 0.0
  %v1874 = vadd.f32 %v1872, %v1873
  %v1875 = vsel %vm1863, %v736, 0.0
  %v1876 = vadd.f32 %v1874, %v1875
  %v1877 = vsel %vm1863, %v739, 0.0
  %v1878 = vadd.f32 %v1876, %v1877
  %v1879 = vsel %vm1863, %v744, 0.0
  %v1880 = vadd.f32 %v1878, %v1879
  %v1881 = vsel %vm1863, %v747, 0.0
  %v1882 = vadd.f32 %v1880, %v1881
  %v1883 = vsel %vm1863, %v752, 0.0
  %v1884 = vadd.f32 %v1882, %v1883
  %v1885 = vsel %vm1863, %v755, 0.0
  %v1886 = vadd.f32 %v1884, %v1885
  %v1887 = vsel %vm1863, %v760, 0.0
  %v1888 = vadd.f32 %v1886, %v1887
  %v1889 = vsel %vm1863, %v763, 0.0
  %v1890 = vadd.f32 %v1888, %v1889
  %v1891 = vsel %vm1863, %v768, 0.0
  %v1892 = vadd.f32 %v1890, %v1891
  %v1893 = vsel %vm1863, %v771, 0.0
  %v1894 = vadd.f32 %v1892, %v1893
  %v1895 = vsel %vm1863, %v776, 0.0
  %v1896 = vadd.f32 %v1894, %v1895
  %v1897 = vsel %vm1863, %v779, 0.0
  %v1898 = vadd.f32 %v1896, %v1897
  %v1899 = vsel %vm1863, %v784, 0.0
  %v1900 = vadd.f32 %v1898, %v1899
  %v1901 = vsel %vm1863, %v787, 0.0
  %v1902 = vadd.f32 %v1900, %v1901
  %v1903 = vsel %vm1863, %v792, 0.0
  %v1904 = vadd.f32 %v1902, %v1903
  %v1905 = vsel %vm1863, %v795, 0.0
  %v1906 = vadd.f32 %v1904, %v1905
  %v1907 = vsel %vm1863, %v800, 0.0
  %v1908 = vadd.f32 %v1906, %v1907
  %v1909 = vsel %vm1863, %v803, 0.0
  %v1910 = vadd.f32 %v1908, %v1909
  %v1911 = vsel %vm1863, %v808, 0.0
  %v1912 = vadd.f32 %v1910, %v1911
  %v1913 = vsel %vm1863, %v811, 0.0
  %v1914 = vadd.f32 %v1912, %v1913
  %v1915 = vsel %vm1863, %v816, 0.0
  %v1916 = vadd.f32 %v1914, %v1915
  %v1917 = vsel %vm1863, %v819, 0.0
  %v1918 = vadd.f32 %v1916, %v1917
  %v1919 = vsel %vm1863, %v824, 0.0
  %v1920 = vadd.f32 %v1918, %v1919
  %v1921 = vsel %vm1863, %v827, 0.0
  %v1922 = vadd.f32 %v1920, %v1921
  %v1923 = vsel %vm1863, %v832, 0.0
  %v1924 = vadd.f32 %v1922, %v1923
  %v1925 = vsel %vm1863, %v835, 0.0
  %v1926 = vadd.f32 %v1924, %v1925
  %v1927 = vsel %vm1863, %v840, 0.0
  %v1928 = vadd.f32 %v1926, %v1927
  %v1929 = vsel %vm1863, %v843, 0.0
  %v1930 = vadd.f32 %v1928, %v1929
  %v1931 = vsel %vm1863, %v848, 0.0
  %v1932 = vadd.f32 %v1930, %v1931
  %v1933 = vsel %vm1863, %v851, 0.0
  %v1934 = vadd.f32 %v1932, %v1933
  %v1935 = vsel %vm1863, %v856, 0.0
  %v1936 = vadd.f32 %v1934, %v1935
  %v1937 = vsel %vm1863, %v859, 0.0
  %v1938 = vadd.f32 %v1936, %v1937
  %v1939 = vsel %vm1863, %v864, 0.0
  %v1940 = vadd.f32 %v1938, %v1939
  %v1941 = vsel %vm1863, %v867, 0.0
  %v1942 = vadd.f32 %v1940, %v1941
  %v1943 = vsel %vm1863, %v872, 0.0
  %v1944 = vadd.f32 %v1942, %v1943
  %v1945 = vsel %vm1863, %v875, 0.0
  %v1946 = vadd.f32 %v1944, %v1945
  %v1947 = vsel %vm1863, %v880, 0.0
  %v1948 = vadd.f32 %v1946, %v1947
  %v1949 = vsel %vm1863, %v883, 0.0
  %v1950 = vadd.f32 %v1948, %v1949
  %v1951 = vsel %vm1863, %v888, 0.0
  %v1952 = vadd.f32 %v1950, %v1951
  %v1953 = vsel %vm1863, %v891, 0.0
  %v1954 = vadd.f32 %v1952, %v1953
  %v1955 = vsel %vm1863, %v896, 0.0
  %v1956 = vadd.f32 %v1954, %v1955
  %v1957 = vsel %vm1863, %v899, 0.0
  %v1958 = vadd.f32 %v1956, %v1957
  %v1959 = vsel %vm1863, %v904, 0.0
  %v1960 = vadd.f32 %v1958, %v1959
  %v1961 = vsel %vm1863, %v907, 0.0
  %v1962 = vadd.f32 %v1960, %v1961
  %v1963 = vsel %vm1863, %v912, 0.0
  %v1964 = vadd.f32 %v1962, %v1963
  %v1965 = vsel %vm1863, %v915, 0.0
  %v1966 = vadd.f32 %v1964, %v1965
  %v1967 = vsel %vm1863, %v920, 0.0
  %v1968 = vadd.f32 %v1966, %v1967
  %v1969 = vsel %vm1863, %v923, 0.0
  %v1970 = vadd.f32 %v1968, %v1969
  %v1971 = vsel %vm1863, %v928, 0.0
  %v1972 = vadd.f32 %v1970, %v1971
  %v1973 = vsel %vm1863, %v931, 0.0
  %v1974 = vadd.f32 %v1972, %v1973
  %v1975 = vsel %vm1863, %v936, 0.0
  %v1976 = vadd.f32 %v1974, %v1975
  %v1977 = vsel %vm1863, %v939, 0.0
  %v1978 = vadd.f32 %v1976, %v1977
  %v1979 = vsel %vm1863, %v944, 0.0
  %v1980 = vadd.f32 %v1978, %v1979
  %v1981 = vsel %vm1863, %v947, 0.0
  %v1982 = vadd.f32 %v1980, %v1981
  %v1983 = vsel %vm1863, %v952, 0.0
  %v1984 = vadd.f32 %v1982, %v1983
  %v1985 = vsel %vm1863, %v955, 0.0
  %v1986 = vadd.f32 %v1984, %v1985
  %v1987 = vsel %vm1863, %v960, 0.0
  %v1988 = vadd.f32 %v1986, %v1987
  %v1989 = vsel %vm1863, %v963, 0.0
  %v1990 = vadd.f32 %v1988, %v1989
  %v1991 = vsel %vm1863, %v968, 0.0
  %v1992 = vadd.f32 %v1990, %v1991
  %v1993 = vsel %vm1863, %v971, 0.0
  %v1994 = vadd.f32 %v1992, %v1993
  %v1995 = vsel %vm1863, %v976, 0.0
  %v1996 = vadd.f32 %v1994, %v1995
  %v1997 = vsel %vm1863, %v979, 0.0
  %v1998 = vadd.f32 %v1996, %v1997
  %v1999 = vsel %vm1863, %v984, 0.0
  %v2000 = vadd.f32 %v1998, %v1999
  %v2001 = vsel %vm1863, %v987, 0.0
  %v2002 = vadd.f32 %v2000, %v2001
  %v2003 = vsel %vm1863, %v992, 0.0
  %v2004 = vadd.f32 %v2002, %v2003
  %v2005 = vsel %vm1863, %v995, 0.0
  %v2006 = vadd.f32 %v2004, %v2005
  %v2007 = vsel %vm1863, %v1000, 0.0
  %v2008 = vadd.f32 %v2006, %v2007
  %v2009 = vsel %vm1863, %v1003, 0.0
  %v2010 = vadd.f32 %v2008, %v2009
  %v2011 = vsel %vm1863, %v1008, 0.0
  %v2012 = vadd.f32 %v2010, %v2011
  %v2013 = vsel %vm1863, %v1011, 0.0
  %v2014 = vadd.f32 %v2012, %v2013
  %v2015 = vsel %vm1863, %v1016, 0.0
  %v2016 = vadd.f32 %v2014, %v2015
  %v2017 = vsel %vm1863, %v1019, 0.0
  %v2018 = vadd.f32 %v2016, %v2017
  %v2019 = vsel %vm1863, %v1024, 0.0
  %v2020 = vadd.f32 %v2018, %v2019
  %v2021 = vsel %vm1863, %v1027, 0.0
  %v2022 = vadd.f32 %v2020, %v2021
  %v2023 = vsel %vm1863, %v1032, 0.0
  %v2024 = vadd.f32 %v2022, %v2023
  %v2025 = vsel %vm1863, %v1035, 0.0
  %v2026 = vadd.f32 %v2024, %v2025
  %v2027 = vsel %vm1863, %v1040, 0.0
  %v2028 = vadd.f32 %v2026, %v2027
  %v2029 = vsel %vm1863, %v1043, 0.0
  %v2030 = vadd.f32 %v2028, %v2029
  %v2031 = vsel %vm1863, %v1048, 0.0
  %v2032 = vadd.f32 %v2030, %v2031
  %v2033 = vsel %vm1863, %v1051, 0.0
  %v2034 = vadd.f32 %v2032, %v2033
  %v2035 = vsel %vm1863, %v1056, 0.0
  %v2036 = vadd.f32 %v2034, %v2035
  %v2037 = vsel %vm1863, %v1059, 0.0
  %v2038 = vadd.f32 %v2036, %v2037
  %v2039 = vsel %vm1863, %v1064, 0.0
  %v2040 = vadd.f32 %v2038, %v2039
  %v2041 = vsel %vm1863, %v1067, 0.0
  %v2042 = vadd.f32 %v2040, %v2041
  %v2043 = vsel %vm1863, %v1072, 0.0
  %v2044 = vadd.f32 %v2042, %v2043
  %v2045 = vsel %vm1863, %v1075, 0.0
  %v2046 = vadd.f32 %v2044, %v2045
  %v2047 = vsel %vm1863, %v1080, 0.0
  %v2048 = vadd.f32 %v2046, %v2047
  %v2049 = vsel %vm1863, %v1083, 0.0
  %v2050 = vadd.f32 %v2048, %v2049
  %v2051 = vsel %vm1863, %v1088, 0.0
  %v2052 = vadd.f32 %v2050, %v2051
  %v2053 = vsel %vm1863, %v1091, 0.0
  %v2054 = vadd.f32 %v2052, %v2053
  %v2055 = vsel %vm1863, %v1096, 0.0
  %v2056 = vadd.f32 %v2054, %v2055
  %v2057 = vsel %vm1863, %v1099, 0.0
  %v2058 = vadd.f32 %v2056, %v2057
  %v2059 = vsel %vm1863, %v1104, 0.0
  %v2060 = vadd.f32 %v2058, %v2059
  %v2061 = vsel %vm1863, %v1107, 0.0
  %v2062 = vadd.f32 %v2060, %v2061
  %v2063 = vsel %vm1863, %v1112, 0.0
  %v2064 = vadd.f32 %v2062, %v2063
  %v2065 = vsel %vm1863, %v1115, 0.0
  %v2066 = vadd.f32 %v2064, %v2065
  %v2067 = vsel %vm1863, %v1120, 0.0
  %v2068 = vadd.f32 %v2066, %v2067
  %v2069 = vsel %vm1863, %v1123, 0.0
  %v2070 = vadd.f32 %v2068, %v2069
  %v2071 = vsel %vm1863, %v1128, 0.0
  %v2072 = vadd.f32 %v2070, %v2071
  %v2073 = vsel %vm1863, %v1131, 0.0
  %v2074 = vadd.f32 %v2072, %v2073
  %v2075 = vsel %vm1863, %v1136, 0.0
  %v2076 = vadd.f32 %v2074, %v2075
  %v2077 = vsel %vm1863, %v1139, 0.0
  %v2078 = vadd.f32 %v2076, %v2077
  %v2079 = vsel %vm1863, %v1144, 0.0
  %v2080 = vadd.f32 %v2078, %v2079
  %v2081 = vsel %vm1863, %v1147, 0.0
  %v2082 = vadd.f32 %v2080, %v2081
  %v2083 = vsel %vm1863, %v1152, 0.0
  %v2084 = vadd.f32 %v2082, %v2083
  %v2085 = vsel %vm1863, %v1155, 0.0
  %v2086 = vadd.f32 %v2084, %v2085
  %v2087 = vsel %vm1863, %v1160, 0.0
  %v2088 = vadd.f32 %v2086, %v2087
  %v2089 = vsel %vm1863, %v1163, 0.0
  %v2090 = vadd.f32 %v2088, %v2089
  %v2091 = vsel %vm1863, %v1168, 0.0
  %v2092 = vadd.f32 %v2090, %v2091
  %v2093 = vsel %vm1863, %v1171, 0.0
  %v2094 = vadd.f32 %v2092, %v2093
  %v2095 = vsel %vm1863, %v1176, 0.0
  %v2096 = vadd.f32 %v2094, %v2095
  %v2097 = vsel %vm1863, %v1179, 0.0
  %v2098 = vadd.f32 %v2096, %v2097
  %v2099 = vsel %vm1863, %v1184, 0.0
  %v2100 = vadd.f32 %v2098, %v2099
  %v2101 = vsel %vm1863, %v1187, 0.0
  %v2102 = vadd.f32 %v2100, %v2101
  %v2103 = vsel %vm1863, %v1192, 0.0
  %v2104 = vadd.f32 %v2102, %v2103
  %v2105 = vsel %vm1863, %v1195, 0.0
  %v2106 = vadd.f32 %v2104, %v2105
  %v2107 = vsel %vm1863, %v1200, 0.0
  %v2108 = vadd.f32 %v2106, %v2107
  %v2109 = vsel %vm1863, %v1203, 0.0
  %v2110 = vadd.f32 %v2108, %v2109
  %v2111 = vsel %vm1863, %v1208, 0.0
  %v2112 = vadd.f32 %v2110, %v2111
  %v2113 = vsel %vm1863, %v1211, 0.0
  %v2114 = vadd.f32 %v2112, %v2113
  %v2115 = vsel %vm1863, %v1216, 0.0
  %v2116 = vadd.f32 %v2114, %v2115
  %v2117 = vsel %vm1863, %v1219, 0.0
  %v2118 = vadd.f32 %v2116, %v2117
  %v2119 = vrot.slane %v2118, 4
  %v2120 = vadd.f32 %v2118, %v2119
  %v2121 = vrot.slane %v2120, 2
  %v2122 = vadd.f32 %v2120, %v2121
  %v2123 = vrot.slane %v2122, 1
  %v2124 = vadd.f32 %v2122, %v2123
  %v2125 = vmul.f32 %v712, %v712
  %v2126 = vmul.f32 %v715, %v715
  %v2127 = vmul.f32 %v720, %v720
  %v2128 = vmul.f32 %v723, %v723
  %v2129 = vmul.f32 %v728, %v728
  %v2130 = vmul.f32 %v731, %v731
  %v2131 = vmul.f32 %v736, %v736
  %v2132 = vmul.f32 %v739, %v739
  %v2133 = vmul.f32 %v744, %v744
  %v2134 = vmul.f32 %v747, %v747
  %v2135 = vmul.f32 %v752, %v752
  %v2136 = vmul.f32 %v755, %v755
  %v2137 = vmul.f32 %v760, %v760
  %v2138 = vmul.f32 %v763, %v763
  %v2139 = vmul.f32 %v768, %v768
  %v2140 = vmul.f32 %v771, %v771
  %v2141 = vmul.f32 %v776, %v776
  %v2142 = vmul.f32 %v779, %v779
  %v2143 = vmul.f32 %v784, %v784
  %v2144 = vmul.f32 %v787, %v787
  %v2145 = vmul.f32 %v792, %v792
  %v2146 = vmul.f32 %v795, %v795
  %v2147 = vmul.f32 %v800, %v800
  %v2148 = vmul.f32 %v803, %v803
  %v2149 = vmul.f32 %v808, %v808
  %v2150 = vmul.f32 %v811, %v811
  %v2151 = vmul.f32 %v816, %v816
  %v2152 = vmul.f32 %v819, %v819
  %v2153 = vmul.f32 %v824, %v824
  %v2154 = vmul.f32 %v827, %v827
  %v2155 = vmul.f32 %v832, %v832
  %v2156 = vmul.f32 %v835, %v835
  %v2157 = vmul.f32 %v840, %v840
  %v2158 = vmul.f32 %v843, %v843
  %v2159 = vmul.f32 %v848, %v848
  %v2160 = vmul.f32 %v851, %v851
  %v2161 = vmul.f32 %v856, %v856
  %v2162 = vmul.f32 %v859, %v859
  %v2163 = vmul.f32 %v864, %v864
  %v2164 = vmul.f32 %v867, %v867
  %v2165 = vmul.f32 %v872, %v872
  %v2166 = vmul.f32 %v875, %v875
  %v2167 = vmul.f32 %v880, %v880
  %v2168 = vmul.f32 %v883, %v883
  %v2169 = vmul.f32 %v888, %v888
  %v2170 = vmul.f32 %v891, %v891
  %v2171 = vmul.f32 %v896, %v896
  %v2172 = vmul.f32 %v899, %v899
  %v2173 = vmul.f32 %v904, %v904
  %v2174 = vmul.f32 %v907, %v907
  %v2175 = vmul.f32 %v912, %v912
  %v2176 = vmul.f32 %v915, %v915
  %v2177 = vmul.f32 %v920, %v920
  %v2178 = vmul.f32 %v923, %v923
  %v2179 = vmul.f32 %v928, %v928
  %v2180 = vmul.f32 %v931, %v931
  %v2181 = vmul.f32 %v936, %v936
  %v2182 = vmul.f32 %v939, %v939
  %v2183 = vmul.f32 %v944, %v944
  %v2184 = vmul.f32 %v947, %v947
  %v2185 = vmul.f32 %v952, %v952
  %v2186 = vmul.f32 %v955, %v955
  %v2187 = vmul.f32 %v960, %v960
  %v2188 = vmul.f32 %v963, %v963
  %v2189 = vmul.f32 %v968, %v968
  %v2190 = vmul.f32 %v971, %v971
  %v2191 = vmul.f32 %v976, %v976
  %v2192 = vmul.f32 %v979, %v979
  %v2193 = vmul.f32 %v984, %v984
  %v2194 = vmul.f32 %v987, %v987
  %v2195 = vmul.f32 %v992, %v992
  %v2196 = vmul.f32 %v995, %v995
  %v2197 = vmul.f32 %v1000, %v1000
  %v2198 = vmul.f32 %v1003, %v1003
  %v2199 = vmul.f32 %v1008, %v1008
  %v2200 = vmul.f32 %v1011, %v1011
  %v2201 = vmul.f32 %v1016, %v1016
  %v2202 = vmul.f32 %v1019, %v1019
  %v2203 = vmul.f32 %v1024, %v1024
  %v2204 = vmul.f32 %v1027, %v1027
  %v2205 = vmul.f32 %v1032, %v1032
  %v2206 = vmul.f32 %v1035, %v1035
  %v2207 = vmul.f32 %v1040, %v1040
  %v2208 = vmul.f32 %v1043, %v1043
  %v2209 = vmul.f32 %v1048, %v1048
  %v2210 = vmul.f32 %v1051, %v1051
  %v2211 = vmul.f32 %v1056, %v1056
  %v2212 = vmul.f32 %v1059, %v1059
  %v2213 = vmul.f32 %v1064, %v1064
  %v2214 = vmul.f32 %v1067, %v1067
  %v2215 = vmul.f32 %v1072, %v1072
  %v2216 = vmul.f32 %v1075, %v1075
  %v2217 = vmul.f32 %v1080, %v1080
  %v2218 = vmul.f32 %v1083, %v1083
  %v2219 = vmul.f32 %v1088, %v1088
  %v2220 = vmul.f32 %v1091, %v1091
  %v2221 = vmul.f32 %v1096, %v1096
  %v2222 = vmul.f32 %v1099, %v1099
  %v2223 = vmul.f32 %v1104, %v1104
  %v2224 = vmul.f32 %v1107, %v1107
  %v2225 = vmul.f32 %v1112, %v1112
  %v2226 = vmul.f32 %v1115, %v1115
  %v2227 = vmul.f32 %v1120, %v1120
  %v2228 = vmul.f32 %v1123, %v1123
  %v2229 = vmul.f32 %v1128, %v1128
  %v2230 = vmul.f32 %v1131, %v1131
  %v2231 = vmul.f32 %v1136, %v1136
  %v2232 = vmul.f32 %v1139, %v1139
  %v2233 = vmul.f32 %v1144, %v1144
  %v2234 = vmul.f32 %v1147, %v1147
  %v2235 = vmul.f32 %v1152, %v1152
  %v2236 = vmul.f32 %v1155, %v1155
  %v2237 = vmul.f32 %v1160, %v1160
  %v2238 = vmul.f32 %v1163, %v1163
  %v2239 = vmul.f32 %v1168, %v1168
  %v2240 = vmul.f32 %v1171, %v1171
  %v2241 = vmul.f32 %v1176, %v1176
  %v2242 = vmul.f32 %v1179, %v1179
  %v2243 = vmul.f32 %v1184, %v1184
  %v2244 = vmul.f32 %v1187, %v1187
  %v2245 = vmul.f32 %v1192, %v1192
  %v2246 = vmul.f32 %v1195, %v1195
  %v2247 = vmul.f32 %v1200, %v1200
  %v2248 = vmul.f32 %v1203, %v1203
  %v2249 = vmul.f32 %v1208, %v1208
  %v2250 = vmul.f32 %v1211, %v1211
  %v2251 = vmul.f32 %v1216, %v1216
  %v2252 = vmul.f32 %v1219, %v1219
  %v2253 = vsel %vm1863, %v2125, 0.0
  %v2254 = vsel %vm1863, %v2126, 0.0
  %v2255 = vadd.f32 %v2253, %v2254
  %v2256 = vsel %vm1863, %v2127, 0.0
  %v2257 = vadd.f32 %v2255, %v2256
  %v2258 = vsel %vm1863, %v2128, 0.0
  %v2259 = vadd.f32 %v2257, %v2258
  %v2260 = vsel %vm1863, %v2129, 0.0
  %v2261 = vadd.f32 %v2259, %v2260
  %v2262 = vsel %vm1863, %v2130, 0.0
  %v2263 = vadd.f32 %v2261, %v2262
  %v2264 = vsel %vm1863, %v2131, 0.0
  %v2265 = vadd.f32 %v2263, %v2264
  %v2266 = vsel %vm1863, %v2132, 0.0
  %v2267 = vadd.f32 %v2265, %v2266
  %v2268 = vsel %vm1863, %v2133, 0.0
  %v2269 = vadd.f32 %v2267, %v2268
  %v2270 = vsel %vm1863, %v2134, 0.0
  %v2271 = vadd.f32 %v2269, %v2270
  %v2272 = vsel %vm1863, %v2135, 0.0
  %v2273 = vadd.f32 %v2271, %v2272
  %v2274 = vsel %vm1863, %v2136, 0.0
  %v2275 = vadd.f32 %v2273, %v2274
  %v2276 = vsel %vm1863, %v2137, 0.0
  %v2277 = vadd.f32 %v2275, %v2276
  %v2278 = vsel %vm1863, %v2138, 0.0
  %v2279 = vadd.f32 %v2277, %v2278
  %v2280 = vsel %vm1863, %v2139, 0.0
  %v2281 = vadd.f32 %v2279, %v2280
  %v2282 = vsel %vm1863, %v2140, 0.0
  %v2283 = vadd.f32 %v2281, %v2282
  %v2284 = vsel %vm1863, %v2141, 0.0
  %v2285 = vadd.f32 %v2283, %v2284
  %v2286 = vsel %vm1863, %v2142, 0.0
  %v2287 = vadd.f32 %v2285, %v2286
  %v2288 = vsel %vm1863, %v2143, 0.0
  %v2289 = vadd.f32 %v2287, %v2288
  %v2290 = vsel %vm1863, %v2144, 0.0
  %v2291 = vadd.f32 %v2289, %v2290
  %v2292 = vsel %vm1863, %v2145, 0.0
  %v2293 = vadd.f32 %v2291, %v2292
  %v2294 = vsel %vm1863, %v2146, 0.0
  %v2295 = vadd.f32 %v2293, %v2294
  %v2296 = vsel %vm1863, %v2147, 0.0
  %v2297 = vadd.f32 %v2295, %v2296
  %v2298 = vsel %vm1863, %v2148, 0.0
  %v2299 = vadd.f32 %v2297, %v2298
  %v2300 = vsel %vm1863, %v2149, 0.0
  %v2301 = vadd.f32 %v2299, %v2300
  %v2302 = vsel %vm1863, %v2150, 0.0
  %v2303 = vadd.f32 %v2301, %v2302
  %v2304 = vsel %vm1863, %v2151, 0.0
  %v2305 = vadd.f32 %v2303, %v2304
  %v2306 = vsel %vm1863, %v2152, 0.0
  %v2307 = vadd.f32 %v2305, %v2306
  %v2308 = vsel %vm1863, %v2153, 0.0
  %v2309 = vadd.f32 %v2307, %v2308
  %v2310 = vsel %vm1863, %v2154, 0.0
  %v2311 = vadd.f32 %v2309, %v2310
  %v2312 = vsel %vm1863, %v2155, 0.0
  %v2313 = vadd.f32 %v2311, %v2312
  %v2314 = vsel %vm1863, %v2156, 0.0
  %v2315 = vadd.f32 %v2313, %v2314
  %v2316 = vsel %vm1863, %v2157, 0.0
  %v2317 = vadd.f32 %v2315, %v2316
  %v2318 = vsel %vm1863, %v2158, 0.0
  %v2319 = vadd.f32 %v2317, %v2318
  %v2320 = vsel %vm1863, %v2159, 0.0
  %v2321 = vadd.f32 %v2319, %v2320
  %v2322 = vsel %vm1863, %v2160, 0.0
  %v2323 = vadd.f32 %v2321, %v2322
  %v2324 = vsel %vm1863, %v2161, 0.0
  %v2325 = vadd.f32 %v2323, %v2324
  %v2326 = vsel %vm1863, %v2162, 0.0
  %v2327 = vadd.f32 %v2325, %v2326
  %v2328 = vsel %vm1863, %v2163, 0.0
  %v2329 = vadd.f32 %v2327, %v2328
  %v2330 = vsel %vm1863, %v2164, 0.0
  %v2331 = vadd.f32 %v2329, %v2330
  %v2332 = vsel %vm1863, %v2165, 0.0
  %v2333 = vadd.f32 %v2331, %v2332
  %v2334 = vsel %vm1863, %v2166, 0.0
  %v2335 = vadd.f32 %v2333, %v2334
  %v2336 = vsel %vm1863, %v2167, 0.0
  %v2337 = vadd.f32 %v2335, %v2336
  %v2338 = vsel %vm1863, %v2168, 0.0
  %v2339 = vadd.f32 %v2337, %v2338
  %v2340 = vsel %vm1863, %v2169, 0.0
  %v2341 = vadd.f32 %v2339, %v2340
  %v2342 = vsel %vm1863, %v2170, 0.0
  %v2343 = vadd.f32 %v2341, %v2342
  %v2344 = vsel %vm1863, %v2171, 0.0
  %v2345 = vadd.f32 %v2343, %v2344
  %v2346 = vsel %vm1863, %v2172, 0.0
  %v2347 = vadd.f32 %v2345, %v2346
  %v2348 = vsel %vm1863, %v2173, 0.0
  %v2349 = vadd.f32 %v2347, %v2348
  %v2350 = vsel %vm1863, %v2174, 0.0
  %v2351 = vadd.f32 %v2349, %v2350
  %v2352 = vsel %vm1863, %v2175, 0.0
  %v2353 = vadd.f32 %v2351, %v2352
  %v2354 = vsel %vm1863, %v2176, 0.0
  %v2355 = vadd.f32 %v2353, %v2354
  %v2356 = vsel %vm1863, %v2177, 0.0
  %v2357 = vadd.f32 %v2355, %v2356
  %v2358 = vsel %vm1863, %v2178, 0.0
  %v2359 = vadd.f32 %v2357, %v2358
  %v2360 = vsel %vm1863, %v2179, 0.0
  %v2361 = vadd.f32 %v2359, %v2360
  %v2362 = vsel %vm1863, %v2180, 0.0
  %v2363 = vadd.f32 %v2361, %v2362
  %v2364 = vsel %vm1863, %v2181, 0.0
  %v2365 = vadd.f32 %v2363, %v2364
  %v2366 = vsel %vm1863, %v2182, 0.0
  %v2367 = vadd.f32 %v2365, %v2366
  %v2368 = vsel %vm1863, %v2183, 0.0
  %v2369 = vadd.f32 %v2367, %v2368
  %v2370 = vsel %vm1863, %v2184, 0.0
  %v2371 = vadd.f32 %v2369, %v2370
  %v2372 = vsel %vm1863, %v2185, 0.0
  %v2373 = vadd.f32 %v2371, %v2372
  %v2374 = vsel %vm1863, %v2186, 0.0
  %v2375 = vadd.f32 %v2373, %v2374
  %v2376 = vsel %vm1863, %v2187, 0.0
  %v2377 = vadd.f32 %v2375, %v2376
  %v2378 = vsel %vm1863, %v2188, 0.0
  %v2379 = vadd.f32 %v2377, %v2378
  %v2380 = vsel %vm1863, %v2189, 0.0
  %v2381 = vadd.f32 %v2379, %v2380
  %v2382 = vsel %vm1863, %v2190, 0.0
  %v2383 = vadd.f32 %v2381, %v2382
  %v2384 = vsel %vm1863, %v2191, 0.0
  %v2385 = vadd.f32 %v2383, %v2384
  %v2386 = vsel %vm1863, %v2192, 0.0
  %v2387 = vadd.f32 %v2385, %v2386
  %v2388 = vsel %vm1863, %v2193, 0.0
  %v2389 = vadd.f32 %v2387, %v2388
  %v2390 = vsel %vm1863, %v2194, 0.0
  %v2391 = vadd.f32 %v2389, %v2390
  %v2392 = vsel %vm1863, %v2195, 0.0
  %v2393 = vadd.f32 %v2391, %v2392
  %v2394 = vsel %vm1863, %v2196, 0.0
  %v2395 = vadd.f32 %v2393, %v2394
  %v2396 = vsel %vm1863, %v2197, 0.0
  %v2397 = vadd.f32 %v2395, %v2396
  %v2398 = vsel %vm1863, %v2198, 0.0
  %v2399 = vadd.f32 %v2397, %v2398
  %v2400 = vsel %vm1863, %v2199, 0.0
  %v2401 = vadd.f32 %v2399, %v2400
  %v2402 = vsel %vm1863, %v2200, 0.0
  %v2403 = vadd.f32 %v2401, %v2402
  %v2404 = vsel %vm1863, %v2201, 0.0
  %v2405 = vadd.f32 %v2403, %v2404
  %v2406 = vsel %vm1863, %v2202, 0.0
  %v2407 = vadd.f32 %v2405, %v2406
  %v2408 = vsel %vm1863, %v2203, 0.0
  %v2409 = vadd.f32 %v2407, %v2408
  %v2410 = vsel %vm1863, %v2204, 0.0
  %v2411 = vadd.f32 %v2409, %v2410
  %v2412 = vsel %vm1863, %v2205, 0.0
  %v2413 = vadd.f32 %v2411, %v2412
  %v2414 = vsel %vm1863, %v2206, 0.0
  %v2415 = vadd.f32 %v2413, %v2414
  %v2416 = vsel %vm1863, %v2207, 0.0
  %v2417 = vadd.f32 %v2415, %v2416
  %v2418 = vsel %vm1863, %v2208, 0.0
  %v2419 = vadd.f32 %v2417, %v2418
  %v2420 = vsel %vm1863, %v2209, 0.0
  %v2421 = vadd.f32 %v2419, %v2420
  %v2422 = vsel %vm1863, %v2210, 0.0
  %v2423 = vadd.f32 %v2421, %v2422
  %v2424 = vsel %vm1863, %v2211, 0.0
  %v2425 = vadd.f32 %v2423, %v2424
  %v2426 = vsel %vm1863, %v2212, 0.0
  %v2427 = vadd.f32 %v2425, %v2426
  %v2428 = vsel %vm1863, %v2213, 0.0
  %v2429 = vadd.f32 %v2427, %v2428
  %v2430 = vsel %vm1863, %v2214, 0.0
  %v2431 = vadd.f32 %v2429, %v2430
  %v2432 = vsel %vm1863, %v2215, 0.0
  %v2433 = vadd.f32 %v2431, %v2432
  %v2434 = vsel %vm1863, %v2216, 0.0
  %v2435 = vadd.f32 %v2433, %v2434
  %v2436 = vsel %vm1863, %v2217, 0.0
  %v2437 = vadd.f32 %v2435, %v2436
  %v2438 = vsel %vm1863, %v2218, 0.0
  %v2439 = vadd.f32 %v2437, %v2438
  %v2440 = vsel %vm1863, %v2219, 0.0
  %v2441 = vadd.f32 %v2439, %v2440
  %v2442 = vsel %vm1863, %v2220, 0.0
  %v2443 = vadd.f32 %v2441, %v2442
  %v2444 = vsel %vm1863, %v2221, 0.0
  %v2445 = vadd.f32 %v2443, %v2444
  %v2446 = vsel %vm1863, %v2222, 0.0
  %v2447 = vadd.f32 %v2445, %v2446
  %v2448 = vsel %vm1863, %v2223, 0.0
  %v2449 = vadd.f32 %v2447, %v2448
  %v2450 = vsel %vm1863, %v2224, 0.0
  %v2451 = vadd.f32 %v2449, %v2450
  %v2452 = vsel %vm1863, %v2225, 0.0
  %v2453 = vadd.f32 %v2451, %v2452
  %v2454 = vsel %vm1863, %v2226, 0.0
  %v2455 = vadd.f32 %v2453, %v2454
  %v2456 = vsel %vm1863, %v2227, 0.0
  %v2457 = vadd.f32 %v2455, %v2456
  %v2458 = vsel %vm1863, %v2228, 0.0
  %v2459 = vadd.f32 %v2457, %v2458
  %v2460 = vsel %vm1863, %v2229, 0.0
  %v2461 = vadd.f32 %v2459, %v2460
  %v2462 = vsel %vm1863, %v2230, 0.0
  %v2463 = vadd.f32 %v2461, %v2462
  %v2464 = vsel %vm1863, %v2231, 0.0
  %v2465 = vadd.f32 %v2463, %v2464
  %v2466 = vsel %vm1863, %v2232, 0.0
  %v2467 = vadd.f32 %v2465, %v2466
  %v2468 = vsel %vm1863, %v2233, 0.0
  %v2469 = vadd.f32 %v2467, %v2468
  %v2470 = vsel %vm1863, %v2234, 0.0
  %v2471 = vadd.f32 %v2469, %v2470
  %v2472 = vsel %vm1863, %v2235, 0.0
  %v2473 = vadd.f32 %v2471, %v2472
  %v2474 = vsel %vm1863, %v2236, 0.0
  %v2475 = vadd.f32 %v2473, %v2474
  %v2476 = vsel %vm1863, %v2237, 0.0
  %v2477 = vadd.f32 %v2475, %v2476
  %v2478 = vsel %vm1863, %v2238, 0.0
  %v2479 = vadd.f32 %v2477, %v2478
  %v2480 = vsel %vm1863, %v2239, 0.0
  %v2481 = vadd.f32 %v2479, %v2480
  %v2482 = vsel %vm1863, %v2240, 0.0
  %v2483 = vadd.f32 %v2481, %v2482
  %v2484 = vsel %vm1863, %v2241, 0.0
  %v2485 = vadd.f32 %v2483, %v2484
  %v2486 = vsel %vm1863, %v2242, 0.0
  %v2487 = vadd.f32 %v2485, %v2486
  %v2488 = vsel %vm1863, %v2243, 0.0
  %v2489 = vadd.f32 %v2487, %v2488
  %v2490 = vsel %vm1863, %v2244, 0.0
  %v2491 = vadd.f32 %v2489, %v2490
  %v2492 = vsel %vm1863, %v2245, 0.0
  %v2493 = vadd.f32 %v2491, %v2492
  %v2494 = vsel %vm1863, %v2246, 0.0
  %v2495 = vadd.f32 %v2493, %v2494
  %v2496 = vsel %vm1863, %v2247, 0.0
  %v2497 = vadd.f32 %v2495, %v2496
  %v2498 = vsel %vm1863, %v2248, 0.0
  %v2499 = vadd.f32 %v2497, %v2498
  %v2500 = vsel %vm1863, %v2249, 0.0
  %v2501 = vadd.f32 %v2499, %v2500
  %v2502 = vsel %vm1863, %v2250, 0.0
  %v2503 = vadd.f32 %v2501, %v2502
  %v2504 = vsel %vm1863, %v2251, 0.0
  %v2505 = vadd.f32 %v2503, %v2504
  %v2506 = vsel %vm1863, %v2252, 0.0
  %v2507 = vadd.f32 %v2505, %v2506
  %v2508 = vrot.slane %v2507, 4
  %v2509 = vadd.f32 %v2507, %v2508
  %v2510 = vrot.slane %v2509, 2
  %v2511 = vadd.f32 %v2509, %v2510
  %v2512 = vrot.slane %v2511, 1
  %v2513 = vadd.f32 %v2511, %v2512
  %vm2514 = vcmask 1040384
  %v2515 = vsel %vm2514, %v2124, %v2513
  %vm2516 = vcmask 1041408
  %v2517 = vsel %vm2516, %v2515, 0.0
  %2518 = vst.msk [vmem:[%s5] sm:$0xff] %vm1863, %v2517
  // Predicated region
  $region18: #{discriminator_forward.4} parent=0 // pred_check
    _
  $region19: #{discriminator_forward.4} parent=0 // pred_check_branch
    %2520 = sbr.rel (0) target = $region21
  $region20: #{discriminator_forward.4} parent=0 // pred_region
    _
  $region21: #{discriminator_forward.4} parent=0 // pred_fallthru
    _
  // Predicated region
  $region22: #{discriminator_forward.4} parent=0 // pred_check
    _
  $region23: #{discriminator_forward.4} parent=0 // pred_check_branch
    %2522 = sbr.rel (0) target = $region25
  $region24: #{discriminator_forward.4} parent=0 // pred_region
    _
  $region25: #{discriminator_forward.4} parent=0 // pred_fallthru
    _
  // Predicated region
  $region26: #{discriminator_forward.4} parent=0 // pred_check
    _
  $region27: #{discriminator_forward.4} parent=0 // pred_check_branch
    %2524 = sbr.rel (0) target = $region29
  $region28: #{discriminator_forward.4} parent=0 // pred_region
    _
  $region29: #{discriminator_forward.4} parent=0 // pred_fallthru
    _
  // Predicated region
  $region30: #{discriminator_forward.4} parent=0 // pred_check
    _
  $region31: #{discriminator_forward.4} parent=0 // pred_check_branch
    %2526 = sbr.rel (0) target = $region33
  $region32: #{discriminator_forward.4} parent=0 // pred_region
    _
  $region33: #{discriminator_forward.4} parent=0 // pred_fallthru
    _

// kernel: discriminator_forward.5
$region0: #{discriminator_forward.5}
  #allocation0 [shape = 'u32[]', space=smem, size = 0x4, offset = 0x4, fixed_abs, tag = 'smem constant byte address 0x4 - core index']
  #allocation1 [shape = 'u32[144,128]{1,0:T(1,128)}', space=vmem, size = 0x12000, scoped, tag = 'internal scratch']
  %s0 = inlined_call_operand.vmem [shape: bf16[128,512], index: 0, kind: input, shape index: {}]
  %s1 = inlined_call_operand.vmem [shape: bf16[512,96], index: 1, kind: input, shape index: {}]
  %s2 = inlined_call_operand.vmem [shape: f32[1,512], index: 2, kind: input, shape index: {}]
  %s3 = inlined_call_operand.vmem [shape: f32[1,512], index: 3, kind: input, shape index: {}]
  %s4 = inlined_call_operand.vmem [shape: bf16[128,96], index: 4, kind: output, shape index: {0}]
  %s5 = inlined_call_operand.vmem [shape: f32[8,96], index: 5, kind: output, shape index: {1}]
  %6 = xla_tuple %s4, %s5
  %s7 = sld [smem:[#allocation0]]
  $region34: #{discriminator_forward.5} parent=0
    _
  %s9 = ssub.s32 1, %s7
  %s10 = scalar_select 0, %s9, %s7
  // Predicated region
  $region2: #{discriminator_forward.5} parent=0 // pred_check
    _
  $region3: #{discriminator_forward.5} parent=0 // pred_check_branch
    %12 = sbr.rel (0) target = $region5
  $region4: #{discriminator_forward.5} parent=0 // pred_region
    _
  $region5: #{discriminator_forward.5} parent=0 // pred_fallthru
    _
  // Predicated region
  $region6: #{discriminator_forward.5} parent=0 // pred_check
    _
  $region7: #{discriminator_forward.5} parent=0 // pred_check_branch
    %14 = sbr.rel (0) target = $region9
  $region8: #{discriminator_forward.5} parent=0 // pred_region
    _
  $region9: #{discriminator_forward.5} parent=0 // pred_fallthru
    _
  // Predicated region
  $region10: #{discriminator_forward.5} parent=0 // pred_check
    _
  $region11: #{discriminator_forward.5} parent=0 // pred_check_branch
    %16 = sbr.rel (0) target = $region13
  $region12: #{discriminator_forward.5} parent=0 // pred_region
    _
  $region13: #{discriminator_forward.5} parent=0 // pred_fallthru
    _
  // Predicated region
  $region14: #{discriminator_forward.5} parent=0 // pred_check
    _
  $region15: #{discriminator_forward.5} parent=0 // pred_check_branch
    %18 = sbr.rel (0) target = $region17
  $region16: #{discriminator_forward.5} parent=0 // pred_region
    _
  $region17: #{discriminator_forward.5} parent=0 // pred_fallthru
    _
  %v20 = vld [vmem:[%s0] sm:$0xff]
  %v21 = vld [vmem:[%s0 + $0x8] sm:$0xff]
  %v22 = vld [vmem:[%s0 + $0x10] sm:$0xff]
  %v23 = vld [vmem:[%s0 + $0x18] sm:$0xff]
  %v24 = vld [vmem:[%s0 + $0x20] sm:$0xff]
  %v25 = vld [vmem:[%s0 + $0x28] sm:$0xff]
  %v26 = vld [vmem:[%s0 + $0x30] sm:$0xff]
  %v27 = vld [vmem:[%s0 + $0x38] sm:$0xff]
  %v28 = vld [vmem:[%s0 + $0x40] sm:$0xff]
  %v29 = vld [vmem:[%s0 + $0x48] sm:$0xff]
  %v30 = vld [vmem:[%s0 + $0x50] sm:$0xff]
  %v31 = vld [vmem:[%s0 + $0x58] sm:$0xff]
  %v32 = vld [vmem:[%s0 + $0x60] sm:$0xff]
  %v33 = vld [vmem:[%s0 + $0x68] sm:$0xff]
  %v34 = vld [vmem:[%s0 + $0x70] sm:$0xff]
  %v35 = vld [vmem:[%s0 + $0x78] sm:$0xff]
  %v36 = vld [vmem:[%s0 + $0x80] sm:$0xff]
  %v37 = vld [vmem:[%s0 + $0x88] sm:$0xff]
  %v38 = vld [vmem:[%s0 + $0x90] sm:$0xff]
  %v39 = vld [vmem:[%s0 + $0x98] sm:$0xff]
  %v40 = vld [vmem:[%s0 + $0xa0] sm:$0xff]
  %v41 = vld [vmem:[%s0 + $0xa8] sm:$0xff]
  %v42 = vld [vmem:[%s0 + $0xb0] sm:$0xff]
  %v43 = vld [vmem:[%s0 + $0xb8] sm:$0xff]
  %v44 = vld [vmem:[%s0 + $0xc0] sm:$0xff]
  %v45 = vld [vmem:[%s0 + $0xc8] sm:$0xff]
  %v46 = vld [vmem:[%s0 + $0xd0] sm:$0xff]
  %v47 = vld [vmem:[%s0 + $0xd8] sm:$0xff]
  %v48 = vld [vmem:[%s0 + $0xe0] sm:$0xff]
  %v49 = vld [vmem:[%s0 + $0xe8] sm:$0xff]
  %v50 = vld [vmem:[%s0 + $0xf0] sm:$0xff]
  %v51 = vld [vmem:[%s0 + $0xf8] sm:$0xff]
  %v52 = vunpack.c.l.bf16 %v20
  %v53 = vunpack.c.h.bf16 %v20
  %v54 = vunpack.c.l.bf16 %v21
  %v55 = vunpack.c.h.bf16 %v21
  %v56 = vunpack.c.l.bf16 %v22
  %v57 = vunpack.c.h.bf16 %v22
  %v58 = vunpack.c.l.bf16 %v23
  %v59 = vunpack.c.h.bf16 %v23
  %v60 = vunpack.c.l.bf16 %v24
  %v61 = vunpack.c.h.bf16 %v24
  %v62 = vunpack.c.l.bf16 %v25
  %v63 = vunpack.c.h.bf16 %v25
  %v64 = vunpack.c.l.bf16 %v26
  %v65 = vunpack.c.h.bf16 %v26
  %v66 = vunpack.c.l.bf16 %v27
  %v67 = vunpack.c.h.bf16 %v27
  %v68 = vunpack.c.l.bf16 %v28
  %v69 = vunpack.c.h.bf16 %v28
  %v70 = vunpack.c.l.bf16 %v29
  %v71 = vunpack.c.h.bf16 %v29
  %v72 = vunpack.c.l.bf16 %v30
  %v73 = vunpack.c.h.bf16 %v30
  %v74 = vunpack.c.l.bf16 %v31
  %v75 = vunpack.c.h.bf16 %v31
  %v76 = vunpack.c.l.bf16 %v32
  %v77 = vunpack.c.h.bf16 %v32
  %v78 = vunpack.c.l.bf16 %v33
  %v79 = vunpack.c.h.bf16 %v33
  %v80 = vunpack.c.l.bf16 %v34
  %v81 = vunpack.c.h.bf16 %v34
  %v82 = vunpack.c.l.bf16 %v35
  %v83 = vunpack.c.h.bf16 %v35
  %v84 = vunpack.c.l.bf16 %v36
  %v85 = vunpack.c.h.bf16 %v36
  %v86 = vunpack.c.l.bf16 %v37
  %v87 = vunpack.c.h.bf16 %v37
  %v88 = vunpack.c.l.bf16 %v38
  %v89 = vunpack.c.h.bf16 %v38
  %v90 = vunpack.c.l.bf16 %v39
  %v91 = vunpack.c.h.bf16 %v39
  %v92 = vunpack.c.l.bf16 %v40
  %v93 = vunpack.c.h.bf16 %v40
  %v94 = vunpack.c.l.bf16 %v41
  %v95 = vunpack.c.h.bf16 %v41
  %v96 = vunpack.c.l.bf16 %v42
  %v97 = vunpack.c.h.bf16 %v42
  %v98 = vunpack.c.l.bf16 %v43
  %v99 = vunpack.c.h.bf16 %v43
  %v100 = vunpack.c.l.bf16 %v44
  %v101 = vunpack.c.h.bf16 %v44
  %v102 = vunpack.c.l.bf16 %v45
  %v103 = vunpack.c.h.bf16 %v45
  %v104 = vunpack.c.l.bf16 %v46
  %v105 = vunpack.c.h.bf16 %v46
  %v106 = vunpack.c.l.bf16 %v47
  %v107 = vunpack.c.h.bf16 %v47
  %v108 = vunpack.c.l.bf16 %v48
  %v109 = vunpack.c.h.bf16 %v48
  %v110 = vunpack.c.l.bf16 %v49
  %v111 = vunpack.c.h.bf16 %v49
  %v112 = vunpack.c.l.bf16 %v50
  %v113 = vunpack.c.h.bf16 %v50
  %v114 = vunpack.c.l.bf16 %v51
  %v115 = vunpack.c.h.bf16 %v51
  %v116 = vld [vmem:[%s2] sm:$0xf]
  %v118 = vlaneseq
  %v119 = vshrl.u32 %v118, 7
  %v120 = vsub.s32 0, %v119
  %v121 = vrot.slane %v116, %v120
  %v122 = vlaneseq
  %v123 = vshrl.u32 %v122, 7
  %v124 = vsub.s32 1, %v123
  %v125 = vrot.slane %v116, %v124
  %v126 = vlaneseq
  %v127 = vshrl.u32 %v126, 7
  %v128 = vsub.s32 2, %v127
  %v129 = vrot.slane %v116, %v128
  %v130 = vlaneseq
  %v131 = vshrl.u32 %v130, 7
  %v132 = vsub.s32 3, %v131
  %v133 = vrot.slane %v116, %v132
  %v138 = vmul.f32 %v52, %v121
  %v139 = vmul.f32 %v53, %v125
  %v140 = vmul.f32 %v54, %v129
  %v141 = vmul.f32 %v55, %v133
  %v142 = vmul.f32 %v56, %v121
  %v143 = vmul.f32 %v57, %v125
  %v144 = vmul.f32 %v58, %v129
  %v145 = vmul.f32 %v59, %v133
  %v146 = vmul.f32 %v60, %v121
  %v147 = vmul.f32 %v61, %v125
  %v148 = vmul.f32 %v62, %v129
  %v149 = vmul.f32 %v63, %v133
  %v150 = vmul.f32 %v64, %v121
  %v151 = vmul.f32 %v65, %v125
  %v152 = vmul.f32 %v66, %v129
  %v153 = vmul.f32 %v67, %v133
  %v154 = vmul.f32 %v68, %v121
  %v155 = vmul.f32 %v69, %v125
  %v156 = vmul.f32 %v70, %v129
  %v157 = vmul.f32 %v71, %v133
  %v158 = vmul.f32 %v72, %v121
  %v159 = vmul.f32 %v73, %v125
  %v160 = vmul.f32 %v74, %v129
  %v161 = vmul.f32 %v75, %v133
  %v162 = vmul.f32 %v76, %v121
  %v163 = vmul.f32 %v77, %v125
  %v164 = vmul.f32 %v78, %v129
  %v165 = vmul.f32 %v79, %v133
  %v166 = vmul.f32 %v80, %v121
  %v167 = vmul.f32 %v81, %v125
  %v168 = vmul.f32 %v82, %v129
  %v169 = vmul.f32 %v83, %v133
  %v170 = vmul.f32 %v84, %v121
  %v171 = vmul.f32 %v85, %v125
  %v172 = vmul.f32 %v86, %v129
  %v173 = vmul.f32 %v87, %v133
  %v174 = vmul.f32 %v88, %v121
  %v175 = vmul.f32 %v89, %v125
  %v176 = vmul.f32 %v90, %v129
  %v177 = vmul.f32 %v91, %v133
  %v178 = vmul.f32 %v92, %v121
  %v179 = vmul.f32 %v93, %v125
  %v180 = vmul.f32 %v94, %v129
  %v181 = vmul.f32 %v95, %v133
  %v182 = vmul.f32 %v96, %v121
  %v183 = vmul.f32 %v97, %v125
  %v184 = vmul.f32 %v98, %v129
  %v185 = vmul.f32 %v99, %v133
  %v186 = vmul.f32 %v100, %v121
  %v187 = vmul.f32 %v101, %v125
  %v188 = vmul.f32 %v102, %v129
  %v189 = vmul.f32 %v103, %v133
  %v190 = vmul.f32 %v104, %v121
  %v191 = vmul.f32 %v105, %v125
  %v192 = vmul.f32 %v106, %v129
  %v193 = vmul.f32 %v107, %v133
  %v194 = vmul.f32 %v108, %v121
  %v195 = vmul.f32 %v109, %v125
  %v196 = vmul.f32 %v110, %v129
  %v197 = vmul.f32 %v111, %v133
  %v198 = vmul.f32 %v112, %v121
  %v199 = vmul.f32 %v113, %v125
  %v200 = vmul.f32 %v114, %v129
  %v201 = vmul.f32 %v115, %v133
  %v202 = vld [vmem:[%s3] sm:$0xf]
  %v204 = vlaneseq
  %v205 = vshrl.u32 %v204, 7
  %v206 = vsub.s32 0, %v205
  %v207 = vrot.slane %v202, %v206
  %v208 = vlaneseq
  %v209 = vshrl.u32 %v208, 7
  %v210 = vsub.s32 1, %v209
  %v211 = vrot.slane %v202, %v210
  %v212 = vlaneseq
  %v213 = vshrl.u32 %v212, 7
  %v214 = vsub.s32 2, %v213
  %v215 = vrot.slane %v202, %v214
  %v216 = vlaneseq
  %v217 = vshrl.u32 %v216, 7
  %v218 = vsub.s32 3, %v217
  %v219 = vrot.slane %v202, %v218
  %v224 = vadd.f32 %v138, %v207
  %v225 = vadd.f32 %v139, %v211
  %v226 = vadd.f32 %v140, %v215
  %v227 = vadd.f32 %v141, %v219
  %v228 = vadd.f32 %v142, %v207
  %v229 = vadd.f32 %v143, %v211
  %v230 = vadd.f32 %v144, %v215
  %v231 = vadd.f32 %v145, %v219
  %v232 = vadd.f32 %v146, %v207
  %v233 = vadd.f32 %v147, %v211
  %v234 = vadd.f32 %v148, %v215
  %v235 = vadd.f32 %v149, %v219
  %v236 = vadd.f32 %v150, %v207
  %v237 = vadd.f32 %v151, %v211
  %v238 = vadd.f32 %v152, %v215
  %v239 = vadd.f32 %v153, %v219
  %v240 = vadd.f32 %v154, %v207
  %v241 = vadd.f32 %v155, %v211
  %v242 = vadd.f32 %v156, %v215
  %v243 = vadd.f32 %v157, %v219
  %v244 = vadd.f32 %v158, %v207
  %v245 = vadd.f32 %v159, %v211
  %v246 = vadd.f32 %v160, %v215
  %v247 = vadd.f32 %v161, %v219
  %v248 = vadd.f32 %v162, %v207
  %v249 = vadd.f32 %v163, %v211
  %v250 = vadd.f32 %v164, %v215
  %v251 = vadd.f32 %v165, %v219
  %v252 = vadd.f32 %v166, %v207
  %v253 = vadd.f32 %v167, %v211
  %v254 = vadd.f32 %v168, %v215
  %v255 = vadd.f32 %v169, %v219
  %v256 = vadd.f32 %v170, %v207
  %v257 = vadd.f32 %v171, %v211
  %v258 = vadd.f32 %v172, %v215
  %v259 = vadd.f32 %v173, %v219
  %v260 = vadd.f32 %v174, %v207
  %v261 = vadd.f32 %v175, %v211
  %v262 = vadd.f32 %v176, %v215
  %v263 = vadd.f32 %v177, %v219
  %v264 = vadd.f32 %v178, %v207
  %v265 = vadd.f32 %v179, %v211
  %v266 = vadd.f32 %v180, %v215
  %v267 = vadd.f32 %v181, %v219
  %v268 = vadd.f32 %v182, %v207
  %v269 = vadd.f32 %v183, %v211
  %v270 = vadd.f32 %v184, %v215
  %v271 = vadd.f32 %v185, %v219
  %v272 = vadd.f32 %v186, %v207
  %v273 = vadd.f32 %v187, %v211
  %v274 = vadd.f32 %v188, %v215
  %v275 = vadd.f32 %v189, %v219
  %v276 = vadd.f32 %v190, %v207
  %v277 = vadd.f32 %v191, %v211
  %v278 = vadd.f32 %v192, %v215
  %v279 = vadd.f32 %v193, %v219
  %v280 = vadd.f32 %v194, %v207
  %v281 = vadd.f32 %v195, %v211
  %v282 = vadd.f32 %v196, %v215
  %v283 = vadd.f32 %v197, %v219
  %v284 = vadd.f32 %v198, %v207
  %v285 = vadd.f32 %v199, %v211
  %v286 = vadd.f32 %v200, %v215
  %v287 = vadd.f32 %v201, %v219
  %vm288 = vcmp.ge.f32.partialorder %v224, 0.0
  %vm289 = vcmp.ge.f32.partialorder %v225, 0.0
  %vm290 = vcmp.ge.f32.partialorder %v226, 0.0
  %vm291 = vcmp.ge.f32.partialorder %v227, 0.0
  %vm292 = vcmp.ge.f32.partialorder %v228, 0.0
  %vm293 = vcmp.ge.f32.partialorder %v229, 0.0
  %vm294 = vcmp.ge.f32.partialorder %v230, 0.0
  %vm295 = vcmp.ge.f32.partialorder %v231, 0.0
  %vm296 = vcmp.ge.f32.partialorder %v232, 0.0
  %vm297 = vcmp.ge.f32.partialorder %v233, 0.0
  %vm298 = vcmp.ge.f32.partialorder %v234, 0.0
  %vm299 = vcmp.ge.f32.partialorder %v235, 0.0
  %vm300 = vcmp.ge.f32.partialorder %v236, 0.0
  %vm301 = vcmp.ge.f32.partialorder %v237, 0.0
  %vm302 = vcmp.ge.f32.partialorder %v238, 0.0
  %vm303 = vcmp.ge.f32.partialorder %v239, 0.0
  %vm304 = vcmp.ge.f32.partialorder %v240, 0.0
  %vm305 = vcmp.ge.f32.partialorder %v241, 0.0
  %vm306 = vcmp.ge.f32.partialorder %v242, 0.0
  %vm307 = vcmp.ge.f32.partialorder %v243, 0.0
  %vm308 = vcmp.ge.f32.partialorder %v244, 0.0
  %vm309 = vcmp.ge.f32.partialorder %v245, 0.0
  %vm310 = vcmp.ge.f32.partialorder %v246, 0.0
  %vm311 = vcmp.ge.f32.partialorder %v247, 0.0
  %vm312 = vcmp.ge.f32.partialorder %v248, 0.0
  %vm313 = vcmp.ge.f32.partialorder %v249, 0.0
  %vm314 = vcmp.ge.f32.partialorder %v250, 0.0
  %vm315 = vcmp.ge.f32.partialorder %v251, 0.0
  %vm316 = vcmp.ge.f32.partialorder %v252, 0.0
  %vm317 = vcmp.ge.f32.partialorder %v253, 0.0
  %vm318 = vcmp.ge.f32.partialorder %v254, 0.0
  %vm319 = vcmp.ge.f32.partialorder %v255, 0.0
  %vm320 = vcmp.ge.f32.partialorder %v256, 0.0
  %vm321 = vcmp.ge.f32.partialorder %v257, 0.0
  %vm322 = vcmp.ge.f32.partialorder %v258, 0.0
  %vm323 = vcmp.ge.f32.partialorder %v259, 0.0
  %vm324 = vcmp.ge.f32.partialorder %v260, 0.0
  %vm325 = vcmp.ge.f32.partialorder %v261, 0.0
  %vm326 = vcmp.ge.f32.partialorder %v262, 0.0
  %vm327 = vcmp.ge.f32.partialorder %v263, 0.0
  %vm328 = vcmp.ge.f32.partialorder %v264, 0.0
  %vm329 = vcmp.ge.f32.partialorder %v265, 0.0
  %vm330 = vcmp.ge.f32.partialorder %v266, 0.0
  %vm331 = vcmp.ge.f32.partialorder %v267, 0.0
  %vm332 = vcmp.ge.f32.partialorder %v268, 0.0
  %vm333 = vcmp.ge.f32.partialorder %v269, 0.0
  %vm334 = vcmp.ge.f32.partialorder %v270, 0.0
  %vm335 = vcmp.ge.f32.partialorder %v271, 0.0
  %vm336 = vcmp.ge.f32.partialorder %v272, 0.0
  %vm337 = vcmp.ge.f32.partialorder %v273, 0.0
  %vm338 = vcmp.ge.f32.partialorder %v274, 0.0
  %vm339 = vcmp.ge.f32.partialorder %v275, 0.0
  %vm340 = vcmp.ge.f32.partialorder %v276, 0.0
  %vm341 = vcmp.ge.f32.partialorder %v277, 0.0
  %vm342 = vcmp.ge.f32.partialorder %v278, 0.0
  %vm343 = vcmp.ge.f32.partialorder %v279, 0.0
  %vm344 = vcmp.ge.f32.partialorder %v280, 0.0
  %vm345 = vcmp.ge.f32.partialorder %v281, 0.0
  %vm346 = vcmp.ge.f32.partialorder %v282, 0.0
  %vm347 = vcmp.ge.f32.partialorder %v283, 0.0
  %vm348 = vcmp.ge.f32.partialorder %v284, 0.0
  %vm349 = vcmp.ge.f32.partialorder %v285, 0.0
  %vm350 = vcmp.ge.f32.partialorder %v286, 0.0
  %vm351 = vcmp.ge.f32.partialorder %v287, 0.0
  %v352 = vmul.f32 %v224, 0.2
  %v353 = vmul.f32 %v225, 0.2
  %v354 = vmul.f32 %v226, 0.2
  %v355 = vmul.f32 %v227, 0.2
  %v356 = vmul.f32 %v228, 0.2
  %v357 = vmul.f32 %v229, 0.2
  %v358 = vmul.f32 %v230, 0.2
  %v359 = vmul.f32 %v231, 0.2
  %v360 = vmul.f32 %v232, 0.2
  %v361 = vmul.f32 %v233, 0.2
  %v362 = vmul.f32 %v234, 0.2
  %v363 = vmul.f32 %v235, 0.2
  %v364 = vmul.f32 %v236, 0.2
  %v365 = vmul.f32 %v237, 0.2
  %v366 = vmul.f32 %v238, 0.2
  %v367 = vmul.f32 %v239, 0.2
  %v368 = vmul.f32 %v240, 0.2
  %v369 = vmul.f32 %v241, 0.2
  %v370 = vmul.f32 %v242, 0.2
  %v371 = vmul.f32 %v243, 0.2
  %v372 = vmul.f32 %v244, 0.2
  %v373 = vmul.f32 %v245, 0.2
  %v374 = vmul.f32 %v246, 0.2
  %v375 = vmul.f32 %v247, 0.2
  %v376 = vmul.f32 %v248, 0.2
  %v377 = vmul.f32 %v249, 0.2
  %v378 = vmul.f32 %v250, 0.2
  %v379 = vmul.f32 %v251, 0.2
  %v380 = vmul.f32 %v252, 0.2
  %v381 = vmul.f32 %v253, 0.2
  %v382 = vmul.f32 %v254, 0.2
  %v383 = vmul.f32 %v255, 0.2
  %v384 = vmul.f32 %v256, 0.2
  %v385 = vmul.f32 %v257, 0.2
  %v386 = vmul.f32 %v258, 0.2
  %v387 = vmul.f32 %v259, 0.2
  %v388 = vmul.f32 %v260, 0.2
  %v389 = vmul.f32 %v261, 0.2
  %v390 = vmul.f32 %v262, 0.2
  %v391 = vmul.f32 %v263, 0.2
  %v392 = vmul.f32 %v264, 0.2
  %v393 = vmul.f32 %v265, 0.2
  %v394 = vmul.f32 %v266, 0.2
  %v395 = vmul.f32 %v267, 0.2
  %v396 = vmul.f32 %v268, 0.2
  %v397 = vmul.f32 %v269, 0.2
  %v398 = vmul.f32 %v270, 0.2
  %v399 = vmul.f32 %v271, 0.2
  %v400 = vmul.f32 %v272, 0.2
  %v401 = vmul.f32 %v273, 0.2
  %v402 = vmul.f32 %v274, 0.2
  %v403 = vmul.f32 %v275, 0.2
  %v404 = vmul.f32 %v276, 0.2
  %v405 = vmul.f32 %v277, 0.2
  %v406 = vmul.f32 %v278, 0.2
  %v407 = vmul.f32 %v279, 0.2
  %v408 = vmul.f32 %v280, 0.2
  %v409 = vmul.f32 %v281, 0.2
  %v410 = vmul.f32 %v282, 0.2
  %v411 = vmul.f32 %v283, 0.2
  %v412 = vmul.f32 %v284, 0.2
  %v413 = vmul.f32 %v285, 0.2
  %v414 = vmul.f32 %v286, 0.2
  %v415 = vmul.f32 %v287, 0.2
  %v416 = vsel %vm288, %v224, %v352
  %v417 = vsel %vm289, %v225, %v353
  %v418 = vsel %vm290, %v226, %v354
  %v419 = vsel %vm291, %v227, %v355
  %v420 = vsel %vm292, %v228, %v356
  %v421 = vsel %vm293, %v229, %v357
  %v422 = vsel %vm294, %v230, %v358
  %v423 = vsel %vm295, %v231, %v359
  %v424 = vsel %vm296, %v232, %v360
  %v425 = vsel %vm297, %v233, %v361
  %v426 = vsel %vm298, %v234, %v362
  %v427 = vsel %vm299, %v235, %v363
  %v428 = vsel %vm300, %v236, %v364
  %v429 = vsel %vm301, %v237, %v365
  %v430 = vsel %vm302, %v238, %v366
  %v431 = vsel %vm303, %v239, %v367
  %v432 = vsel %vm304, %v240, %v368
  %v433 = vsel %vm305, %v241, %v369
  %v434 = vsel %vm306, %v242, %v370
  %v435 = vsel %vm307, %v243, %v371
  %v436 = vsel %vm308, %v244, %v372
  %v437 = vsel %vm309, %v245, %v373
  %v438 = vsel %vm310, %v246, %v374
  %v439 = vsel %vm311, %v247, %v375
  %v440 = vsel %vm312, %v248, %v376
  %v441 = vsel %vm313, %v249, %v377
  %v442 = vsel %vm314, %v250, %v378
  %v443 = vsel %vm315, %v251, %v379
  %v444 = vsel %vm316, %v252, %v380
  %v445 = vsel %vm317, %v253, %v381
  %v446 = vsel %vm318, %v254, %v382
  %v447 = vsel %vm319, %v255, %v383
  %v448 = vsel %vm320, %v256, %v384
  %v449 = vsel %vm321, %v257, %v385
  %v450 = vsel %vm322, %v258, %v386
  %v451 = vsel %vm323, %v259, %v387
  %v452 = vsel %vm324, %v260, %v388
  %v453 = vsel %vm325, %v261, %v389
  %v454 = vsel %vm326, %v262, %v390
  %v455 = vsel %vm327, %v263, %v391
  %v456 = vsel %vm328, %v264, %v392
  %v457 = vsel %vm329, %v265, %v393
  %v458 = vsel %vm330, %v266, %v394
  %v459 = vsel %vm331, %v267, %v395
  %v460 = vsel %vm332, %v268, %v396
  %v461 = vsel %vm333, %v269, %v397
  %v462 = vsel %vm334, %v270, %v398
  %v463 = vsel %vm335, %v271, %v399
  %v464 = vsel %vm336, %v272, %v400
  %v465 = vsel %vm337, %v273, %v401
  %v466 = vsel %vm338, %v274, %v402
  %v467 = vsel %vm339, %v275, %v403
  %v468 = vsel %vm340, %v276, %v404
  %v469 = vsel %vm341, %v277, %v405
  %v470 = vsel %vm342, %v278, %v406
  %v471 = vsel %vm343, %v279, %v407
  %v472 = vsel %vm344, %v280, %v408
  %v473 = vsel %vm345, %v281, %v409
  %v474 = vsel %vm346, %v282, %v410
  %v475 = vsel %vm347, %v283, %v411
  %v476 = vsel %vm348, %v284, %v412
  %v477 = vsel %vm349, %v285, %v413
  %v478 = vsel %vm350, %v286, %v414
  %v479 = vsel %vm351, %v287, %v415
  %v480 = vpack.c.bf16 %v420, %v416
  %v481 = vpack.c.bf16 %v421, %v417
  %v482 = vpack.c.bf16 %v422, %v418
  %v483 = vpack.c.bf16 %v423, %v419
  %v484 = vpack.c.bf16 %v428, %v424
  %v485 = vpack.c.bf16 %v429, %v425
  %v486 = vpack.c.bf16 %v430, %v426
  %v487 = vpack.c.bf16 %v431, %v427
  %v488 = vpack.c.bf16 %v436, %v432
  %v489 = vpack.c.bf16 %v437, %v433
  %v490 = vpack.c.bf16 %v438, %v434
  %v491 = vpack.c.bf16 %v439, %v435
  %v492 = vpack.c.bf16 %v444, %v440
  %v493 = vpack.c.bf16 %v445, %v441
  %v494 = vpack.c.bf16 %v446, %v442
  %v495 = vpack.c.bf16 %v447, %v443
  %v496 = vpack.c.bf16 %v452, %v448
  %v497 = vpack.c.bf16 %v453, %v449
  %v498 = vpack.c.bf16 %v454, %v450
  %v499 = vpack.c.bf16 %v455, %v451
  %v500 = vpack.c.bf16 %v460, %v456
  %v501 = vpack.c.bf16 %v461, %v457
  %v502 = vpack.c.bf16 %v462, %v458
  %v503 = vpack.c.bf16 %v463, %v459
  %v504 = vpack.c.bf16 %v468, %v464
  %v505 = vpack.c.bf16 %v469, %v465
  %v506 = vpack.c.bf16 %v470, %v466
  %v507 = vpack.c.bf16 %v471, %v467
  %v508 = vpack.c.bf16 %v476, %v472
  %v509 = vpack.c.bf16 %v477, %v473
  %v510 = vpack.c.bf16 %v478, %v474
  %v511 = vpack.c.bf16 %v479, %v475
  %v512 = vld [vmem:[%s1] sm:$0xf]
  %v513 = vld [vmem:[%s1 + $0x4] sm:$0xf]
  %v514 = vld [vmem:[%s1 + $0x8] sm:$0xf]
  %v515 = vld [vmem:[%s1 + $0xc] sm:$0xf]
  %v516 = vld [vmem:[%s1 + $0x10] sm:$0xf]
  %v517 = vld [vmem:[%s1 + $0x14] sm:$0xf]
  %v518 = vld [vmem:[%s1 + $0x18] sm:$0xf]
  %v519 = vld [vmem:[%s1 + $0x1c] sm:$0xf]
  %v520 = vld [vmem:[%s1 + $0x20] sm:$0xf]
  %v521 = vld [vmem:[%s1 + $0x24] sm:$0xf]
  %v522 = vld [vmem:[%s1 + $0x28] sm:$0xf]
  %v523 = vld [vmem:[%s1 + $0x2c] sm:$0xf]
  %v524 = vld [vmem:[%s1 + $0x30] sm:$0xf]
  %v525 = vld [vmem:[%s1 + $0x34] sm:$0xf]
  %v526 = vld [vmem:[%s1 + $0x38] sm:$0xf]
  %v527 = vld [vmem:[%s1 + $0x3c] sm:$0xf]
  %v528 = vld [vmem:[%s1 + $0x40] sm:$0xf]
  %v529 = vld [vmem:[%s1 + $0x44] sm:$0xf]
  %v530 = vld [vmem:[%s1 + $0x48] sm:$0xf]
  %v531 = vld [vmem:[%s1 + $0x4c] sm:$0xf]
  %v532 = vld [vmem:[%s1 + $0x50] sm:$0xf]
  %v533 = vld [vmem:[%s1 + $0x54] sm:$0xf]
  %v534 = vld [vmem:[%s1 + $0x58] sm:$0xf]
  %v535 = vld [vmem:[%s1 + $0x5c] sm:$0xf]
  %v536 = vld [vmem:[%s1 + $0x60] sm:$0xf]
  %v537 = vld [vmem:[%s1 + $0x64] sm:$0xf]
  %v538 = vld [vmem:[%s1 + $0x68] sm:$0xf]
  %v539 = vld [vmem:[%s1 + $0x6c] sm:$0xf]
  %v540 = vld [vmem:[%s1 + $0x70] sm:$0xf]
  %v541 = vld [vmem:[%s1 + $0x74] sm:$0xf]
  %v542 = vld [vmem:[%s1 + $0x78] sm:$0xf]
  %v543 = vld [vmem:[%s1 + $0x7c] sm:$0xf]
  %v544 = vld [vmem:[%s1 + $0x80] sm:$0xf]
  %v545 = vld [vmem:[%s1 + $0x84] sm:$0xf]
  %v546 = vld [vmem:[%s1 + $0x88] sm:$0xf]
  %v547 = vld [vmem:[%s1 + $0x8c] sm:$0xf]
  %v548 = vld [vmem:[%s1 + $0x90] sm:$0xf]
  %v549 = vld [vmem:[%s1 + $0x94] sm:$0xf]
  %v550 = vld [vmem:[%s1 + $0x98] sm:$0xf]
  %v551 = vld [vmem:[%s1 + $0x9c] sm:$0xf]
  %v552 = vld [vmem:[%s1 + $0xa0] sm:$0xf]
  %v553 = vld [vmem:[%s1 + $0xa4] sm:$0xf]
  %v554 = vld [vmem:[%s1 + $0xa8] sm:$0xf]
  %v555 = vld [vmem:[%s1 + $0xac] sm:$0xf]
  %v556 = vld [vmem:[%s1 + $0xb0] sm:$0xf]
  %v557 = vld [vmem:[%s1 + $0xb4] sm:$0xf]
  %v558 = vld [vmem:[%s1 + $0xb8] sm:$0xf]
  %v559 = vld [vmem:[%s1 + $0xbc] sm:$0xf]
  %v560 = vld [vmem:[%s1 + $0xc0] sm:$0xf]
  %v561 = vld [vmem:[%s1 + $0xc4] sm:$0xf]
  %v562 = vld [vmem:[%s1 + $0xc8] sm:$0xf]
  %v563 = vld [vmem:[%s1 + $0xcc] sm:$0xf]
  %v564 = vld [vmem:[%s1 + $0xd0] sm:$0xf]
  %v565 = vld [vmem:[%s1 + $0xd4] sm:$0xf]
  %v566 = vld [vmem:[%s1 + $0xd8] sm:$0xf]
  %v567 = vld [vmem:[%s1 + $0xdc] sm:$0xf]
  %v568 = vld [vmem:[%s1 + $0xe0] sm:$0xf]
  %v569 = vld [vmem:[%s1 + $0xe4] sm:$0xf]
  %v570 = vld [vmem:[%s1 + $0xe8] sm:$0xf]
  %v571 = vld [vmem:[%s1 + $0xec] sm:$0xf]
  %v572 = vld [vmem:[%s1 + $0xf0] sm:$0xf]
  %v573 = vld [vmem:[%s1 + $0xf4] sm:$0xf]
  %v574 = vld [vmem:[%s1 + $0xf8] sm:$0xf]
  %v575 = vld [vmem:[%s1 + $0xfc] sm:$0xf]
  %v640 = vunpack.c.l.b16 %v512
  %v641 = vunpack.c.l.b16 %v513
  %v642 = vunpack.c.l.b16 %v514
  %v643 = vunpack.c.l.b16 %v515
  %v644 = vunpack.c.l.b16 %v516
  %v645 = vunpack.c.l.b16 %v517
  %v646 = vunpack.c.l.b16 %v518
  %v647 = vunpack.c.l.b16 %v519
  %v648 = vunpack.c.l.b16 %v520
  %v649 = vunpack.c.l.b16 %v521
  %v650 = vunpack.c.l.b16 %v522
  %v651 = vunpack.c.l.b16 %v523
  %v652 = vunpack.c.l.b16 %v524
  %v653 = vunpack.c.l.b16 %v525
  %v654 = vunpack.c.l.b16 %v526
  %v655 = vunpack.c.l.b16 %v527
  %v656 = vunpack.c.l.b16 %v528
  %v657 = vunpack.c.l.b16 %v529
  %v658 = vunpack.c.l.b16 %v530
  %v659 = vunpack.c.l.b16 %v531
  %v660 = vunpack.c.l.b16 %v532
  %v661 = vunpack.c.l.b16 %v533
  %v662 = vunpack.c.l.b16 %v534
  %v663 = vunpack.c.l.b16 %v535
  %v664 = vunpack.c.l.b16 %v536
  %v665 = vunpack.c.l.b16 %v537
  %v666 = vunpack.c.l.b16 %v538
  %v667 = vunpack.c.l.b16 %v539
  %v668 = vunpack.c.l.b16 %v540
  %v669 = vunpack.c.l.b16 %v541
  %v670 = vunpack.c.l.b16 %v542
  %v671 = vunpack.c.l.b16 %v543
  %v672 = vunpack.c.l.b16 %v544
  %v673 = vunpack.c.l.b16 %v545
  %v674 = vunpack.c.l.b16 %v546
  %v675 = vunpack.c.l.b16 %v547
  %v676 = vunpack.c.l.b16 %v548
  %v677 = vunpack.c.l.b16 %v549
  %v678 = vunpack.c.l.b16 %v550
  %v679 = vunpack.c.l.b16 %v551
  %v680 = vunpack.c.l.b16 %v552
  %v681 = vunpack.c.l.b16 %v553
  %v682 = vunpack.c.l.b16 %v554
  %v683 = vunpack.c.l.b16 %v555
  %v684 = vunpack.c.l.b16 %v556
  %v685 = vunpack.c.l.b16 %v557
  %v686 = vunpack.c.l.b16 %v558
  %v687 = vunpack.c.l.b16 %v559
  %v688 = vunpack.c.l.b16 %v560
  %v689 = vunpack.c.l.b16 %v561
  %v690 = vunpack.c.l.b16 %v562
  %v691 = vunpack.c.l.b16 %v563
  %v692 = vunpack.c.l.b16 %v564
  %v693 = vunpack.c.l.b16 %v565
  %v694 = vunpack.c.l.b16 %v566
  %v695 = vunpack.c.l.b16 %v567
  %v696 = vunpack.c.l.b16 %v568
  %v697 = vunpack.c.l.b16 %v569
  %v698 = vunpack.c.l.b16 %v570
  %v699 = vunpack.c.l.b16 %v571
  %v700 = vunpack.c.l.b16 %v572
  %v701 = vunpack.c.l.b16 %v573
  %v702 = vunpack.c.l.b16 %v574
  %v703 = vunpack.c.l.b16 %v575
  %v704 = vpack.c.b16 %v641, %v640
  %v705 = vpack.c.b16 %v643, %v642
  %v706 = vpack.c.b16 %v645, %v644
  %v707 = vpack.c.b16 %v647, %v646
  %v708 = vpack.c.b16 %v649, %v648
  %v709 = vpack.c.b16 %v651, %v650
  %v710 = vpack.c.b16 %v653, %v652
  %v711 = vpack.c.b16 %v655, %v654
  %v712 = vpack.c.b16 %v657, %v656
  %v713 = vpack.c.b16 %v659, %v658
  %v714 = vpack.c.b16 %v661, %v660
  %v715 = vpack.c.b16 %v663, %v662
  %v716 = vpack.c.b16 %v665, %v664
  %v717 = vpack.c.b16 %v667, %v666
  %v718 = vpack.c.b16 %v669, %v668
  %v719 = vpack.c.b16 %v671, %v670
  %v720 = vpack.c.b16 %v673, %v672
  %v721 = vpack.c.b16 %v675, %v674
  %v722 = vpack.c.b16 %v677, %v676
  %v723 = vpack.c.b16 %v679, %v678
  %v724 = vpack.c.b16 %v681, %v680
  %v725 = vpack.c.b16 %v683, %v682
  %v726 = vpack.c.b16 %v685, %v684
  %v727 = vpack.c.b16 %v687, %v686
  %v728 = vpack.c.b16 %v689, %v688
  %v729 = vpack.c.b16 %v691, %v690
  %v730 = vpack.c.b16 %v693, %v692
  %v731 = vpack.c.b16 %v695, %v694
  %v732 = vpack.c.b16 %v697, %v696
  %v733 = vpack.c.b16 %v699, %v698
  %v734 = vpack.c.b16 %v701, %v700
  %v735 = vpack.c.b16 %v703, %v702
  %768 = vmatprep.subr.bf16.mxu0 0
  %769 = vmatpush1.bf16.msra.mxu0 %v704
  %770 = vmatprep.subr.bf16.mxu0 0
  %771 = vmatpush1.bf16.msra.mxu0 %v705
  %772 = vmatprep.subr.bf16.mxu0 0
  %773 = vmatpush1.bf16.msra.mxu0 %v706
  %774 = vmatprep.subr.bf16.mxu0 0
  %775 = vmatpush1.bf16.msra.mxu0 %v707
  %776 = vmatprep.subr.bf16.mxu0 0
  %777 = vmatpush1.bf16.msra.mxu0 %v708
  %778 = vmatprep.subr.bf16.mxu0 0
  %779 = vmatpush1.bf16.msra.mxu0 %v709
  %780 = vmatprep.subr.bf16.mxu0 0
  %781 = vmatpush1.bf16.msra.mxu0 %v710
  %782 = vmatprep.subr.bf16.mxu0 0
  %783 = vmatpush1.bf16.msra.mxu0 %v711
  %784 = vmatprep.subr.bf16.mxu0 0
  %785 = vmatpush1.bf16.msra.mxu0 %v712
  %786 = vmatprep.subr.bf16.mxu0 0
  %787 = vmatpush1.bf16.msra.mxu0 %v713
  %788 = vmatprep.subr.bf16.mxu0 0
  %789 = vmatpush1.bf16.msra.mxu0 %v714
  %790 = vmatprep.subr.bf16.mxu0 0
  %791 = vmatpush1.bf16.msra.mxu0 %v715
  %792 = vmatprep.subr.bf16.mxu0 0
  %793 = vmatpush1.bf16.msra.mxu0 %v716
  %794 = vmatprep.subr.bf16.mxu0 0
  %795 = vmatpush1.bf16.msra.mxu0 %v717
  %796 = vmatprep.subr.bf16.mxu0 0
  %797 = vmatpush1.bf16.msra.mxu0 %v718
  %798 = vmatprep.subr.bf16.mxu0 0
  %799 = vmatpush1.bf16.msra.mxu0 %v719
  %800 = vmatprep.mubr.bf16.mxu0 %v481
  %801 = vmatmul.mubr.bf16.gmra.mrb[0].mxu0 %v480
  %v802 = vpop.f32.mrb[0].mxu0
  %v803 = vadd.f32 0.0, %v802
  %v804 = vpop.f32.mrb[0].mxu0
  %v805 = vpop.f32.mrb[0].mxu0
  %v806 = vadd.f32 0.0, %v805
  %v807 = vpop.f32.mrb[0].mxu0
  %808 = vmatprep.mubr.bf16.mxu0 %v485
  %809 = vmatmul.mubr.bf16.gmra.mrb[0].mxu0 %v484
  %v810 = vpop.f32.mrb[0].mxu0
  %v811 = vadd.f32 0.0, %v810
  %v812 = vpop.f32.mrb[0].mxu0
  %v813 = vpop.f32.mrb[0].mxu0
  %v814 = vadd.f32 0.0, %v813
  %v815 = vpop.f32.mrb[0].mxu0
  %816 = vmatprep.mubr.bf16.mxu0 %v489
  %817 = vmatmul.mubr.bf16.gmra.mrb[0].mxu0 %v488
  %v818 = vpop.f32.mrb[0].mxu0
  %v819 = vadd.f32 0.0, %v818
  %v820 = vpop.f32.mrb[0].mxu0
  %v821 = vpop.f32.mrb[0].mxu0
  %v822 = vadd.f32 0.0, %v821
  %v823 = vpop.f32.mrb[0].mxu0
  %824 = vmatprep.mubr.bf16.mxu0 %v493
  %825 = vmatmul.mubr.bf16.gmra.mrb[0].mxu0 %v492
  %v826 = vpop.f32.mrb[0].mxu0
  %v827 = vadd.f32 0.0, %v826
  %v828 = vpop.f32.mrb[0].mxu0
  %v829 = vpop.f32.mrb[0].mxu0
  %v830 = vadd.f32 0.0, %v829
  %v831 = vpop.f32.mrb[0].mxu0
  %832 = vmatprep.mubr.bf16.mxu0 %v497
  %833 = vmatmul.mubr.bf16.gmra.mrb[0].mxu0 %v496
  %v834 = vpop.f32.mrb[0].mxu0
  %v835 = vadd.f32 0.0, %v834
  %v836 = vpop.f32.mrb[0].mxu0
  %v837 = vpop.f32.mrb[0].mxu0
  %v838 = vadd.f32 0.0, %v837
  %v839 = vpop.f32.mrb[0].mxu0
  %840 = vmatprep.mubr.bf16.mxu0 %v501
  %841 = vmatmul.mubr.bf16.gmra.mrb[0].mxu0 %v500
  %v842 = vpop.f32.mrb[0].mxu0
  %v843 = vadd.f32 0.0, %v842
  %v844 = vpop.f32.mrb[0].mxu0
  %v845 = vpop.f32.mrb[0].mxu0
  %v846 = vadd.f32 0.0, %v845
  %v847 = vpop.f32.mrb[0].mxu0
  %848 = vmatprep.mubr.bf16.mxu0 %v505
  %849 = vmatmul.mubr.bf16.gmra.mrb[0].mxu0 %v504
  %v850 = vpop.f32.mrb[0].mxu0
  %v851 = vadd.f32 0.0, %v850
  %v852 = vpop.f32.mrb[0].mxu0
  %v853 = vpop.f32.mrb[0].mxu0
  %v854 = vadd.f32 0.0, %v853
  %v855 = vpop.f32.mrb[0].mxu0
  %856 = vmatprep.mubr.bf16.mxu0 %v509
  %857 = vmatmul.mubr.bf16.gmra.mrb[0].mxu0 %v508
  %v858 = vpop.f32.mrb[0].mxu0
  %v859 = vadd.f32 0.0, %v858
  %v860 = vpop.f32.mrb[0].mxu0
  %v861 = vpop.f32.mrb[0].mxu0
  %v862 = vadd.f32 0.0, %v861
  %v863 = vpop.f32.mrb[0].mxu0
  %864 = vdwg.mxu0
  %865 = vmatprep.subr.bf16.mxu0 0
  %866 = vmatpush1.bf16.msra.mxu0 %v720
  %867 = vmatprep.subr.bf16.mxu0 0
  %868 = vmatpush1.bf16.msra.mxu0 %v721
  %869 = vmatprep.subr.bf16.mxu0 0
  %870 = vmatpush1.bf16.msra.mxu0 %v722
  %871 = vmatprep.subr.bf16.mxu0 0
  %872 = vmatpush1.bf16.msra.mxu0 %v723
  %873 = vmatprep.subr.bf16.mxu0 0
  %874 = vmatpush1.bf16.msra.mxu0 %v724
  %875 = vmatprep.subr.bf16.mxu0 0
  %876 = vmatpush1.bf16.msra.mxu0 %v725
  %877 = vmatprep.subr.bf16.mxu0 0
  %878 = vmatpush1.bf16.msra.mxu0 %v726
  %879 = vmatprep.subr.bf16.mxu0 0
  %880 = vmatpush1.bf16.msra.mxu0 %v727
  %881 = vmatprep.subr.bf16.mxu0 0
  %882 = vmatpush1.bf16.msra.mxu0 %v728
  %883 = vmatprep.subr.bf16.mxu0 0
  %884 = vmatpush1.bf16.msra.mxu0 %v729
  %885 = vmatprep.subr.bf16.mxu0 0
  %886 = vmatpush1.bf16.msra.mxu0 %v730
  %887 = vmatprep.subr.bf16.mxu0 0
  %888 = vmatpush1.bf16.msra.mxu0 %v731
  %889 = vmatprep.subr.bf16.mxu0 0
  %890 = vmatpush1.bf16.msra.mxu0 %v732
  %891 = vmatprep.subr.bf16.mxu0 0
  %892 = vmatpush1.bf16.msra.mxu0 %v733
  %893 = vmatprep.subr.bf16.mxu0 0
  %894 = vmatpush1.bf16.msra.mxu0 %v734
  %895 = vmatprep.subr.bf16.mxu0 0
  %896 = vmatpush1.bf16.msra.mxu0 %v735
  %897 = vmatprep.mubr.bf16.mxu0 %v483
  %898 = vmatmul.mubr.bf16.gmra.mrb[0].mxu0 %v482
  %v899 = vpop.f32.mrb[0].mxu0
  %v900 = vadd.f32 %v803, %v899
  %v901 = vpop.f32.mrb[0].mxu0
  %v902 = vpop.f32.mrb[0].mxu0
  %v903 = vadd.f32 %v806, %v902
  %v904 = vpop.f32.mrb[0].mxu0
  %905 = vmatprep.mubr.bf16.mxu0 %v487
  %906 = vmatmul.mubr.bf16.gmra.mrb[0].mxu0 %v486
  %v907 = vpop.f32.mrb[0].mxu0
  %v908 = vadd.f32 %v811, %v907
  %v909 = vpop.f32.mrb[0].mxu0
  %v910 = vpop.f32.mrb[0].mxu0
  %v911 = vadd.f32 %v814, %v910
  %v912 = vpop.f32.mrb[0].mxu0
  %913 = vmatprep.mubr.bf16.mxu0 %v491
  %914 = vmatmul.mubr.bf16.gmra.mrb[0].mxu0 %v490
  %v915 = vpop.f32.mrb[0].mxu0
  %v916 = vadd.f32 %v819, %v915
  %v917 = vpop.f32.mrb[0].mxu0
  %v918 = vpop.f32.mrb[0].mxu0
  %v919 = vadd.f32 %v822, %v918
  %v920 = vpop.f32.mrb[0].mxu0
  %921 = vmatprep.mubr.bf16.mxu0 %v495
  %922 = vmatmul.mubr.bf16.gmra.mrb[0].mxu0 %v494
  %v923 = vpop.f32.mrb[0].mxu0
  %v924 = vadd.f32 %v827, %v923
  %v925 = vpop.f32.mrb[0].mxu0
  %v926 = vpop.f32.mrb[0].mxu0
  %v927 = vadd.f32 %v830, %v926
  %v928 = vpop.f32.mrb[0].mxu0
  %929 = vmatprep.mubr.bf16.mxu0 %v499
  %930 = vmatmul.mubr.bf16.gmra.mrb[0].mxu0 %v498
  %v931 = vpop.f32.mrb[0].mxu0
  %v932 = vadd.f32 %v835, %v931
  %v933 = vpop.f32.mrb[0].mxu0
  %v934 = vpop.f32.mrb[0].mxu0
  %v935 = vadd.f32 %v838, %v934
  %v936 = vpop.f32.mrb[0].mxu0
  %937 = vmatprep.mubr.bf16.mxu0 %v503
  %938 = vmatmul.mubr.bf16.gmra.mrb[0].mxu0 %v502
  %v939 = vpop.f32.mrb[0].mxu0
  %v940 = vadd.f32 %v843, %v939
  %v941 = vpop.f32.mrb[0].mxu0
  %v942 = vpop.f32.mrb[0].mxu0
  %v943 = vadd.f32 %v846, %v942
  %v944 = vpop.f32.mrb[0].mxu0
  %945 = vmatprep.mubr.bf16.mxu0 %v507
  %946 = vmatmul.mubr.bf16.gmra.mrb[0].mxu0 %v506
  %v947 = vpop.f32.mrb[0].mxu0
  %v948 = vadd.f32 %v851, %v947
  %v949 = vpop.f32.mrb[0].mxu0
  %v950 = vpop.f32.mrb[0].mxu0
  %v951 = vadd.f32 %v854, %v950
  %v952 = vpop.f32.mrb[0].mxu0
  %953 = vmatprep.mubr.bf16.mxu0 %v511
  %954 = vmatmul.mubr.bf16.gmra.mrb[0].mxu0 %v510
  %v955 = vpop.f32.mrb[0].mxu0
  %v956 = vadd.f32 %v859, %v955
  %v957 = vpop.f32.mrb[0].mxu0
  %v958 = vpop.f32.mrb[0].mxu0
  %v959 = vadd.f32 %v862, %v958
  %v960 = vpop.f32.mrb[0].mxu0
  %961 = vdwg.mxu0
  %v962 = vpack.c.bf16 %v903, %v900
  %v963 = vpack.c.bf16 %v911, %v908
  %v964 = vpack.c.bf16 %v919, %v916
  %v965 = vpack.c.bf16 %v927, %v924
  %v966 = vpack.c.bf16 %v935, %v932
  %v967 = vpack.c.bf16 %v943, %v940
  %v968 = vpack.c.bf16 %v951, %v948
  %v969 = vpack.c.bf16 %v959, %v956
  %v978 = vunpack.c.l.b16 %v962
  %v979 = vunpack.c.h.b16 %v962
  %v980 = vunpack.c.l.b16 %v963
  %v981 = vunpack.c.h.b16 %v963
  %v982 = vunpack.c.l.b16 %v964
  %v983 = vunpack.c.h.b16 %v964
  %v984 = vunpack.c.l.b16 %v965
  %v985 = vunpack.c.h.b16 %v965
  %v986 = vunpack.c.l.b16 %v966
  %v987 = vunpack.c.h.b16 %v966
  %v988 = vunpack.c.l.b16 %v967
  %v989 = vunpack.c.h.b16 %v967
  %v990 = vunpack.c.l.b16 %v968
  %v991 = vunpack.c.h.b16 %v968
  %v992 = vunpack.c.l.b16 %v969
  %v993 = vunpack.c.h.b16 %v969
  %v994 = vpack.c.b16 %v978, %v978
  %v995 = vpack.c.b16 %v979, %v979
  %v996 = vpack.c.b16 %v980, %v980
  %v997 = vpack.c.b16 %v981, %v981
  %v998 = vpack.c.b16 %v982, %v982
  %v999 = vpack.c.b16 %v983, %v983
  %v1000 = vpack.c.b16 %v984, %v984
  %v1001 = vpack.c.b16 %v985, %v985
  %v1002 = vpack.c.b16 %v986, %v986
  %v1003 = vpack.c.b16 %v987, %v987
  %v1004 = vpack.c.b16 %v988, %v988
  %v1005 = vpack.c.b16 %v989, %v989
  %v1006 = vpack.c.b16 %v990, %v990
  %v1007 = vpack.c.b16 %v991, %v991
  %v1008 = vpack.c.b16 %v992, %v992
  %v1009 = vpack.c.b16 %v993, %v993
  %vm1026 = vcmask 781312
  %1027 = vst.msk [vmem:[%s4] sm:$0xf] %vm1026, %v994
  %1028 = vst.msk [vmem:[%s4 + $0x4] sm:$0xf] %vm1026, %v995
  %1029 = vst.msk [vmem:[%s4 + $0x8] sm:$0xf] %vm1026, %v996
  %1030 = vst.msk [vmem:[%s4 + $0xc] sm:$0xf] %vm1026, %v997
  %1031 = vst.msk [vmem:[%s4 + $0x10] sm:$0xf] %vm1026, %v998
  %1032 = vst.msk [vmem:[%s4 + $0x14] sm:$0xf] %vm1026, %v999
  %1033 = vst.msk [vmem:[%s4 + $0x18] sm:$0xf] %vm1026, %v1000
  %1034 = vst.msk [vmem:[%s4 + $0x1c] sm:$0xf] %vm1026, %v1001
  %1035 = vst.msk [vmem:[%s4 + $0x20] sm:$0xf] %vm1026, %v1002
  %1036 = vst.msk [vmem:[%s4 + $0x24] sm:$0xf] %vm1026, %v1003
  %1037 = vst.msk [vmem:[%s4 + $0x28] sm:$0xf] %vm1026, %v1004
  %1038 = vst.msk [vmem:[%s4 + $0x2c] sm:$0xf] %vm1026, %v1005
  %1039 = vst.msk [vmem:[%s4 + $0x30] sm:$0xf] %vm1026, %v1006
  %1040 = vst.msk [vmem:[%s4 + $0x34] sm:$0xf] %vm1026, %v1007
  %1041 = vst.msk [vmem:[%s4 + $0x38] sm:$0xf] %vm1026, %v1008
  %1042 = vst.msk [vmem:[%s4 + $0x3c] sm:$0xf] %vm1026, %v1009
  %vm1043 = vcmask 785408
  %v1044 = vsel %vm1043, %v900, 0.0
  %v1045 = vsel %vm1043, %v903, 0.0
  %v1046 = vadd.f32 %v1044, %v1045
  %v1047 = vsel %vm1043, %v908, 0.0
  %v1048 = vadd.f32 %v1046, %v1047
  %v1049 = vsel %vm1043, %v911, 0.0
  %v1050 = vadd.f32 %v1048, %v1049
  %v1051 = vsel %vm1043, %v916, 0.0
  %v1052 = vadd.f32 %v1050, %v1051
  %v1053 = vsel %vm1043, %v919, 0.0
  %v1054 = vadd.f32 %v1052, %v1053
  %v1055 = vsel %vm1043, %v924, 0.0
  %v1056 = vadd.f32 %v1054, %v1055
  %v1057 = vsel %vm1043, %v927, 0.0
  %v1058 = vadd.f32 %v1056, %v1057
  %v1059 = vsel %vm1043, %v932, 0.0
  %v1060 = vadd.f32 %v1058, %v1059
  %v1061 = vsel %vm1043, %v935, 0.0
  %v1062 = vadd.f32 %v1060, %v1061
  %v1063 = vsel %vm1043, %v940, 0.0
  %v1064 = vadd.f32 %v1062, %v1063
  %v1065 = vsel %vm1043, %v943, 0.0
  %v1066 = vadd.f32 %v1064, %v1065
  %v1067 = vsel %vm1043, %v948, 0.0
  %v1068 = vadd.f32 %v1066, %v1067
  %v1069 = vsel %vm1043, %v951, 0.0
  %v1070 = vadd.f32 %v1068, %v1069
  %v1071 = vsel %vm1043, %v956, 0.0
  %v1072 = vadd.f32 %v1070, %v1071
  %v1073 = vsel %vm1043, %v959, 0.0
  %v1074 = vadd.f32 %v1072, %v1073
  %v1075 = vrot.slane %v1074, 4
  %v1076 = vadd.f32 %v1074, %v1075
  %v1077 = vrot.slane %v1076, 2
  %v1078 = vadd.f32 %v1076, %v1077
  %v1079 = vrot.slane %v1078, 1
  %v1080 = vadd.f32 %v1078, %v1079
  %v1081 = vmul.f32 %v900, %v900
  %v1082 = vmul.f32 %v903, %v903
  %v1083 = vmul.f32 %v908, %v908
  %v1084 = vmul.f32 %v911, %v911
  %v1085 = vmul.f32 %v916, %v916
  %v1086 = vmul.f32 %v919, %v919
  %v1087 = vmul.f32 %v924, %v924
  %v1088 = vmul.f32 %v927, %v927
  %v1089 = vmul.f32 %v932, %v932
  %v1090 = vmul.f32 %v935, %v935
  %v1091 = vmul.f32 %v940, %v940
  %v1092 = vmul.f32 %v943, %v943
  %v1093 = vmul.f32 %v948, %v948
  %v1094 = vmul.f32 %v951, %v951
  %v1095 = vmul.f32 %v956, %v956
  %v1096 = vmul.f32 %v959, %v959
  %v1097 = vsel %vm1043, %v1081, 0.0
  %v1098 = vsel %vm1043, %v1082, 0.0
  %v1099 = vadd.f32 %v1097, %v1098
  %v1100 = vsel %vm1043, %v1083, 0.0
  %v1101 = vadd.f32 %v1099, %v1100
  %v1102 = vsel %vm1043, %v1084, 0.0
  %v1103 = vadd.f32 %v1101, %v1102
  %v1104 = vsel %vm1043, %v1085, 0.0
  %v1105 = vadd.f32 %v1103, %v1104
  %v1106 = vsel %vm1043, %v1086, 0.0
  %v1107 = vadd.f32 %v1105, %v1106
  %v1108 = vsel %vm1043, %v1087, 0.0
  %v1109 = vadd.f32 %v1107, %v1108
  %v1110 = vsel %vm1043, %v1088, 0.0
  %v1111 = vadd.f32 %v1109, %v1110
  %v1112 = vsel %vm1043, %v1089, 0.0
  %v1113 = vadd.f32 %v1111, %v1112
  %v1114 = vsel %vm1043, %v1090, 0.0
  %v1115 = vadd.f32 %v1113, %v1114
  %v1116 = vsel %vm1043, %v1091, 0.0
  %v1117 = vadd.f32 %v1115, %v1116
  %v1118 = vsel %vm1043, %v1092, 0.0
  %v1119 = vadd.f32 %v1117, %v1118
  %v1120 = vsel %vm1043, %v1093, 0.0
  %v1121 = vadd.f32 %v1119, %v1120
  %v1122 = vsel %vm1043, %v1094, 0.0
  %v1123 = vadd.f32 %v1121, %v1122
  %v1124 = vsel %vm1043, %v1095, 0.0
  %v1125 = vadd.f32 %v1123, %v1124
  %v1126 = vsel %vm1043, %v1096, 0.0
  %v1127 = vadd.f32 %v1125, %v1126
  %v1128 = vrot.slane %v1127, 4
  %v1129 = vadd.f32 %v1127, %v1128
  %v1130 = vrot.slane %v1129, 2
  %v1131 = vadd.f32 %v1129, %v1130
  %v1132 = vrot.slane %v1131, 1
  %v1133 = vadd.f32 %v1131, %v1132
  %vm1134 = vcmask 1040384
  %v1135 = vsel %vm1134, %v1080, %v1133
  %vm1136 = vcmask 1041408
  %v1137 = vsel %vm1136, %v1135, 0.0
  %1138 = vst.msk [vmem:[%s5] sm:$0xff] %vm1043, %v1137
  // Predicated region
  $region18: #{discriminator_forward.5} parent=0 // pred_check
    _
  $region19: #{discriminator_forward.5} parent=0 // pred_check_branch
    %1140 = sbr.rel (0) target = $region21
  $region20: #{discriminator_forward.5} parent=0 // pred_region
    _
  $region21: #{discriminator_forward.5} parent=0 // pred_fallthru
    _
  // Predicated region
  $region22: #{discriminator_forward.5} parent=0 // pred_check
    _
  $region23: #{discriminator_forward.5} parent=0 // pred_check_branch
    %1142 = sbr.rel (0) target = $region25
  $region24: #{discriminator_forward.5} parent=0 // pred_region
    _
  $region25: #{discriminator_forward.5} parent=0 // pred_fallthru
    _
  // Predicated region
  $region26: #{discriminator_forward.5} parent=0 // pred_check
    _
  $region27: #{discriminator_forward.5} parent=0 // pred_check_branch
    %1144 = sbr.rel (0) target = $region29
  $region28: #{discriminator_forward.5} parent=0 // pred_region
    _
  $region29: #{discriminator_forward.5} parent=0 // pred_fallthru
    _
  // Predicated region
  $region30: #{discriminator_forward.5} parent=0 // pred_check
    _
  $region31: #{discriminator_forward.5} parent=0 // pred_check_branch
    %1146 = sbr.rel (0) target = $region33
  $region32: #{discriminator_forward.5} parent=0 // pred_region
    _
  $region33: #{discriminator_forward.5} parent=0 // pred_fallthru
    _

// kernel: tile.43
$region0: #{tile.43}
  #allocation0 [shape = 's32[1]{0}', space=sflag, size = 0x4, scoped, tag = 'scoped memory for tile.43']
  %s0 = inlined_call_operand.vmem [shape: f32[96], index: 0, kind: input, shape index: {}]
  %s1 = inlined_call_operand.vmem [shape: f32[8,96], index: 1, kind: output, shape index: {}]
  // Predicated region
  $region2: #{tile.43} parent=0 // pred_check
    _
  $region3: #{tile.43} parent=0 // pred_check_branch
    %3 = sbr.rel (0) target = $region5
  $region4: #{tile.43} parent=0 // pred_region
    _
  $region5: #{tile.43} parent=0 // pred_fallthru
    _
  %v4 = vld [vmem:[%s0] ss:$0 sm:$0xff]
  %5 = vst [vmem:[%s1] sm:$0xff] %v4

// kernel: tile.44
$region0: #{tile.44}
  %s0 = inlined_call_operand.vmem [shape: f32[8,96], index: 0, kind: input, shape index: {}]
  %s1 = inlined_call_operand.vmem [shape: f32[1,768], index: 1, kind: output, shape index: {}]
  $region1: #{tile.44} parent=0
    #allocation0 [shape = 'u8[24576]{0}', space=vmem, size = 0x6000, scoped, tag = 'scoped mem for output reshape']
    %s2 = smov 3
    %v3 = vld [vmem:[%s0] ss:$4 sm:%s2]
    %vm4 = vcmask 785408
    %5 = vst.msk [vmem:[#allocation0] ss:$24 sm:$0x3] %vm4, %v3
    %s6 = scalar_lea.vmem %s0, 5
    %s7 = smov 3
    %v8 = vld [vmem:[%s6] ss:$-4 sm:%s7]
    %s9 = scalar_lea.vmem %s0, 1
    %s10 = smov 3
    %v11 = vld [vmem:[%s9] ss:$4 sm:%s10]
    %vm12 = vcmask 261120
    %v13 = vsel %vm12, %v11, %v8
    %14 = vrot.lane.b32.xlu0 %v13, 96
    %v15 = vpop.permute.xlu0 %14
    %vm16 = vcmask 523264
    %s17 = scalar_lea.vmem [#allocation0], 32
    %18 = vst.msk [vmem:[%s17] ss:$-24 sm:$0x3] %vm16, %v15
    %vm19 = vcmask 1048320
    %20 = vst.msk [vmem:[#allocation0] ss:$24 sm:$0x3] %vm19, %v15
    %s21 = scalar_lea.vmem %s0, 6
    %s22 = smov 3
    %v23 = vld [vmem:[%s21] ss:$-4 sm:%s22]
    %s24 = scalar_lea.vmem %s0, 6
    %s25 = smov 3
    %v26 = vld [vmem:[%s24] ss:$-4 sm:%s25]
    %vm27 = vcmask 523264
    %v28 = vsel %vm27, %v26, %v23
    %29 = vrot.lane.b32.xlu0 %v28, 64
    %v30 = vpop.permute.xlu0 %29
    %vm31 = vcmask 261120
    %s32 = scalar_lea.vmem [#allocation0], 40
    %33 = vst.msk [vmem:[%s32] ss:$-24 sm:$0x3] %vm31, %v30
    %vm34 = vcmask 1048064
    %s35 = scalar_lea.vmem [#allocation0], 32
    %36 = vst.msk [vmem:[%s35] ss:$-24 sm:$0x3] %vm34, %v30
    %s37 = scalar_lea.vmem %s0, 7
    %s38 = smov 3
    %v39 = vld [vmem:[%s37] ss:$-4 sm:%s38]
    %40 = vrot.lane.b32.xlu0 %v39, 32
    %v41 = vpop.permute.xlu0 %40
    %vm42 = vcmask 1047808
    %s43 = scalar_lea.vmem [#allocation0], 40
    %44 = vst.msk [vmem:[%s43] ss:$-24 sm:$0x3] %vm42, %v41
    %s46 = sshllo.u32 0, 1
    %v48 = vld [vmem:[#allocation0] sm:%s46]
    %s49 = sshllo.u32 0, 1
    %50 = vst [vmem:[%s1] sm:%s49] %v48
    %s51 = scalar_lea.vmem [#allocation0], 8
    %v52 = vld [vmem:[%s51] sm:%s46]
    %s53 = sshllo.u32 0, 1
    %s54 = scalar_lea.vmem %s1, 1
    %55 = vst [vmem:[%s54] sm:%s53] %v52
    %s56 = scalar_lea.vmem [#allocation0], 16
    %v57 = vld [vmem:[%s56] sm:%s46]
    %s58 = sshllo.u32 0, 1
    %s59 = smul.addr 1, 2
    %s60 = scalar_lea.vmem %s1, %s59
    %61 = vst [vmem:[%s60] sm:%s58] %v57
    %s62 = scalar_lea.vmem [#allocation0], 24
    %v63 = vld [vmem:[%s62] sm:%s46]
    %s64 = sshllo.u32 0, 1
    %s65 = smul.addr 1, 3
    %s66 = scalar_lea.vmem %s1, %s65
    %67 = vst [vmem:[%s66] sm:%s64] %v63
    %s68 = scalar_lea.vmem [#allocation0], 32
    %v69 = vld [vmem:[%s68] sm:%s46]
    %s70 = sshllo.u32 0, 1
    %s71 = smul.addr 1, 4
    %s72 = scalar_lea.vmem %s1, %s71
    %73 = vst [vmem:[%s72] sm:%s70] %v69
    %s74 = scalar_lea.vmem [#allocation0], 40
    %v75 = vld [vmem:[%s74] sm:%s46]
    %s76 = sshllo.u32 0, 1
    %s77 = smul.addr 1, 5
    %s78 = scalar_lea.vmem %s1, %s77
    %79 = vst [vmem:[%s78] sm:%s76] %v75

// kernel: tile.53
$region0: #{tile.53}
  #allocation0 [shape = 's32[1]{0}', space=sflag, size = 0x4, scoped, tag = 'scoped memory for tile.53']
  %s0 = inlined_call_operand.vmem [shape: f32[128], index: 0, kind: input, shape index: {}]
  %s1 = inlined_call_operand.vmem [shape: f32[8,128], index: 1, kind: output, shape index: {}]
  // Predicated region
  $region2: #{tile.53} parent=0 // pred_check
    _
  $region3: #{tile.53} parent=0 // pred_check_branch
    %3 = sbr.rel (0) target = $region5
  $region4: #{tile.53} parent=0 // pred_region
    _
  $region5: #{tile.53} parent=0 // pred_fallthru
    _
  %v4 = vld [vmem:[%s0] ss:$0 sm:$0xff]
  %5 = vst [vmem:[%s1] sm:$0xff] %v4

// kernel: discriminator_forward.6
$region0: #{discriminator_forward.6}
  #allocation0 [shape = 'u32[]', space=smem, size = 0x4, offset = 0x4, fixed_abs, tag = 'smem constant byte address 0x4 - core index']
  #allocation1 [shape = 'u32[144,128]{1,0:T(1,128)}', space=vmem, size = 0x12000, scoped, tag = 'internal scratch']
  %s0 = inlined_call_operand.vmem [shape: bf16[16,768], index: 0, kind: input, shape index: {}]
  %s1 = inlined_call_operand.vmem [shape: bf16[768,128], index: 1, kind: input, shape index: {}]
  %s2 = inlined_call_operand.vmem [shape: f32[1,768], index: 2, kind: input, shape index: {}]
  %s3 = inlined_call_operand.vmem [shape: f32[1,768], index: 3, kind: input, shape index: {}]
  %s4 = inlined_call_operand.vmem [shape: bf16[16,128], index: 4, kind: output, shape index: {0}]
  %s5 = inlined_call_operand.vmem [shape: f32[8,128], index: 5, kind: output, shape index: {1}]
  %6 = xla_tuple %s4, %s5
  %s7 = sld [smem:[#allocation0]]
  $region34: #{discriminator_forward.6} parent=0
    _
  %s9 = ssub.s32 1, %s7
  %s10 = scalar_select 0, %s9, %s7
  // Predicated region
  $region2: #{discriminator_forward.6} parent=0 // pred_check
    _
  $region3: #{discriminator_forward.6} parent=0 // pred_check_branch
    %12 = sbr.rel (0) target = $region5
  $region4: #{discriminator_forward.6} parent=0 // pred_region
    _
  $region5: #{discriminator_forward.6} parent=0 // pred_fallthru
    _
  // Predicated region
  $region6: #{discriminator_forward.6} parent=0 // pred_check
    _
  $region7: #{discriminator_forward.6} parent=0 // pred_check_branch
    %14 = sbr.rel (0) target = $region9
  $region8: #{discriminator_forward.6} parent=0 // pred_region
    _
  $region9: #{discriminator_forward.6} parent=0 // pred_fallthru
    _
  // Predicated region
  $region10: #{discriminator_forward.6} parent=0 // pred_check
    _
  $region11: #{discriminator_forward.6} parent=0 // pred_check_branch
    %16 = sbr.rel (0) target = $region13
  $region12: #{discriminator_forward.6} parent=0 // pred_region
    _
  $region13: #{discriminator_forward.6} parent=0 // pred_fallthru
    _
  // Predicated region
  $region14: #{discriminator_forward.6} parent=0 // pred_check
    _
  $region15: #{discriminator_forward.6} parent=0 // pred_check_branch
    %18 = sbr.rel (0) target = $region17
  $region16: #{discriminator_forward.6} parent=0 // pred_region
    _
  $region17: #{discriminator_forward.6} parent=0 // pred_fallthru
    _
  %v20 = vld [vmem:[%s0] sm:$0xff]
  %v21 = vld [vmem:[%s0 + $0x8] sm:$0xff]
  %v22 = vld [vmem:[%s0 + $0x10] sm:$0xff]
  %v23 = vld [vmem:[%s0 + $0x18] sm:$0xff]
  %v24 = vld [vmem:[%s0 + $0x20] sm:$0xff]
  %v25 = vld [vmem:[%s0 + $0x28] sm:$0xff]
  %v26 = vunpack.c.l.bf16 %v20
  %v27 = vunpack.c.h.bf16 %v20
  %v28 = vunpack.c.l.bf16 %v21
  %v29 = vunpack.c.h.bf16 %v21
  %v30 = vunpack.c.l.bf16 %v22
  %v31 = vunpack.c.h.bf16 %v22
  %v32 = vunpack.c.l.bf16 %v23
  %v33 = vunpack.c.h.bf16 %v23
  %v34 = vunpack.c.l.bf16 %v24
  %v35 = vunpack.c.h.bf16 %v24
  %v36 = vunpack.c.l.bf16 %v25
  %v37 = vunpack.c.h.bf16 %v25
  %v38 = vld [vmem:[%s2] sm:$0x3f]
  %v40 = vlaneseq
  %v41 = vshrl.u32 %v40, 7
  %v42 = vsub.s32 0, %v41
  %v43 = vrot.slane %v38, %v42
  %v44 = vlaneseq
  %v45 = vshrl.u32 %v44, 7
  %v46 = vsub.s32 1, %v45
  %v47 = vrot.slane %v38, %v46
  %v48 = vlaneseq
  %v49 = vshrl.u32 %v48, 7
  %v50 = vsub.s32 2, %v49
  %v51 = vrot.slane %v38, %v50
  %v52 = vlaneseq
  %v53 = vshrl.u32 %v52, 7
  %v54 = vsub.s32 3, %v53
  %v55 = vrot.slane %v38, %v54
  %v56 = vlaneseq
  %v57 = vshrl.u32 %v56, 7
  %v58 = vsub.s32 4, %v57
  %v59 = vrot.slane %v38, %v58
  %v60 = vlaneseq
  %v61 = vshrl.u32 %v60, 7
  %v62 = vsub.s32 5, %v61
  %v63 = vrot.slane %v38, %v62
  %v70 = vmul.f32 %v26, %v43
  %v71 = vmul.f32 %v27, %v47
  %v72 = vmul.f32 %v28, %v51
  %v73 = vmul.f32 %v29, %v55
  %v74 = vmul.f32 %v30, %v59
  %v75 = vmul.f32 %v31, %v63
  %v76 = vmul.f32 %v32, %v43
  %v77 = vmul.f32 %v33, %v47
  %v78 = vmul.f32 %v34, %v51
  %v79 = vmul.f32 %v35, %v55
  %v80 = vmul.f32 %v36, %v59
  %v81 = vmul.f32 %v37, %v63
  %v82 = vld [vmem:[%s3] sm:$0x3f]
  %v84 = vlaneseq
  %v85 = vshrl.u32 %v84, 7
  %v86 = vsub.s32 0, %v85
  %v87 = vrot.slane %v82, %v86
  %v88 = vlaneseq
  %v89 = vshrl.u32 %v88, 7
  %v90 = vsub.s32 1, %v89
  %v91 = vrot.slane %v82, %v90
  %v92 = vlaneseq
  %v93 = vshrl.u32 %v92, 7
  %v94 = vsub.s32 2, %v93
  %v95 = vrot.slane %v82, %v94
  %v96 = vlaneseq
  %v97 = vshrl.u32 %v96, 7
  %v98 = vsub.s32 3, %v97
  %v99 = vrot.slane %v82, %v98
  %v100 = vlaneseq
  %v101 = vshrl.u32 %v100, 7
  %v102 = vsub.s32 4, %v101
  %v103 = vrot.slane %v82, %v102
  %v104 = vlaneseq
  %v105 = vshrl.u32 %v104, 7
  %v106 = vsub.s32 5, %v105
  %v107 = vrot.slane %v82, %v106
  %v114 = vadd.f32 %v70, %v87
  %v115 = vadd.f32 %v71, %v91
  %v116 = vadd.f32 %v72, %v95
  %v117 = vadd.f32 %v73, %v99
  %v118 = vadd.f32 %v74, %v103
  %v119 = vadd.f32 %v75, %v107
  %v120 = vadd.f32 %v76, %v87
  %v121 = vadd.f32 %v77, %v91
  %v122 = vadd.f32 %v78, %v95
  %v123 = vadd.f32 %v79, %v99
  %v124 = vadd.f32 %v80, %v103
  %v125 = vadd.f32 %v81, %v107
  %vm126 = vcmp.ge.f32.partialorder %v114, 0.0
  %vm127 = vcmp.ge.f32.partialorder %v115, 0.0
  %vm128 = vcmp.ge.f32.partialorder %v116, 0.0
  %vm129 = vcmp.ge.f32.partialorder %v117, 0.0
  %vm130 = vcmp.ge.f32.partialorder %v118, 0.0
  %vm131 = vcmp.ge.f32.partialorder %v119, 0.0
  %vm132 = vcmp.ge.f32.partialorder %v120, 0.0
  %vm133 = vcmp.ge.f32.partialorder %v121, 0.0
  %vm134 = vcmp.ge.f32.partialorder %v122, 0.0
  %vm135 = vcmp.ge.f32.partialorder %v123, 0.0
  %vm136 = vcmp.ge.f32.partialorder %v124, 0.0
  %vm137 = vcmp.ge.f32.partialorder %v125, 0.0
  %v138 = vmul.f32 %v114, 0.2
  %v139 = vmul.f32 %v115, 0.2
  %v140 = vmul.f32 %v116, 0.2
  %v141 = vmul.f32 %v117, 0.2
  %v142 = vmul.f32 %v118, 0.2
  %v143 = vmul.f32 %v119, 0.2
  %v144 = vmul.f32 %v120, 0.2
  %v145 = vmul.f32 %v121, 0.2
  %v146 = vmul.f32 %v122, 0.2
  %v147 = vmul.f32 %v123, 0.2
  %v148 = vmul.f32 %v124, 0.2
  %v149 = vmul.f32 %v125, 0.2
  %v150 = vsel %vm126, %v114, %v138
  %v151 = vsel %vm127, %v115, %v139
  %v152 = vsel %vm128, %v116, %v140
  %v153 = vsel %vm129, %v117, %v141
  %v154 = vsel %vm130, %v118, %v142
  %v155 = vsel %vm131, %v119, %v143
  %v156 = vsel %vm132, %v120, %v144
  %v157 = vsel %vm133, %v121, %v145
  %v158 = vsel %vm134, %v122, %v146
  %v159 = vsel %vm135, %v123, %v147
  %v160 = vsel %vm136, %v124, %v148
  %v161 = vsel %vm137, %v125, %v149
  %v162 = vpack.c.bf16 %v156, %v150
  %v163 = vpack.c.bf16 %v157, %v151
  %v164 = vpack.c.bf16 %v158, %v152
  %v165 = vpack.c.bf16 %v159, %v153
  %v166 = vpack.c.bf16 %v160, %v154
  %v167 = vpack.c.bf16 %v161, %v155
  %v168 = vld [vmem:[%s1] sm:$0xf]
  %v169 = vld [vmem:[%s1 + $0x4] sm:$0xf]
  %v170 = vld [vmem:[%s1 + $0x8] sm:$0xf]
  %v171 = vld [vmem:[%s1 + $0xc] sm:$0xf]
  %v172 = vld [vmem:[%s1 + $0x10] sm:$0xf]
  %v173 = vld [vmem:[%s1 + $0x14] sm:$0xf]
  %v174 = vld [vmem:[%s1 + $0x18] sm:$0xf]
  %v175 = vld [vmem:[%s1 + $0x1c] sm:$0xf]
  %v176 = vld [vmem:[%s1 + $0x20] sm:$0xf]
  %v177 = vld [vmem:[%s1 + $0x24] sm:$0xf]
  %v178 = vld [vmem:[%s1 + $0x28] sm:$0xf]
  %v179 = vld [vmem:[%s1 + $0x2c] sm:$0xf]
  %v180 = vld [vmem:[%s1 + $0x30] sm:$0xf]
  %v181 = vld [vmem:[%s1 + $0x34] sm:$0xf]
  %v182 = vld [vmem:[%s1 + $0x38] sm:$0xf]
  %v183 = vld [vmem:[%s1 + $0x3c] sm:$0xf]
  %v184 = vld [vmem:[%s1 + $0x40] sm:$0xf]
  %v185 = vld [vmem:[%s1 + $0x44] sm:$0xf]
  %v186 = vld [vmem:[%s1 + $0x48] sm:$0xf]
  %v187 = vld [vmem:[%s1 + $0x4c] sm:$0xf]
  %v188 = vld [vmem:[%s1 + $0x50] sm:$0xf]
  %v189 = vld [vmem:[%s1 + $0x54] sm:$0xf]
  %v190 = vld [vmem:[%s1 + $0x58] sm:$0xf]
  %v191 = vld [vmem:[%s1 + $0x5c] sm:$0xf]
  %v192 = vld [vmem:[%s1 + $0x60] sm:$0xf]
  %v193 = vld [vmem:[%s1 + $0x64] sm:$0xf]
  %v194 = vld [vmem:[%s1 + $0x68] sm:$0xf]
  %v195 = vld [vmem:[%s1 + $0x6c] sm:$0xf]
  %v196 = vld [vmem:[%s1 + $0x70] sm:$0xf]
  %v197 = vld [vmem:[%s1 + $0x74] sm:$0xf]
  %v198 = vld [vmem:[%s1 + $0x78] sm:$0xf]
  %v199 = vld [vmem:[%s1 + $0x7c] sm:$0xf]
  %v200 = vld [vmem:[%s1 + $0x80] sm:$0xf]
  %v201 = vld [vmem:[%s1 + $0x84] sm:$0xf]
  %v202 = vld [vmem:[%s1 + $0x88] sm:$0xf]
  %v203 = vld [vmem:[%s1 + $0x8c] sm:$0xf]
  %v204 = vld [vmem:[%s1 + $0x90] sm:$0xf]
  %v205 = vld [vmem:[%s1 + $0x94] sm:$0xf]
  %v206 = vld [vmem:[%s1 + $0x98] sm:$0xf]
  %v207 = vld [vmem:[%s1 + $0x9c] sm:$0xf]
  %v208 = vld [vmem:[%s1 + $0xa0] sm:$0xf]
  %v209 = vld [vmem:[%s1 + $0xa4] sm:$0xf]
  %v210 = vld [vmem:[%s1 + $0xa8] sm:$0xf]
  %v211 = vld [vmem:[%s1 + $0xac] sm:$0xf]
  %v212 = vld [vmem:[%s1 + $0xb0] sm:$0xf]
  %v213 = vld [vmem:[%s1 + $0xb4] sm:$0xf]
  %v214 = vld [vmem:[%s1 + $0xb8] sm:$0xf]
  %v215 = vld [vmem:[%s1 + $0xbc] sm:$0xf]
  %v216 = vld [vmem:[%s1 + $0xc0] sm:$0xf]
  %v217 = vld [vmem:[%s1 + $0xc4] sm:$0xf]
  %v218 = vld [vmem:[%s1 + $0xc8] sm:$0xf]
  %v219 = vld [vmem:[%s1 + $0xcc] sm:$0xf]
  %v220 = vld [vmem:[%s1 + $0xd0] sm:$0xf]
  %v221 = vld [vmem:[%s1 + $0xd4] sm:$0xf]
  %v222 = vld [vmem:[%s1 + $0xd8] sm:$0xf]
  %v223 = vld [vmem:[%s1 + $0xdc] sm:$0xf]
  %v224 = vld [vmem:[%s1 + $0xe0] sm:$0xf]
  %v225 = vld [vmem:[%s1 + $0xe4] sm:$0xf]
  %v226 = vld [vmem:[%s1 + $0xe8] sm:$0xf]
  %v227 = vld [vmem:[%s1 + $0xec] sm:$0xf]
  %v228 = vld [vmem:[%s1 + $0xf0] sm:$0xf]
  %v229 = vld [vmem:[%s1 + $0xf4] sm:$0xf]
  %v230 = vld [vmem:[%s1 + $0xf8] sm:$0xf]
  %v231 = vld [vmem:[%s1 + $0xfc] sm:$0xf]
  %v232 = vld [vmem:[%s1 + $0x100] sm:$0xf]
  %v233 = vld [vmem:[%s1 + $0x104] sm:$0xf]
  %v234 = vld [vmem:[%s1 + $0x108] sm:$0xf]
  %v235 = vld [vmem:[%s1 + $0x10c] sm:$0xf]
  %v236 = vld [vmem:[%s1 + $0x110] sm:$0xf]
  %v237 = vld [vmem:[%s1 + $0x114] sm:$0xf]
  %v238 = vld [vmem:[%s1 + $0x118] sm:$0xf]
  %v239 = vld [vmem:[%s1 + $0x11c] sm:$0xf]
  %v240 = vld [vmem:[%s1 + $0x120] sm:$0xf]
  %v241 = vld [vmem:[%s1 + $0x124] sm:$0xf]
  %v242 = vld [vmem:[%s1 + $0x128] sm:$0xf]
  %v243 = vld [vmem:[%s1 + $0x12c] sm:$0xf]
  %v244 = vld [vmem:[%s1 + $0x130] sm:$0xf]
  %v245 = vld [vmem:[%s1 + $0x134] sm:$0xf]
  %v246 = vld [vmem:[%s1 + $0x138] sm:$0xf]
  %v247 = vld [vmem:[%s1 + $0x13c] sm:$0xf]
  %v248 = vld [vmem:[%s1 + $0x140] sm:$0xf]
  %v249 = vld [vmem:[%s1 + $0x144] sm:$0xf]
  %v250 = vld [vmem:[%s1 + $0x148] sm:$0xf]
  %v251 = vld [vmem:[%s1 + $0x14c] sm:$0xf]
  %v252 = vld [vmem:[%s1 + $0x150] sm:$0xf]
  %v253 = vld [vmem:[%s1 + $0x154] sm:$0xf]
  %v254 = vld [vmem:[%s1 + $0x158] sm:$0xf]
  %v255 = vld [vmem:[%s1 + $0x15c] sm:$0xf]
  %v256 = vld [vmem:[%s1 + $0x160] sm:$0xf]
  %v257 = vld [vmem:[%s1 + $0x164] sm:$0xf]
  %v258 = vld [vmem:[%s1 + $0x168] sm:$0xf]
  %v259 = vld [vmem:[%s1 + $0x16c] sm:$0xf]
  %v260 = vld [vmem:[%s1 + $0x170] sm:$0xf]
  %v261 = vld [vmem:[%s1 + $0x174] sm:$0xf]
  %v262 = vld [vmem:[%s1 + $0x178] sm:$0xf]
  %v263 = vld [vmem:[%s1 + $0x17c] sm:$0xf]
  %v360 = vunpack.c.l.b16 %v168
  %v361 = vunpack.c.l.b16 %v169
  %v362 = vunpack.c.l.b16 %v170
  %v363 = vunpack.c.l.b16 %v171
  %v364 = vunpack.c.l.b16 %v172
  %v365 = vunpack.c.l.b16 %v173
  %v366 = vunpack.c.l.b16 %v174
  %v367 = vunpack.c.l.b16 %v175
  %v368 = vunpack.c.l.b16 %v176
  %v369 = vunpack.c.l.b16 %v177
  %v370 = vunpack.c.l.b16 %v178
  %v371 = vunpack.c.l.b16 %v179
  %v372 = vunpack.c.l.b16 %v180
  %v373 = vunpack.c.l.b16 %v181
  %v374 = vunpack.c.l.b16 %v182
  %v375 = vunpack.c.l.b16 %v183
  %v376 = vunpack.c.l.b16 %v184
  %v377 = vunpack.c.l.b16 %v185
  %v378 = vunpack.c.l.b16 %v186
  %v379 = vunpack.c.l.b16 %v187
  %v380 = vunpack.c.l.b16 %v188
  %v381 = vunpack.c.l.b16 %v189
  %v382 = vunpack.c.l.b16 %v190
  %v383 = vunpack.c.l.b16 %v191
  %v384 = vunpack.c.l.b16 %v192
  %v385 = vunpack.c.l.b16 %v193
  %v386 = vunpack.c.l.b16 %v194
  %v387 = vunpack.c.l.b16 %v195
  %v388 = vunpack.c.l.b16 %v196
  %v389 = vunpack.c.l.b16 %v197
  %v390 = vunpack.c.l.b16 %v198
  %v391 = vunpack.c.l.b16 %v199
  %v392 = vunpack.c.l.b16 %v200
  %v393 = vunpack.c.l.b16 %v201
  %v394 = vunpack.c.l.b16 %v202
  %v395 = vunpack.c.l.b16 %v203
  %v396 = vunpack.c.l.b16 %v204
  %v397 = vunpack.c.l.b16 %v205
  %v398 = vunpack.c.l.b16 %v206
  %v399 = vunpack.c.l.b16 %v207
  %v400 = vunpack.c.l.b16 %v208
  %v401 = vunpack.c.l.b16 %v209
  %v402 = vunpack.c.l.b16 %v210
  %v403 = vunpack.c.l.b16 %v211
  %v404 = vunpack.c.l.b16 %v212
  %v405 = vunpack.c.l.b16 %v213
  %v406 = vunpack.c.l.b16 %v214
  %v407 = vunpack.c.l.b16 %v215
  %v408 = vunpack.c.l.b16 %v216
  %v409 = vunpack.c.l.b16 %v217
  %v410 = vunpack.c.l.b16 %v218
  %v411 = vunpack.c.l.b16 %v219
  %v412 = vunpack.c.l.b16 %v220
  %v413 = vunpack.c.l.b16 %v221
  %v414 = vunpack.c.l.b16 %v222
  %v415 = vunpack.c.l.b16 %v223
  %v416 = vunpack.c.l.b16 %v224
  %v417 = vunpack.c.l.b16 %v225
  %v418 = vunpack.c.l.b16 %v226
  %v419 = vunpack.c.l.b16 %v227
  %v420 = vunpack.c.l.b16 %v228
  %v421 = vunpack.c.l.b16 %v229
  %v422 = vunpack.c.l.b16 %v230
  %v423 = vunpack.c.l.b16 %v231
  %v424 = vunpack.c.l.b16 %v232
  %v425 = vunpack.c.l.b16 %v233
  %v426 = vunpack.c.l.b16 %v234
  %v427 = vunpack.c.l.b16 %v235
  %v428 = vunpack.c.l.b16 %v236
  %v429 = vunpack.c.l.b16 %v237
  %v430 = vunpack.c.l.b16 %v238
  %v431 = vunpack.c.l.b16 %v239
  %v432 = vunpack.c.l.b16 %v240
  %v433 = vunpack.c.l.b16 %v241
  %v434 = vunpack.c.l.b16 %v242
  %v435 = vunpack.c.l.b16 %v243
  %v436 = vunpack.c.l.b16 %v244
  %v437 = vunpack.c.l.b16 %v245
  %v438 = vunpack.c.l.b16 %v246
  %v439 = vunpack.c.l.b16 %v247
  %v440 = vunpack.c.l.b16 %v248
  %v441 = vunpack.c.l.b16 %v249
  %v442 = vunpack.c.l.b16 %v250
  %v443 = vunpack.c.l.b16 %v251
  %v444 = vunpack.c.l.b16 %v252
  %v445 = vunpack.c.l.b16 %v253
  %v446 = vunpack.c.l.b16 %v254
  %v447 = vunpack.c.l.b16 %v255
  %v448 = vunpack.c.l.b16 %v256
  %v449 = vunpack.c.l.b16 %v257
  %v450 = vunpack.c.l.b16 %v258
  %v451 = vunpack.c.l.b16 %v259
  %v452 = vunpack.c.l.b16 %v260
  %v453 = vunpack.c.l.b16 %v261
  %v454 = vunpack.c.l.b16 %v262
  %v455 = vunpack.c.l.b16 %v263
  %v456 = vpack.c.b16 %v361, %v360
  %v457 = vpack.c.b16 %v363, %v362
  %v458 = vpack.c.b16 %v365, %v364
  %v459 = vpack.c.b16 %v367, %v366
  %v460 = vpack.c.b16 %v369, %v368
  %v461 = vpack.c.b16 %v371, %v370
  %v462 = vpack.c.b16 %v373, %v372
  %v463 = vpack.c.b16 %v375, %v374
  %v464 = vpack.c.b16 %v377, %v376
  %v465 = vpack.c.b16 %v379, %v378
  %v466 = vpack.c.b16 %v381, %v380
  %v467 = vpack.c.b16 %v383, %v382
  %v468 = vpack.c.b16 %v385, %v384
  %v469 = vpack.c.b16 %v387, %v386
  %v470 = vpack.c.b16 %v389, %v388
  %v471 = vpack.c.b16 %v391, %v390
  %v472 = vpack.c.b16 %v393, %v392
  %v473 = vpack.c.b16 %v395, %v394
  %v474 = vpack.c.b16 %v397, %v396
  %v475 = vpack.c.b16 %v399, %v398
  %v476 = vpack.c.b16 %v401, %v400
  %v477 = vpack.c.b16 %v403, %v402
  %v478 = vpack.c.b16 %v405, %v404
  %v479 = vpack.c.b16 %v407, %v406
  %v480 = vpack.c.b16 %v409, %v408
  %v481 = vpack.c.b16 %v411, %v410
  %v482 = vpack.c.b16 %v413, %v412
  %v483 = vpack.c.b16 %v415, %v414
  %v484 = vpack.c.b16 %v417, %v416
  %v485 = vpack.c.b16 %v419, %v418
  %v486 = vpack.c.b16 %v421, %v420
  %v487 = vpack.c.b16 %v423, %v422
  %v488 = vpack.c.b16 %v425, %v424
  %v489 = vpack.c.b16 %v427, %v426
  %v490 = vpack.c.b16 %v429, %v428
  %v491 = vpack.c.b16 %v431, %v430
  %v492 = vpack.c.b16 %v433, %v432
  %v493 = vpack.c.b16 %v435, %v434
  %v494 = vpack.c.b16 %v437, %v436
  %v495 = vpack.c.b16 %v439, %v438
  %v496 = vpack.c.b16 %v441, %v440
  %v497 = vpack.c.b16 %v443, %v442
  %v498 = vpack.c.b16 %v445, %v444
  %v499 = vpack.c.b16 %v447, %v446
  %v500 = vpack.c.b16 %v449, %v448
  %v501 = vpack.c.b16 %v451, %v450
  %v502 = vpack.c.b16 %v453, %v452
  %v503 = vpack.c.b16 %v455, %v454
  %552 = vmatprep.subr.bf16.mxu0 0
  %553 = vmatpush1.bf16.msra.mxu0 %v456
  %554 = vmatprep.subr.bf16.mxu0 0
  %555 = vmatpush1.bf16.msra.mxu0 %v457
  %556 = vmatprep.subr.bf16.mxu0 0
  %557 = vmatpush1.bf16.msra.mxu0 %v458
  %558 = vmatprep.subr.bf16.mxu0 0
  %559 = vmatpush1.bf16.msra.mxu0 %v459
  %560 = vmatprep.subr.bf16.mxu0 0
  %561 = vmatpush1.bf16.msra.mxu0 %v460
  %562 = vmatprep.subr.bf16.mxu0 0
  %563 = vmatpush1.bf16.msra.mxu0 %v461
  %564 = vmatprep.subr.bf16.mxu0 0
  %565 = vmatpush1.bf16.msra.mxu0 %v462
  %566 = vmatprep.subr.bf16.mxu0 0
  %567 = vmatpush1.bf16.msra.mxu0 %v463
  %568 = vmatprep.subr.bf16.mxu0 0
  %569 = vmatpush1.bf16.msra.mxu0 %v464
  %570 = vmatprep.subr.bf16.mxu0 0
  %571 = vmatpush1.bf16.msra.mxu0 %v465
  %572 = vmatprep.subr.bf16.mxu0 0
  %573 = vmatpush1.bf16.msra.mxu0 %v466
  %574 = vmatprep.subr.bf16.mxu0 0
  %575 = vmatpush1.bf16.msra.mxu0 %v467
  %576 = vmatprep.subr.bf16.mxu0 0
  %577 = vmatpush1.bf16.msra.mxu0 %v468
  %578 = vmatprep.subr.bf16.mxu0 0
  %579 = vmatpush1.bf16.msra.mxu0 %v469
  %580 = vmatprep.subr.bf16.mxu0 0
  %581 = vmatpush1.bf16.msra.mxu0 %v470
  %582 = vmatprep.subr.bf16.mxu0 0
  %583 = vmatpush1.bf16.msra.mxu0 %v471
  %584 = vmatprep.mubr.bf16.mxu0 %v163
  %585 = vmatmul.mubr.bf16.gmra.mrb[0].mxu0 %v162
  %v586 = vpop.f32.mrb[0].mxu0
  %v587 = vadd.f32 0.0, %v586
  %v588 = vpop.f32.mrb[0].mxu0
  %v589 = vpop.f32.mrb[0].mxu0
  %v590 = vadd.f32 0.0, %v589
  %v591 = vpop.f32.mrb[0].mxu0
  %592 = vdwg.mxu0
  %593 = vmatprep.subr.bf16.mxu0 0
  %594 = vmatpush1.bf16.msra.mxu0 %v472
  %595 = vmatprep.subr.bf16.mxu0 0
  %596 = vmatpush1.bf16.msra.mxu0 %v473
  %597 = vmatprep.subr.bf16.mxu0 0
  %598 = vmatpush1.bf16.msra.mxu0 %v474
  %599 = vmatprep.subr.bf16.mxu0 0
  %600 = vmatpush1.bf16.msra.mxu0 %v475
  %601 = vmatprep.subr.bf16.mxu0 0
  %602 = vmatpush1.bf16.msra.mxu0 %v476
  %603 = vmatprep.subr.bf16.mxu0 0
  %604 = vmatpush1.bf16.msra.mxu0 %v477
  %605 = vmatprep.subr.bf16.mxu0 0
  %606 = vmatpush1.bf16.msra.mxu0 %v478
  %607 = vmatprep.subr.bf16.mxu0 0
  %608 = vmatpush1.bf16.msra.mxu0 %v479
  %609 = vmatprep.subr.bf16.mxu0 0
  %610 = vmatpush1.bf16.msra.mxu0 %v480
  %611 = vmatprep.subr.bf16.mxu0 0
  %612 = vmatpush1.bf16.msra.mxu0 %v481
  %613 = vmatprep.subr.bf16.mxu0 0
  %614 = vmatpush1.bf16.msra.mxu0 %v482
  %615 = vmatprep.subr.bf16.mxu0 0
  %616 = vmatpush1.bf16.msra.mxu0 %v483
  %617 = vmatprep.subr.bf16.mxu0 0
  %618 = vmatpush1.bf16.msra.mxu0 %v484
  %619 = vmatprep.subr.bf16.mxu0 0
  %620 = vmatpush1.bf16.msra.mxu0 %v485
  %621 = vmatprep.subr.bf16.mxu0 0
  %622 = vmatpush1.bf16.msra.mxu0 %v486
  %623 = vmatprep.subr.bf16.mxu0 0
  %624 = vmatpush1.bf16.msra.mxu0 %v487
  %625 = vmatprep.mubr.bf16.mxu0 %v165
  %626 = vmatmul.mubr.bf16.gmra.mrb[0].mxu0 %v164
  %v627 = vpop.f32.mrb[0].mxu0
  %v628 = vadd.f32 %v587, %v627
  %v629 = vpop.f32.mrb[0].mxu0
  %v630 = vpop.f32.mrb[0].mxu0
  %v631 = vadd.f32 %v590, %v630
  %v632 = vpop.f32.mrb[0].mxu0
  %633 = vdwg.mxu0
  %634 = vmatprep.subr.bf16.mxu0 0
  %635 = vmatpush1.bf16.msra.mxu0 %v488
  %636 = vmatprep.subr.bf16.mxu0 0
  %637 = vmatpush1.bf16.msra.mxu0 %v489
  %638 = vmatprep.subr.bf16.mxu0 0
  %639 = vmatpush1.bf16.msra.mxu0 %v490
  %640 = vmatprep.subr.bf16.mxu0 0
  %641 = vmatpush1.bf16.msra.mxu0 %v491
  %642 = vmatprep.subr.bf16.mxu0 0
  %643 = vmatpush1.bf16.msra.mxu0 %v492
  %644 = vmatprep.subr.bf16.mxu0 0
  %645 = vmatpush1.bf16.msra.mxu0 %v493
  %646 = vmatprep.subr.bf16.mxu0 0
  %647 = vmatpush1.bf16.msra.mxu0 %v494
  %648 = vmatprep.subr.bf16.mxu0 0
  %649 = vmatpush1.bf16.msra.mxu0 %v495
  %650 = vmatprep.subr.bf16.mxu0 0
  %651 = vmatpush1.bf16.msra.mxu0 %v496
  %652 = vmatprep.subr.bf16.mxu0 0
  %653 = vmatpush1.bf16.msra.mxu0 %v497
  %654 = vmatprep.subr.bf16.mxu0 0
  %655 = vmatpush1.bf16.msra.mxu0 %v498
  %656 = vmatprep.subr.bf16.mxu0 0
  %657 = vmatpush1.bf16.msra.mxu0 %v499
  %658 = vmatprep.subr.bf16.mxu0 0
  %659 = vmatpush1.bf16.msra.mxu0 %v500
  %660 = vmatprep.subr.bf16.mxu0 0
  %661 = vmatpush1.bf16.msra.mxu0 %v501
  %662 = vmatprep.subr.bf16.mxu0 0
  %663 = vmatpush1.bf16.msra.mxu0 %v502
  %664 = vmatprep.subr.bf16.mxu0 0
  %665 = vmatpush1.bf16.msra.mxu0 %v503
  %666 = vmatprep.mubr.bf16.mxu0 %v167
  %667 = vmatmul.mubr.bf16.gmra.mrb[0].mxu0 %v166
  %v668 = vpop.f32.mrb[0].mxu0
  %v669 = vadd.f32 %v628, %v668
  %v670 = vpop.f32.mrb[0].mxu0
  %v671 = vpop.f32.mrb[0].mxu0
  %v672 = vadd.f32 %v631, %v671
  %v673 = vpop.f32.mrb[0].mxu0
  %674 = vdwg.mxu0
  %v675 = vpack.c.bf16 %v672, %v669
  %v677 = vunpack.c.l.b16 %v675
  %v678 = vunpack.c.h.b16 %v675
  %v679 = vpack.c.b16 %v677, %v677
  %v680 = vpack.c.b16 %v678, %v678
  %683 = vst [vmem:[%s4] sm:$0xf] %v679
  %684 = vst [vmem:[%s4 + $0x4] sm:$0xf] %v680
  %v685 = vadd.f32 %v669, %v672
  %v686 = vrot.slane %v685, 4
  %v687 = vadd.f32 %v685, %v686
  %v688 = vrot.slane %v687, 2
  %v689 = vadd.f32 %v687, %v688
  %v690 = vrot.slane %v689, 1
  %v691 = vadd.f32 %v689, %v690
  %v692 = vmul.f32 %v669, %v669
  %v693 = vmul.f32 %v672, %v672
  %v694 = vadd.f32 %v692, %v693
  %v695 = vrot.slane %v694, 4
  %v696 = vadd.f32 %v694, %v695
  %v697 = vrot.slane %v696, 2
  %v698 = vadd.f32 %v696, %v697
  %v699 = vrot.slane %v698, 1
  %v700 = vadd.f32 %v698, %v699
  %vm701 = vcmask 1040384
  %v702 = vsel %vm701, %v691, %v700
  %vm703 = vcmask 1041408
  %v704 = vsel %vm703, %v702, 0.0
  %705 = vst [vmem:[%s5] sm:$0xff] %v704
  // Predicated region
  $region18: #{discriminator_forward.6} parent=0 // pred_check
    _
  $region19: #{discriminator_forward.6} parent=0 // pred_check_branch
    %707 = sbr.rel (0) target = $region21
  $region20: #{discriminator_forward.6} parent=0 // pred_region
    _
  $region21: #{discriminator_forward.6} parent=0 // pred_fallthru
    _
  // Predicated region
  $region22: #{discriminator_forward.6} parent=0 // pred_check
    _
  $region23: #{discriminator_forward.6} parent=0 // pred_check_branch
    %709 = sbr.rel (0) target = $region25
  $region24: #{discriminator_forward.6} parent=0 // pred_region
    _
  $region25: #{discriminator_forward.6} parent=0 // pred_fallthru
    _
  // Predicated region
  $region26: #{discriminator_forward.6} parent=0 // pred_check
    _
  $region27: #{discriminator_forward.6} parent=0 // pred_check_branch
    %711 = sbr.rel (0) target = $region29
  $region28: #{discriminator_forward.6} parent=0 // pred_region
    _
  $region29: #{discriminator_forward.6} parent=0 // pred_fallthru
    _
  // Predicated region
  $region30: #{discriminator_forward.6} parent=0 // pred_check
    _
  $region31: #{discriminator_forward.6} parent=0 // pred_check_branch
    %713 = sbr.rel (0) target = $region33
  $region32: #{discriminator_forward.6} parent=0 // pred_region
    _
  $region33: #{discriminator_forward.6} parent=0 // pred_fallthru
    _

// kernel: discriminator_forward.7
$region0: #{discriminator_forward.7}
  #allocation0 [shape = 'u32[]', space=smem, size = 0x4, offset = 0x4, fixed_abs, tag = 'smem constant byte address 0x4 - core index']
  #allocation1 [shape = 'u32[144,128]{1,0:T(1,128)}', space=vmem, size = 0x12000, scoped, tag = 'internal scratch']
  %s0 = inlined_call_operand.vmem [shape: bf16[8,1024], index: 0, kind: input, shape index: {}]
  %s1 = inlined_call_operand.vmem [shape: bf16[1024,128], index: 1, kind: input, shape index: {}]
  %s2 = inlined_call_operand.vmem [shape: f32[1,1024], index: 2, kind: input, shape index: {}]
  %s3 = inlined_call_operand.vmem [shape: f32[1,1024], index: 3, kind: input, shape index: {}]
  %s4 = inlined_call_operand.vmem [shape: f32[8,128], index: 4, kind: output, shape index: {}]
  %s5 = sld [smem:[#allocation0]]
  $region26: #{discriminator_forward.7} parent=0
    _
  %s7 = ssub.s32 1, %s5
  %s8 = scalar_select 0, %s7, %s5
  // Predicated region
  $region2: #{discriminator_forward.7} parent=0 // pred_check
    _
  $region3: #{discriminator_forward.7} parent=0 // pred_check_branch
    %10 = sbr.rel (0) target = $region5
  $region4: #{discriminator_forward.7} parent=0 // pred_region
    _
  $region5: #{discriminator_forward.7} parent=0 // pred_fallthru
    _
  // Predicated region
  $region6: #{discriminator_forward.7} parent=0 // pred_check
    _
  $region7: #{discriminator_forward.7} parent=0 // pred_check_branch
    %12 = sbr.rel (0) target = $region9
  $region8: #{discriminator_forward.7} parent=0 // pred_region
    _
  $region9: #{discriminator_forward.7} parent=0 // pred_fallthru
    _
  // Predicated region
  $region10: #{discriminator_forward.7} parent=0 // pred_check
    _
  $region11: #{discriminator_forward.7} parent=0 // pred_check_branch
    %14 = sbr.rel (0) target = $region13
  $region12: #{discriminator_forward.7} parent=0 // pred_region
    _
  $region13: #{discriminator_forward.7} parent=0 // pred_fallthru
    _
  // Predicated region
  $region14: #{discriminator_forward.7} parent=0 // pred_check
    _
  $region15: #{discriminator_forward.7} parent=0 // pred_check_branch
    %16 = sbr.rel (0) target = $region17
  $region16: #{discriminator_forward.7} parent=0 // pred_region
    _
  $region17: #{discriminator_forward.7} parent=0 // pred_fallthru
    _
  %v18 = vld [vmem:[%s0] sm:$0xff]
  %v19 = vld [vmem:[%s0 + $0x8] sm:$0xff]
  %v20 = vld [vmem:[%s0 + $0x10] sm:$0xff]
  %v21 = vld [vmem:[%s0 + $0x18] sm:$0xff]
  %v22 = vunpack.c.l.bf16 %v18
  %v23 = vunpack.c.h.bf16 %v18
  %v24 = vunpack.c.l.bf16 %v19
  %v25 = vunpack.c.h.bf16 %v19
  %v26 = vunpack.c.l.bf16 %v20
  %v27 = vunpack.c.h.bf16 %v20
  %v28 = vunpack.c.l.bf16 %v21
  %v29 = vunpack.c.h.bf16 %v21
  %v30 = vld [vmem:[%s2] sm:$0xff]
  %v32 = vlaneseq
  %v33 = vshrl.u32 %v32, 7
  %v34 = vsub.s32 0, %v33
  %v35 = vrot.slane %v30, %v34
  %v36 = vlaneseq
  %v37 = vshrl.u32 %v36, 7
  %v38 = vsub.s32 1, %v37
  %v39 = vrot.slane %v30, %v38
  %v40 = vlaneseq
  %v41 = vshrl.u32 %v40, 7
  %v42 = vsub.s32 2, %v41
  %v43 = vrot.slane %v30, %v42
  %v44 = vlaneseq
  %v45 = vshrl.u32 %v44, 7
  %v46 = vsub.s32 3, %v45
  %v47 = vrot.slane %v30, %v46
  %v48 = vlaneseq
  %v49 = vshrl.u32 %v48, 7
  %v50 = vsub.s32 4, %v49
  %v51 = vrot.slane %v30, %v50
  %v52 = vlaneseq
  %v53 = vshrl.u32 %v52, 7
  %v54 = vsub.s32 5, %v53
  %v55 = vrot.slane %v30, %v54
  %v56 = vlaneseq
  %v57 = vshrl.u32 %v56, 7
  %v58 = vsub.s32 6, %v57
  %v59 = vrot.slane %v30, %v58
  %v60 = vlaneseq
  %v61 = vshrl.u32 %v60, 7
  %v62 = vsub.s32 7, %v61
  %v63 = vrot.slane %v30, %v62
  %v72 = vmul.f32 %v22, %v35
  %v73 = vmul.f32 %v23, %v39
  %v74 = vmul.f32 %v24, %v43
  %v75 = vmul.f32 %v25, %v47
  %v76 = vmul.f32 %v26, %v51
  %v77 = vmul.f32 %v27, %v55
  %v78 = vmul.f32 %v28, %v59
  %v79 = vmul.f32 %v29, %v63
  %v80 = vld [vmem:[%s3] sm:$0xff]
  %v82 = vlaneseq
  %v83 = vshrl.u32 %v82, 7
  %v84 = vsub.s32 0, %v83
  %v85 = vrot.slane %v80, %v84
  %v86 = vlaneseq
  %v87 = vshrl.u32 %v86, 7
  %v88 = vsub.s32 1, %v87
  %v89 = vrot.slane %v80, %v88
  %v90 = vlaneseq
  %v91 = vshrl.u32 %v90, 7
  %v92 = vsub.s32 2, %v91
  %v93 = vrot.slane %v80, %v92
  %v94 = vlaneseq
  %v95 = vshrl.u32 %v94, 7
  %v96 = vsub.s32 3, %v95
  %v97 = vrot.slane %v80, %v96
  %v98 = vlaneseq
  %v99 = vshrl.u32 %v98, 7
  %v100 = vsub.s32 4, %v99
  %v101 = vrot.slane %v80, %v100
  %v102 = vlaneseq
  %v103 = vshrl.u32 %v102, 7
  %v104 = vsub.s32 5, %v103
  %v105 = vrot.slane %v80, %v104
  %v106 = vlaneseq
  %v107 = vshrl.u32 %v106, 7
  %v108 = vsub.s32 6, %v107
  %v109 = vrot.slane %v80, %v108
  %v110 = vlaneseq
  %v111 = vshrl.u32 %v110, 7
  %v112 = vsub.s32 7, %v111
  %v113 = vrot.slane %v80, %v112
  %v122 = vadd.f32 %v72, %v85
  %v123 = vadd.f32 %v73, %v89
  %v124 = vadd.f32 %v74, %v93
  %v125 = vadd.f32 %v75, %v97
  %v126 = vadd.f32 %v76, %v101
  %v127 = vadd.f32 %v77, %v105
  %v128 = vadd.f32 %v78, %v109
  %v129 = vadd.f32 %v79, %v113
  %vm130 = vcmp.ge.f32.partialorder %v122, 0.0
  %vm131 = vcmp.ge.f32.partialorder %v123, 0.0
  %vm132 = vcmp.ge.f32.partialorder %v124, 0.0
  %vm133 = vcmp.ge.f32.partialorder %v125, 0.0
  %vm134 = vcmp.ge.f32.partialorder %v126, 0.0
  %vm135 = vcmp.ge.f32.partialorder %v127, 0.0
  %vm136 = vcmp.ge.f32.partialorder %v128, 0.0
  %vm137 = vcmp.ge.f32.partialorder %v129, 0.0
  %v138 = vmul.f32 %v122, 0.2
  %v139 = vmul.f32 %v123, 0.2
  %v140 = vmul.f32 %v124, 0.2
  %v141 = vmul.f32 %v125, 0.2
  %v142 = vmul.f32 %v126, 0.2
  %v143 = vmul.f32 %v127, 0.2
  %v144 = vmul.f32 %v128, 0.2
  %v145 = vmul.f32 %v129, 0.2
  %v146 = vsel %vm130, %v122, %v138
  %v147 = vsel %vm131, %v123, %v139
  %v148 = vsel %vm132, %v124, %v140
  %v149 = vsel %vm133, %v125, %v141
  %v150 = vsel %vm134, %v126, %v142
  %v151 = vsel %vm135, %v127, %v143
  %v152 = vsel %vm136, %v128, %v144
  %v153 = vsel %vm137, %v129, %v145
  %v154 = vpack.c.bf16 %v146, %v146
  %v155 = vpack.c.bf16 %v147, %v147
  %v156 = vpack.c.bf16 %v148, %v148
  %v157 = vpack.c.bf16 %v149, %v149
  %v158 = vpack.c.bf16 %v150, %v150
  %v159 = vpack.c.bf16 %v151, %v151
  %v160 = vpack.c.bf16 %v152, %v152
  %v161 = vpack.c.bf16 %v153, %v153
  %v162 = vld [vmem:[%s1] sm:$0xf]
  %v163 = vld [vmem:[%s1 + $0x4] sm:$0xf]
  %v164 = vld [vmem:[%s1 + $0x8] sm:$0xf]
  %v165 = vld [vmem:[%s1 + $0xc] sm:$0xf]
  %v166 = vld [vmem:[%s1 + $0x10] sm:$0xf]
  %v167 = vld [vmem:[%s1 + $0x14] sm:$0xf]
  %v168 = vld [vmem:[%s1 + $0x18] sm:$0xf]
  %v169 = vld [vmem:[%s1 + $0x1c] sm:$0xf]
  %v170 = vld [vmem:[%s1 + $0x20] sm:$0xf]
  %v171 = vld [vmem:[%s1 + $0x24] sm:$0xf]
  %v172 = vld [vmem:[%s1 + $0x28] sm:$0xf]
  %v173 = vld [vmem:[%s1 + $0x2c] sm:$0xf]
  %v174 = vld [vmem:[%s1 + $0x30] sm:$0xf]
  %v175 = vld [vmem:[%s1 + $0x34] sm:$0xf]
  %v176 = vld [vmem:[%s1 + $0x38] sm:$0xf]
  %v177 = vld [vmem:[%s1 + $0x3c] sm:$0xf]
  %v178 = vld [vmem:[%s1 + $0x40] sm:$0xf]
  %v179 = vld [vmem:[%s1 + $0x44] sm:$0xf]
  %v180 = vld [vmem:[%s1 + $0x48] sm:$0xf]
  %v181 = vld [vmem:[%s1 + $0x4c] sm:$0xf]
  %v182 = vld [vmem:[%s1 + $0x50] sm:$0xf]
  %v183 = vld [vmem:[%s1 + $0x54] sm:$0xf]
  %v184 = vld [vmem:[%s1 + $0x58] sm:$0xf]
  %v185 = vld [vmem:[%s1 + $0x5c] sm:$0xf]
  %v186 = vld [vmem:[%s1 + $0x60] sm:$0xf]
  %v187 = vld [vmem:[%s1 + $0x64] sm:$0xf]
  %v188 = vld [vmem:[%s1 + $0x68] sm:$0xf]
  %v189 = vld [vmem:[%s1 + $0x6c] sm:$0xf]
  %v190 = vld [vmem:[%s1 + $0x70] sm:$0xf]
  %v191 = vld [vmem:[%s1 + $0x74] sm:$0xf]
  %v192 = vld [vmem:[%s1 + $0x78] sm:$0xf]
  %v193 = vld [vmem:[%s1 + $0x7c] sm:$0xf]
  %v194 = vld [vmem:[%s1 + $0x80] sm:$0xf]
  %v195 = vld [vmem:[%s1 + $0x84] sm:$0xf]
  %v196 = vld [vmem:[%s1 + $0x88] sm:$0xf]
  %v197 = vld [vmem:[%s1 + $0x8c] sm:$0xf]
  %v198 = vld [vmem:[%s1 + $0x90] sm:$0xf]
  %v199 = vld [vmem:[%s1 + $0x94] sm:$0xf]
  %v200 = vld [vmem:[%s1 + $0x98] sm:$0xf]
  %v201 = vld [vmem:[%s1 + $0x9c] sm:$0xf]
  %v202 = vld [vmem:[%s1 + $0xa0] sm:$0xf]
  %v203 = vld [vmem:[%s1 + $0xa4] sm:$0xf]
  %v204 = vld [vmem:[%s1 + $0xa8] sm:$0xf]
  %v205 = vld [vmem:[%s1 + $0xac] sm:$0xf]
  %v206 = vld [vmem:[%s1 + $0xb0] sm:$0xf]
  %v207 = vld [vmem:[%s1 + $0xb4] sm:$0xf]
  %v208 = vld [vmem:[%s1 + $0xb8] sm:$0xf]
  %v209 = vld [vmem:[%s1 + $0xbc] sm:$0xf]
  %v210 = vld [vmem:[%s1 + $0xc0] sm:$0xf]
  %v211 = vld [vmem:[%s1 + $0xc4] sm:$0xf]
  %v212 = vld [vmem:[%s1 + $0xc8] sm:$0xf]
  %v213 = vld [vmem:[%s1 + $0xcc] sm:$0xf]
  %v214 = vld [vmem:[%s1 + $0xd0] sm:$0xf]
  %v215 = vld [vmem:[%s1 + $0xd4] sm:$0xf]
  %v216 = vld [vmem:[%s1 + $0xd8] sm:$0xf]
  %v217 = vld [vmem:[%s1 + $0xdc] sm:$0xf]
  %v218 = vld [vmem:[%s1 + $0xe0] sm:$0xf]
  %v219 = vld [vmem:[%s1 + $0xe4] sm:$0xf]
  %v220 = vld [vmem:[%s1 + $0xe8] sm:$0xf]
  %v221 = vld [vmem:[%s1 + $0xec] sm:$0xf]
  %v222 = vld [vmem:[%s1 + $0xf0] sm:$0xf]
  %v223 = vld [vmem:[%s1 + $0xf4] sm:$0xf]
  %v224 = vld [vmem:[%s1 + $0xf8] sm:$0xf]
  %v225 = vld [vmem:[%s1 + $0xfc] sm:$0xf]
  %v226 = vld [vmem:[%s1 + $0x100] sm:$0xf]
  %v227 = vld [vmem:[%s1 + $0x104] sm:$0xf]
  %v228 = vld [vmem:[%s1 + $0x108] sm:$0xf]
  %v229 = vld [vmem:[%s1 + $0x10c] sm:$0xf]
  %v230 = vld [vmem:[%s1 + $0x110] sm:$0xf]
  %v231 = vld [vmem:[%s1 + $0x114] sm:$0xf]
  %v232 = vld [vmem:[%s1 + $0x118] sm:$0xf]
  %v233 = vld [vmem:[%s1 + $0x11c] sm:$0xf]
  %v234 = vld [vmem:[%s1 + $0x120] sm:$0xf]
  %v235 = vld [vmem:[%s1 + $0x124] sm:$0xf]
  %v236 = vld [vmem:[%s1 + $0x128] sm:$0xf]
  %v237 = vld [vmem:[%s1 + $0x12c] sm:$0xf]
  %v238 = vld [vmem:[%s1 + $0x130] sm:$0xf]
  %v239 = vld [vmem:[%s1 + $0x134] sm:$0xf]
  %v240 = vld [vmem:[%s1 + $0x138] sm:$0xf]
  %v241 = vld [vmem:[%s1 + $0x13c] sm:$0xf]
  %v242 = vld [vmem:[%s1 + $0x140] sm:$0xf]
  %v243 = vld [vmem:[%s1 + $0x144] sm:$0xf]
  %v244 = vld [vmem:[%s1 + $0x148] sm:$0xf]
  %v245 = vld [vmem:[%s1 + $0x14c] sm:$0xf]
  %v246 = vld [vmem:[%s1 + $0x150] sm:$0xf]
  %v247 = vld [vmem:[%s1 + $0x154] sm:$0xf]
  %v248 = vld [vmem:[%s1 + $0x158] sm:$0xf]
  %v249 = vld [vmem:[%s1 + $0x15c] sm:$0xf]
  %v250 = vld [vmem:[%s1 + $0x160] sm:$0xf]
  %v251 = vld [vmem:[%s1 + $0x164] sm:$0xf]
  %v252 = vld [vmem:[%s1 + $0x168] sm:$0xf]
  %v253 = vld [vmem:[%s1 + $0x16c] sm:$0xf]
  %v254 = vld [vmem:[%s1 + $0x170] sm:$0xf]
  %v255 = vld [vmem:[%s1 + $0x174] sm:$0xf]
  %v256 = vld [vmem:[%s1 + $0x178] sm:$0xf]
  %v257 = vld [vmem:[%s1 + $0x17c] sm:$0xf]
  %v258 = vld [vmem:[%s1 + $0x180] sm:$0xf]
  %v259 = vld [vmem:[%s1 + $0x184] sm:$0xf]
  %v260 = vld [vmem:[%s1 + $0x188] sm:$0xf]
  %v261 = vld [vmem:[%s1 + $0x18c] sm:$0xf]
  %v262 = vld [vmem:[%s1 + $0x190] sm:$0xf]
  %v263 = vld [vmem:[%s1 + $0x194] sm:$0xf]
  %v264 = vld [vmem:[%s1 + $0x198] sm:$0xf]
  %v265 = vld [vmem:[%s1 + $0x19c] sm:$0xf]
  %v266 = vld [vmem:[%s1 + $0x1a0] sm:$0xf]
  %v267 = vld [vmem:[%s1 + $0x1a4] sm:$0xf]
  %v268 = vld [vmem:[%s1 + $0x1a8] sm:$0xf]
  %v269 = vld [vmem:[%s1 + $0x1ac] sm:$0xf]
  %v270 = vld [vmem:[%s1 + $0x1b0] sm:$0xf]
  %v271 = vld [vmem:[%s1 + $0x1b4] sm:$0xf]
  %v272 = vld [vmem:[%s1 + $0x1b8] sm:$0xf]
  %v273 = vld [vmem:[%s1 + $0x1bc] sm:$0xf]
  %v274 = vld [vmem:[%s1 + $0x1c0] sm:$0xf]
  %v275 = vld [vmem:[%s1 + $0x1c4] sm:$0xf]
  %v276 = vld [vmem:[%s1 + $0x1c8] sm:$0xf]
  %v277 = vld [vmem:[%s1 + $0x1cc] sm:$0xf]
  %v278 = vld [vmem:[%s1 + $0x1d0] sm:$0xf]
  %v279 = vld [vmem:[%s1 + $0x1d4] sm:$0xf]
  %v280 = vld [vmem:[%s1 + $0x1d8] sm:$0xf]
  %v281 = vld [vmem:[%s1 + $0x1dc] sm:$0xf]
  %v282 = vld [vmem:[%s1 + $0x1e0] sm:$0xf]
  %v283 = vld [vmem:[%s1 + $0x1e4] sm:$0xf]
  %v284 = vld [vmem:[%s1 + $0x1e8] sm:$0xf]
  %v285 = vld [vmem:[%s1 + $0x1ec] sm:$0xf]
  %v286 = vld [vmem:[%s1 + $0x1f0] sm:$0xf]
  %v287 = vld [vmem:[%s1 + $0x1f4] sm:$0xf]
  %v288 = vld [vmem:[%s1 + $0x1f8] sm:$0xf]
  %v289 = vld [vmem:[%s1 + $0x1fc] sm:$0xf]
  %v418 = vunpack.c.l.b16 %v162
  %v419 = vunpack.c.l.b16 %v163
  %v420 = vunpack.c.l.b16 %v164
  %v421 = vunpack.c.l.b16 %v165
  %v422 = vunpack.c.l.b16 %v166
  %v423 = vunpack.c.l.b16 %v167
  %v424 = vunpack.c.l.b16 %v168
  %v425 = vunpack.c.l.b16 %v169
  %v426 = vunpack.c.l.b16 %v170
  %v427 = vunpack.c.l.b16 %v171
  %v428 = vunpack.c.l.b16 %v172
  %v429 = vunpack.c.l.b16 %v173
  %v430 = vunpack.c.l.b16 %v174
  %v431 = vunpack.c.l.b16 %v175
  %v432 = vunpack.c.l.b16 %v176
  %v433 = vunpack.c.l.b16 %v177
  %v434 = vunpack.c.l.b16 %v178
  %v435 = vunpack.c.l.b16 %v179
  %v436 = vunpack.c.l.b16 %v180
  %v437 = vunpack.c.l.b16 %v181
  %v438 = vunpack.c.l.b16 %v182
  %v439 = vunpack.c.l.b16 %v183
  %v440 = vunpack.c.l.b16 %v184
  %v441 = vunpack.c.l.b16 %v185
  %v442 = vunpack.c.l.b16 %v186
  %v443 = vunpack.c.l.b16 %v187
  %v444 = vunpack.c.l.b16 %v188
  %v445 = vunpack.c.l.b16 %v189
  %v446 = vunpack.c.l.b16 %v190
  %v447 = vunpack.c.l.b16 %v191
  %v448 = vunpack.c.l.b16 %v192
  %v449 = vunpack.c.l.b16 %v193
  %v450 = vunpack.c.l.b16 %v194
  %v451 = vunpack.c.l.b16 %v195
  %v452 = vunpack.c.l.b16 %v196
  %v453 = vunpack.c.l.b16 %v197
  %v454 = vunpack.c.l.b16 %v198
  %v455 = vunpack.c.l.b16 %v199
  %v456 = vunpack.c.l.b16 %v200
  %v457 = vunpack.c.l.b16 %v201
  %v458 = vunpack.c.l.b16 %v202
  %v459 = vunpack.c.l.b16 %v203
  %v460 = vunpack.c.l.b16 %v204
  %v461 = vunpack.c.l.b16 %v205
  %v462 = vunpack.c.l.b16 %v206
  %v463 = vunpack.c.l.b16 %v207
  %v464 = vunpack.c.l.b16 %v208
  %v465 = vunpack.c.l.b16 %v209
  %v466 = vunpack.c.l.b16 %v210
  %v467 = vunpack.c.l.b16 %v211
  %v468 = vunpack.c.l.b16 %v212
  %v469 = vunpack.c.l.b16 %v213
  %v470 = vunpack.c.l.b16 %v214
  %v471 = vunpack.c.l.b16 %v215
  %v472 = vunpack.c.l.b16 %v216
  %v473 = vunpack.c.l.b16 %v217
  %v474 = vunpack.c.l.b16 %v218
  %v475 = vunpack.c.l.b16 %v219
  %v476 = vunpack.c.l.b16 %v220
  %v477 = vunpack.c.l.b16 %v221
  %v478 = vunpack.c.l.b16 %v222
  %v479 = vunpack.c.l.b16 %v223
  %v480 = vunpack.c.l.b16 %v224
  %v481 = vunpack.c.l.b16 %v225
  %v482 = vunpack.c.l.b16 %v226
  %v483 = vunpack.c.l.b16 %v227
  %v484 = vunpack.c.l.b16 %v228
  %v485 = vunpack.c.l.b16 %v229
  %v486 = vunpack.c.l.b16 %v230
  %v487 = vunpack.c.l.b16 %v231
  %v488 = vunpack.c.l.b16 %v232
  %v489 = vunpack.c.l.b16 %v233
  %v490 = vunpack.c.l.b16 %v234
  %v491 = vunpack.c.l.b16 %v235
  %v492 = vunpack.c.l.b16 %v236
  %v493 = vunpack.c.l.b16 %v237
  %v494 = vunpack.c.l.b16 %v238
  %v495 = vunpack.c.l.b16 %v239
  %v496 = vunpack.c.l.b16 %v240
  %v497 = vunpack.c.l.b16 %v241
  %v498 = vunpack.c.l.b16 %v242
  %v499 = vunpack.c.l.b16 %v243
  %v500 = vunpack.c.l.b16 %v244
  %v501 = vunpack.c.l.b16 %v245
  %v502 = vunpack.c.l.b16 %v246
  %v503 = vunpack.c.l.b16 %v247
  %v504 = vunpack.c.l.b16 %v248
  %v505 = vunpack.c.l.b16 %v249
  %v506 = vunpack.c.l.b16 %v250
  %v507 = vunpack.c.l.b16 %v251
  %v508 = vunpack.c.l.b16 %v252
  %v509 = vunpack.c.l.b16 %v253
  %v510 = vunpack.c.l.b16 %v254
  %v511 = vunpack.c.l.b16 %v255
  %v512 = vunpack.c.l.b16 %v256
  %v513 = vunpack.c.l.b16 %v257
  %v514 = vunpack.c.l.b16 %v258
  %v515 = vunpack.c.l.b16 %v259
  %v516 = vunpack.c.l.b16 %v260
  %v517 = vunpack.c.l.b16 %v261
  %v518 = vunpack.c.l.b16 %v262
  %v519 = vunpack.c.l.b16 %v263
  %v520 = vunpack.c.l.b16 %v264
  %v521 = vunpack.c.l.b16 %v265
  %v522 = vunpack.c.l.b16 %v266
  %v523 = vunpack.c.l.b16 %v267
  %v524 = vunpack.c.l.b16 %v268
  %v525 = vunpack.c.l.b16 %v269
  %v526 = vunpack.c.l.b16 %v270
  %v527 = vunpack.c.l.b16 %v271
  %v528 = vunpack.c.l.b16 %v272
  %v529 = vunpack.c.l.b16 %v273
  %v530 = vunpack.c.l.b16 %v274
  %v531 = vunpack.c.l.b16 %v275
  %v532 = vunpack.c.l.b16 %v276
  %v533 = vunpack.c.l.b16 %v277
  %v534 = vunpack.c.l.b16 %v278
  %v535 = vunpack.c.l.b16 %v279
  %v536 = vunpack.c.l.b16 %v280
  %v537 = vunpack.c.l.b16 %v281
  %v538 = vunpack.c.l.b16 %v282
  %v539 = vunpack.c.l.b16 %v283
  %v540 = vunpack.c.l.b16 %v284
  %v541 = vunpack.c.l.b16 %v285
  %v542 = vunpack.c.l.b16 %v286
  %v543 = vunpack.c.l.b16 %v287
  %v544 = vunpack.c.l.b16 %v288
  %v545 = vunpack.c.l.b16 %v289
  %v546 = vpack.c.b16 %v419, %v418
  %v547 = vpack.c.b16 %v421, %v420
  %v548 = vpack.c.b16 %v423, %v422
  %v549 = vpack.c.b16 %v425, %v424
  %v550 = vpack.c.b16 %v427, %v426
  %v551 = vpack.c.b16 %v429, %v428
  %v552 = vpack.c.b16 %v431, %v430
  %v553 = vpack.c.b16 %v433, %v432
  %v554 = vpack.c.b16 %v435, %v434
  %v555 = vpack.c.b16 %v437, %v436
  %v556 = vpack.c.b16 %v439, %v438
  %v557 = vpack.c.b16 %v441, %v440
  %v558 = vpack.c.b16 %v443, %v442
  %v559 = vpack.c.b16 %v445, %v444
  %v560 = vpack.c.b16 %v447, %v446
  %v561 = vpack.c.b16 %v449, %v448
  %v562 = vpack.c.b16 %v451, %v450
  %v563 = vpack.c.b16 %v453, %v452
  %v564 = vpack.c.b16 %v455, %v454
  %v565 = vpack.c.b16 %v457, %v456
  %v566 = vpack.c.b16 %v459, %v458
  %v567 = vpack.c.b16 %v461, %v460
  %v568 = vpack.c.b16 %v463, %v462
  %v569 = vpack.c.b16 %v465, %v464
  %v570 = vpack.c.b16 %v467, %v466
  %v571 = vpack.c.b16 %v469, %v468
  %v572 = vpack.c.b16 %v471, %v470
  %v573 = vpack.c.b16 %v473, %v472
  %v574 = vpack.c.b16 %v475, %v474
  %v575 = vpack.c.b16 %v477, %v476
  %v576 = vpack.c.b16 %v479, %v478
  %v577 = vpack.c.b16 %v481, %v480
  %v578 = vpack.c.b16 %v483, %v482
  %v579 = vpack.c.b16 %v485, %v484
  %v580 = vpack.c.b16 %v487, %v486
  %v581 = vpack.c.b16 %v489, %v488
  %v582 = vpack.c.b16 %v491, %v490
  %v583 = vpack.c.b16 %v493, %v492
  %v584 = vpack.c.b16 %v495, %v494
  %v585 = vpack.c.b16 %v497, %v496
  %v586 = vpack.c.b16 %v499, %v498
  %v587 = vpack.c.b16 %v501, %v500
  %v588 = vpack.c.b16 %v503, %v502
  %v589 = vpack.c.b16 %v505, %v504
  %v590 = vpack.c.b16 %v507, %v506
  %v591 = vpack.c.b16 %v509, %v508
  %v592 = vpack.c.b16 %v511, %v510
  %v593 = vpack.c.b16 %v513, %v512
  %v594 = vpack.c.b16 %v515, %v514
  %v595 = vpack.c.b16 %v517, %v516
  %v596 = vpack.c.b16 %v519, %v518
  %v597 = vpack.c.b16 %v521, %v520
  %v598 = vpack.c.b16 %v523, %v522
  %v599 = vpack.c.b16 %v525, %v524
  %v600 = vpack.c.b16 %v527, %v526
  %v601 = vpack.c.b16 %v529, %v528
  %v602 = vpack.c.b16 %v531, %v530
  %v603 = vpack.c.b16 %v533, %v532
  %v604 = vpack.c.b16 %v535, %v534
  %v605 = vpack.c.b16 %v537, %v536
  %v606 = vpack.c.b16 %v539, %v538
  %v607 = vpack.c.b16 %v541, %v540
  %v608 = vpack.c.b16 %v543, %v542
  %v609 = vpack.c.b16 %v545, %v544
  %674 = vmatprep.subr.bf16.mxu0 0
  %675 = vmatpush1.bf16.msra.mxu0 %v546
  %676 = vmatprep.subr.bf16.mxu0 0
  %677 = vmatpush1.bf16.msra.mxu0 %v547
  %678 = vmatprep.subr.bf16.mxu0 0
  %679 = vmatpush1.bf16.msra.mxu0 %v548
  %680 = vmatprep.subr.bf16.mxu0 0
  %681 = vmatpush1.bf16.msra.mxu0 %v549
  %682 = vmatprep.subr.bf16.mxu0 0
  %683 = vmatpush1.bf16.msra.mxu0 %v550
  %684 = vmatprep.subr.bf16.mxu0 0
  %685 = vmatpush1.bf16.msra.mxu0 %v551
  %686 = vmatprep.subr.bf16.mxu0 0
  %687 = vmatpush1.bf16.msra.mxu0 %v552
  %688 = vmatprep.subr.bf16.mxu0 0
  %689 = vmatpush1.bf16.msra.mxu0 %v553
  %690 = vmatprep.subr.bf16.mxu0 0
  %691 = vmatpush1.bf16.msra.mxu0 %v554
  %692 = vmatprep.subr.bf16.mxu0 0
  %693 = vmatpush1.bf16.msra.mxu0 %v555
  %694 = vmatprep.subr.bf16.mxu0 0
  %695 = vmatpush1.bf16.msra.mxu0 %v556
  %696 = vmatprep.subr.bf16.mxu0 0
  %697 = vmatpush1.bf16.msra.mxu0 %v557
  %698 = vmatprep.subr.bf16.mxu0 0
  %699 = vmatpush1.bf16.msra.mxu0 %v558
  %700 = vmatprep.subr.bf16.mxu0 0
  %701 = vmatpush1.bf16.msra.mxu0 %v559
  %702 = vmatprep.subr.bf16.mxu0 0
  %703 = vmatpush1.bf16.msra.mxu0 %v560
  %704 = vmatprep.subr.bf16.mxu0 0
  %705 = vmatpush1.bf16.msra.mxu0 %v561
  %706 = vmatprep.mubr.bf16.mxu0 %v155
  %707 = vmatmul.mubr.bf16.gmra.mrb[0].mxu0 %v154
  %v708 = vpop.f32.mrb[0].mxu0
  %v709 = vadd.f32 0.0, %v708
  %v710 = vpop.f32.mrb[0].mxu0
  %v711 = vpop.f32.mrb[0].mxu0
  %v712 = vpop.f32.mrb[0].mxu0
  %713 = vdwg.mxu0
  %714 = vmatprep.subr.bf16.mxu0 0
  %715 = vmatpush1.bf16.msra.mxu0 %v562
  %716 = vmatprep.subr.bf16.mxu0 0
  %717 = vmatpush1.bf16.msra.mxu0 %v563
  %718 = vmatprep.subr.bf16.mxu0 0
  %719 = vmatpush1.bf16.msra.mxu0 %v564
  %720 = vmatprep.subr.bf16.mxu0 0
  %721 = vmatpush1.bf16.msra.mxu0 %v565
  %722 = vmatprep.subr.bf16.mxu0 0
  %723 = vmatpush1.bf16.msra.mxu0 %v566
  %724 = vmatprep.subr.bf16.mxu0 0
  %725 = vmatpush1.bf16.msra.mxu0 %v567
  %726 = vmatprep.subr.bf16.mxu0 0
  %727 = vmatpush1.bf16.msra.mxu0 %v568
  %728 = vmatprep.subr.bf16.mxu0 0
  %729 = vmatpush1.bf16.msra.mxu0 %v569
  %730 = vmatprep.subr.bf16.mxu0 0
  %731 = vmatpush1.bf16.msra.mxu0 %v570
  %732 = vmatprep.subr.bf16.mxu0 0
  %733 = vmatpush1.bf16.msra.mxu0 %v571
  %734 = vmatprep.subr.bf16.mxu0 0
  %735 = vmatpush1.bf16.msra.mxu0 %v572
  %736 = vmatprep.subr.bf16.mxu0 0
  %737 = vmatpush1.bf16.msra.mxu0 %v573
  %738 = vmatprep.subr.bf16.mxu0 0
  %739 = vmatpush1.bf16.msra.mxu0 %v574
  %740 = vmatprep.subr.bf16.mxu0 0
  %741 = vmatpush1.bf16.msra.mxu0 %v575
  %742 = vmatprep.subr.bf16.mxu0 0
  %743 = vmatpush1.bf16.msra.mxu0 %v576
  %744 = vmatprep.subr.bf16.mxu0 0
  %745 = vmatpush1.bf16.msra.mxu0 %v577
  %746 = vmatprep.mubr.bf16.mxu0 %v157
  %747 = vmatmul.mubr.bf16.gmra.mrb[0].mxu0 %v156
  %v748 = vpop.f32.mrb[0].mxu0
  %v749 = vadd.f32 %v709, %v748
  %v750 = vpop.f32.mrb[0].mxu0
  %v751 = vpop.f32.mrb[0].mxu0
  %v752 = vpop.f32.mrb[0].mxu0
  %753 = vdwg.mxu0
  %754 = vmatprep.subr.bf16.mxu0 0
  %755 = vmatpush1.bf16.msra.mxu0 %v578
  %756 = vmatprep.subr.bf16.mxu0 0
  %757 = vmatpush1.bf16.msra.mxu0 %v579
  %758 = vmatprep.subr.bf16.mxu0 0
  %759 = vmatpush1.bf16.msra.mxu0 %v580
  %760 = vmatprep.subr.bf16.mxu0 0
  %761 = vmatpush1.bf16.msra.mxu0 %v581
  %762 = vmatprep.subr.bf16.mxu0 0
  %763 = vmatpush1.bf16.msra.mxu0 %v582
  %764 = vmatprep.subr.bf16.mxu0 0
  %765 = vmatpush1.bf16.msra.mxu0 %v583
  %766 = vmatprep.subr.bf16.mxu0 0
  %767 = vmatpush1.bf16.msra.mxu0 %v584
  %768 = vmatprep.subr.bf16.mxu0 0
  %769 = vmatpush1.bf16.msra.mxu0 %v585
  %770 = vmatprep.subr.bf16.mxu0 0
  %771 = vmatpush1.bf16.msra.mxu0 %v586
  %772 = vmatprep.subr.bf16.mxu0 0
  %773 = vmatpush1.bf16.msra.mxu0 %v587
  %774 = vmatprep.subr.bf16.mxu0 0
  %775 = vmatpush1.bf16.msra.mxu0 %v588
  %776 = vmatprep.subr.bf16.mxu0 0
  %777 = vmatpush1.bf16.msra.mxu0 %v589
  %778 = vmatprep.subr.bf16.mxu0 0
  %779 = vmatpush1.bf16.msra.mxu0 %v590
  %780 = vmatprep.subr.bf16.mxu0 0
  %781 = vmatpush1.bf16.msra.mxu0 %v591
  %782 = vmatprep.subr.bf16.mxu0 0
  %783 = vmatpush1.bf16.msra.mxu0 %v592
  %784 = vmatprep.subr.bf16.mxu0 0
  %785 = vmatpush1.bf16.msra.mxu0 %v593
  %786 = vmatprep.mubr.bf16.mxu0 %v159
  %787 = vmatmul.mubr.bf16.gmra.mrb[0].mxu0 %v158
  %v788 = vpop.f32.mrb[0].mxu0
  %v789 = vadd.f32 %v749, %v788
  %v790 = vpop.f32.mrb[0].mxu0
  %v791 = vpop.f32.mrb[0].mxu0
  %v792 = vpop.f32.mrb[0].mxu0
  %793 = vdwg.mxu0
  %794 = vmatprep.subr.bf16.mxu0 0
  %795 = vmatpush1.bf16.msra.mxu0 %v594
  %796 = vmatprep.subr.bf16.mxu0 0
  %797 = vmatpush1.bf16.msra.mxu0 %v595
  %798 = vmatprep.subr.bf16.mxu0 0
  %799 = vmatpush1.bf16.msra.mxu0 %v596
  %800 = vmatprep.subr.bf16.mxu0 0
  %801 = vmatpush1.bf16.msra.mxu0 %v597
  %802 = vmatprep.subr.bf16.mxu0 0
  %803 = vmatpush1.bf16.msra.mxu0 %v598
  %804 = vmatprep.subr.bf16.mxu0 0
  %805 = vmatpush1.bf16.msra.mxu0 %v599
  %806 = vmatprep.subr.bf16.mxu0 0
  %807 = vmatpush1.bf16.msra.mxu0 %v600
  %808 = vmatprep.subr.bf16.mxu0 0
  %809 = vmatpush1.bf16.msra.mxu0 %v601
  %810 = vmatprep.subr.bf16.mxu0 0
  %811 = vmatpush1.bf16.msra.mxu0 %v602
  %812 = vmatprep.subr.bf16.mxu0 0
  %813 = vmatpush1.bf16.msra.mxu0 %v603
  %814 = vmatprep.subr.bf16.mxu0 0
  %815 = vmatpush1.bf16.msra.mxu0 %v604
  %816 = vmatprep.subr.bf16.mxu0 0
  %817 = vmatpush1.bf16.msra.mxu0 %v605
  %818 = vmatprep.subr.bf16.mxu0 0
  %819 = vmatpush1.bf16.msra.mxu0 %v606
  %820 = vmatprep.subr.bf16.mxu0 0
  %821 = vmatpush1.bf16.msra.mxu0 %v607
  %822 = vmatprep.subr.bf16.mxu0 0
  %823 = vmatpush1.bf16.msra.mxu0 %v608
  %824 = vmatprep.subr.bf16.mxu0 0
  %825 = vmatpush1.bf16.msra.mxu0 %v609
  %826 = vmatprep.mubr.bf16.mxu0 %v161
  %827 = vmatmul.mubr.bf16.gmra.mrb[0].mxu0 %v160
  %v828 = vpop.f32.mrb[0].mxu0
  %v829 = vadd.f32 %v789, %v828
  %v830 = vpop.f32.mrb[0].mxu0
  %v831 = vpop.f32.mrb[0].mxu0
  %v832 = vpop.f32.mrb[0].mxu0
  %833 = vdwg.mxu0
  %v834 = vxor.u32 %v829, 2147483648
  %v835 = vmul.f32 %v834, 1.442695
  %v836 = vpow.pop %v835
  %v837 = vadd.f32 %v836, 1.0
  %v838 = vrcp.pop %v837
  %v839 = vmul.f32 1.0, %v838
  %840 = vst [vmem:[%s4] sm:$0xff] %v839
  // Predicated region
  $region18: #{discriminator_forward.7} parent=0 // pred_check
    _
  $region19: #{discriminator_forward.7} parent=0 // pred_check_branch
    %842 = sbr.rel (0) target = $region21
  $region20: #{discriminator_forward.7} parent=0 // pred_region
    _
  $region21: #{discriminator_forward.7} parent=0 // pred_fallthru
    _
  // Predicated region
  $region22: #{discriminator_forward.7} parent=0 // pred_check
    _
  $region23: #{discriminator_forward.7} parent=0 // pred_check_branch
    %844 = sbr.rel (0) target = $region25
  $region24: #{discriminator_forward.7} parent=0 // pred_region
    _
  $region25: #{discriminator_forward.7} parent=0 // pred_fallthru
    _

</llo_original>
